<compile_context>
chip_gen: v7x
topology: tpu7x:2x2x1
jax: 0.10.0
libtpu: 0.0.40
codegen_flags: <defaults>
</compile_context>

<pallas_src>
import math

import jax
import jax.numpy as jnp
from jax.experimental import pallas as pl
from jax.experimental.pallas import tpu as pltpu

# ---------------- configuration (small, consistent with the module) -----------
B, S = 2, 8          # batch, sequence length
VOCAB = 32           # vocab size (logits dim)
HIDDEN = 32          # hidden size
N_HEADS = 4
HEAD_DIM = HIDDEN // N_HEADS
FFN = 64             # feed-forward inner dim
PAD_ID = 0           # tokenizer.pad_token_id
NEG_INF = -1e9
LN_EPS = 1e-12

# packed-weight layout ----------------------------------------------------------
OUT_PAD = 128                                  # lane-dense vocab projection width
OFF_WQ, OFF_WK, OFF_WV, OFF_WO = 0, HIDDEN, 2 * HIDDEN, 3 * HIDDEN
OFF_F1 = 4 * HIDDEN                            # 128
OFF_OUT = OFF_F1 + FFN                         # 192
WA_COLS = OFF_OUT + OUT_PAD                    # 320

# vector pack rows (each row padded to 128 lanes)
(R_LN0G, R_LN0B, R_BQ, R_BK, R_BV, R_BO,
 R_LN1G, R_LN1B, R_BF1, R_BF2, R_LN2G, R_LN2B, R_BOUT) = range(13)
VEC_ROWS, VEC_W = 13, 128


# ---------------- in-kernel helpers (traced into the kernel body) -------------
def _layer_norm(x, gamma, beta):
    mu = jnp.mean(x, axis=-1, keepdims=True)
    var = jnp.mean((x - mu) * (x - mu), axis=-1, keepdims=True)
    return (x - mu) * jax.lax.rsqrt(var + LN_EPS) * gamma + beta


def _gelu_tanh(x):
    # tanh-approximate GELU (EUP-friendly on TPU)
    c = math.sqrt(2.0 / math.pi)
    return 0.5 * x * (1.0 + jnp.tanh(c * (x + 0.044715 * x * x * x)))


# ---------------- the Pallas kernel -------------------------------------------
def transformer_kernel(emb_ref, bias_ref, wA_ref, wf2_ref, vec_ref, out_ref):
    """emb_ref:  [B*S, H]      flattened embeddings
       bias_ref: [B*S, B*S]    additive attention bias (pad mask + block-diag batch)
       wA_ref:   [H, 320]      wq|wk|wv|wo|w_f1|w_out_padded (lane-concatenated)
       wf2_ref:  [FFN, H]
       vec_ref:  [13, 128]     biases / LN params, one per row
       out_ref:  [B*S, 128]    lane-dense padded logits
    """
    scale = 1.0 / math.sqrt(HEAD_DIM)

    def vrow(r, width):
        return vec_ref[pl.ds(r, 1), pl.ds(0, width)]              # [1, width]

    # --- embeddings LayerNorm over all B*S rows at once ------------------------
    x = _layer_norm(emb_ref[...], vrow(R_LN0G, HIDDEN), vrow(R_LN0B, HIDDEN))

    bias = bias_ref[...]                                          # [B*S, B*S]

    # --- multi-head self-attention (heads unrolled, accumulate into attn) ------
    attn = jnp.zeros((B * S, HIDDEN), jnp.float32)
    for h in range(N_HEADS):
        d0 = h * HEAD_DIM
        wq_h = wA_ref[:, pl.ds(OFF_WQ + d0, HEAD_DIM)]            # [H, dH]
        wk_h = wA_ref[:, pl.ds(OFF_WK + d0, HEAD_DIM)]
        wv_h = wA_ref[:, pl.ds(OFF_WV + d0, HEAD_DIM)]
        bq_h = vec_ref[pl.ds(R_BQ, 1), pl.ds(d0, HEAD_DIM)]       # [1, dH]
        bk_h = vec_ref[pl.ds(R_BK, 1), pl.ds(d0, HEAD_DIM)]
        bv_h = vec_ref[pl.ds(R_BV, 1), pl.ds(d0, HEAD_DIM)]

        q_h = jnp.dot(x, wq_h, preferred_element_type=jnp.float32) + bq_h
        k_h = jnp.dot(x, wk_h, preferred_element_type=jnp.float32) + bk_h
        v_h = jnp.dot(x, wv_h, preferred_element_type=jnp.float32) + bv_h

        # contract head dim directly (no explicit transpose of k_h)
        scores = jax.lax.dot_general(
            q_h, k_h, (((1,), (1,)), ((), ())),
            preferred_element_type=jnp.float32) * scale + bias    # [B*S, B*S]
        scores = scores - jnp.max(scores, axis=-1, keepdims=True)
        p = jnp.exp(scores)
        p = p * pl.reciprocal(jnp.sum(p, axis=-1, keepdims=True), approx=True)

        ctx_h = jnp.dot(p, v_h, preferred_element_type=jnp.float32)       # [B*S, dH]
        wo_h = wA_ref[pl.ds(d0, HEAD_DIM), pl.ds(OFF_WO, HIDDEN)]         # [dH, H]
        attn = attn + jnp.dot(ctx_h, wo_h, preferred_element_type=jnp.float32)

    attn = attn + vrow(R_BO, HIDDEN)
    x1 = _layer_norm(x + attn, vrow(R_LN1G, HIDDEN), vrow(R_LN1B, HIDDEN))

    # --- feed-forward ----------------------------------------------------------
    h1 = jnp.dot(x1, wA_ref[:, pl.ds(OFF_F1, FFN)],
                 preferred_element_type=jnp.float32) + vrow(R_BF1, FFN)
    h1 = _gelu_tanh(h1)
    ffn = jnp.dot(h1, wf2_ref[...], preferred_element_type=jnp.float32) + vrow(R_BF2, HIDDEN)
    x2 = _layer_norm(x1 + ffn, vrow(R_LN2G, HIDDEN), vrow(R_LN2B, HIDDEN))

    # --- vocab projection, padded to 128 lanes -> unmasked full-vreg stores ----
    logits = jnp.dot(x2, wA_ref[:, pl.ds(OFF_OUT, OUT_PAD)],
                     preferred_element_type=jnp.float32) + vrow(R_BOUT, OUT_PAD)
    out_ref[...] = logits


# ---------------- weight packing (few DMAs instead of 22) -----------------------
def pack_params(p):
    w_out_padded = jnp.zeros((HIDDEN, OUT_PAD), jnp.float32).at[:, :VOCAB].set(p["w_out"])
    wA = jnp.concatenate(
        [p["wq"], p["wk"], p["wv"], p["wo"], p["w_f1"], w_out_padded],
        axis=1).astype(jnp.float32)                               # [H, 320]
    wf2 = p["w_f2"].astype(jnp.float32)                           # [FFN, H]

    def row(v):
        r = jnp.zeros((1, VEC_W), jnp.float32)
        return r.at[:, : v.shape[-1]].set(v.reshape(1, -1).astype(jnp.float32))

    vec_rows = [p["ln0_g"], p["ln0_b"], p["bq"], p["bk"], p["bv"], p["bo"],
                p["ln1_g"], p["ln1_b"], p["b_f1"], p["b_f2"],
                p["ln2_g"], p["ln2_b"], p["b_out"]]
    vecs = jnp.concatenate([row(v) for v in vec_rows], axis=0)    # [13, 128]
    return wA, wf2, vecs


# ---------------- wrapper -------------------------------------------------------
def custom_transformer_forward(input_ids, params):
    """input_ids: [B, S] int32  ->  logits: [B, S, VOCAB] float32."""
    # Glue: embedding gather + position embeddings, flattened to [B*S, H].
    positions = jnp.arange(S, dtype=jnp.int32)
    emb = params["word_emb"][input_ids] + params["pos_emb"][positions][None, :, :]
    emb_flat = emb.reshape(B * S, HIDDEN).astype(jnp.float32)

    # Module semantics: attention_mask = (input_ids != pad_token_id).
    # Folded with the block-diagonal batch structure into one additive bias.
    idx = jnp.arange(B * S, dtype=jnp.int32)
    same_batch = (idx[:, None] // S) == (idx[None, :] // S)       # [B*S, B*S]
    key_valid = (input_ids != PAD_ID).reshape(1, B * S)           # key-side mask
    attn_bias = jnp.where(same_batch & key_valid, 0.0, NEG_INF).astype(jnp.float32)

    wA, wf2, vecs = pack_params(params)

    out = pl.pallas_call(
        transformer_kernel,
        out_shape=jax.ShapeDtypeStruct((B * S, OUT_PAD), jnp.float32),
        in_specs=[pl.BlockSpec(memory_space=pltpu.MemorySpace.VMEM)] * 5,
        out_specs=pl.BlockSpec(memory_space=pltpu.MemorySpace.VMEM),
    )(emb_flat, attn_bias, wA, wf2, vecs)

    return out[:, :VOCAB].reshape(B, S, VOCAB)


# ---------------- deterministic parameter init ----------------------------------
def init_params(key):
    ks = jax.random.split(key, 12)
    scale = 0.02

    def dense(k, shape):
        return (scale * jax.random.normal(k, shape)).astype(jnp.float32)

    def bias2d(dim):
        return jnp.zeros((1, dim), jnp.float32)

    return {
        "word_emb": dense(ks[0], (VOCAB, HIDDEN)),
        "pos_emb": dense(ks[1], (S, HIDDEN)),
        "ln0_g": jnp.ones((1, HIDDEN), jnp.float32), "ln0_b": bias2d(HIDDEN),
        "wq": dense(ks[2], (HIDDEN, HIDDEN)), "bq": bias2d(HIDDEN),
        "wk": dense(ks[3], (HIDDEN, HIDDEN)), "bk": bias2d(HIDDEN),
        "wv": dense(ks[4], (HIDDEN, HIDDEN)), "bv": bias2d(HIDDEN),
        "wo": dense(ks[5], (HIDDEN, HIDDEN)), "bo": bias2d(HIDDEN),
        "ln1_g": jnp.ones((1, HIDDEN), jnp.float32), "ln1_b": bias2d(HIDDEN),
        "w_f1": dense(ks[6], (HIDDEN, FFN)), "b_f1": bias2d(FFN),
        "w_f2": dense(ks[7], (FFN, HIDDEN)), "b_f2": bias2d(HIDDEN),
        "ln2_g": jnp.ones((1, HIDDEN), jnp.float32), "ln2_b": bias2d(HIDDEN),
        "w_out": dense(ks[8], (HIDDEN, VOCAB)), "b_out": bias2d(VOCAB),
    }


# ---------------- pure-JAX reference (correctness check) ------------------------
def reference_forward(input_ids, p):
    valid = (input_ids != PAD_ID).astype(jnp.float32)        # [B, S]
    mask_bias = ((1.0 - valid) * NEG_INF)[:, None, None, :]  # [B,1,1,S]
    positions = jnp.arange(S, dtype=jnp.int32)
    x = p["word_emb"][input_ids] + p["pos_emb"][positions][None]
    x = _layer_norm(x, p["ln0_g"], p["ln0_b"])

    def heads(t):  # [B,S,H] -> [B,nH,S,dH]
        return t.reshape(B, S, N_HEADS, HEAD_DIM).transpose(0, 2, 1, 3)

    q = heads(x @ p["wq"] + p["bq"])
    k = heads(x @ p["wk"] + p["bk"])
    v = heads(x @ p["wv"] + p["bv"])
    scores = jnp.einsum("bhqd,bhkd->bhqk", q, k) / math.sqrt(HEAD_DIM) + mask_bias
    pr = jax.nn.softmax(scores, axis=-1)
    ctx = jnp.einsum("bhqk,bhkd->bhqd", pr, v).transpose(0, 2, 1, 3).reshape(B, S, HIDDEN)
    x1 = _layer_norm(x + ctx @ p["wo"] + p["bo"], p["ln1_g"], p["ln1_b"])
    ffn = _gelu_tanh(x1 @ p["w_f1"] + p["b_f1"]) @ p["w_f2"] + p["b_f2"]
    x2 = _layer_norm(x1 + ffn, p["ln2_g"], p["ln2_b"])
    return x2 @ p["w_out"] + p["b_out"]


if __name__ == "__main__":
    key = jax.random.PRNGKey(0)
    pkey, dkey = jax.random.split(key)
    params = init_params(pkey)

    # deterministic token ids with some padding (pad_token_id = 0)
    input_ids = jax.random.randint(dkey, (B, S), 1, VOCAB, dtype=jnp.int32)
    input_ids = input_ids.at[0, S - 2:].set(PAD_ID).at[1, S - 3:].set(PAD_ID)

    logits = custom_transformer_forward(input_ids, params)
    logits = jax.block_until_ready(logits)

    ref = reference_forward(input_ids, params)
    assert logits.shape == (B, S, VOCAB)
    assert jnp.allclose(logits, ref, atol=1e-3, rtol=1e-3), "mismatch vs JAX reference"

    print("KERNEL_OK")
</pallas_src>

<mosaic_0001>
module attributes {stable_mosaic.version = 11 : i64} {
  func.func @transformer_kernel(%arg0: memref<16x32xf32, #tpu.memory_space<vmem>>, %arg1: memref<16x16xf32, #tpu.memory_space<vmem>>, %arg2: memref<32x320xf32, #tpu.memory_space<vmem>>, %arg3: memref<64x32xf32, #tpu.memory_space<vmem>>, %arg4: memref<13x128xf32, #tpu.memory_space<vmem>>, %arg5: memref<16x128xf32, #tpu.memory_space<vmem>>) attributes {dimension_semantics = [], scalar_prefetch = 0 : i64, scratch_operands = 0 : i64, tpu.core_type = #tpu.core_type<tc>} {
    %c0 = arith.constant 0 : index
    %c0_0 = arith.constant 0 : index
    %0 = vector.load %arg0[%c0, %c0_0] : memref<16x32xf32, #tpu.memory_space<vmem>>, vector<16x32xf32>
    %c0_1 = arith.constant 0 : index
    %c0_2 = arith.constant 0 : index
    %1 = vector.load %arg4[%c0_1, %c0_2] : memref<13x128xf32, #tpu.memory_space<vmem>>, vector<1x32xf32>
    %c1 = arith.constant 1 : index
    %c0_3 = arith.constant 0 : index
    %2 = vector.load %arg4[%c1, %c0_3] : memref<13x128xf32, #tpu.memory_space<vmem>>, vector<1x32xf32>
    %cst = arith.constant dense<0.000000e+00> : vector<16xf32>
    %3 = vector.multi_reduction <add>, %0, %cst [1] : vector<16x32xf32> to vector<16xf32>
    %4 = vector.shape_cast %3 : vector<16xf32> to vector<16x1xf32>
    %cst_4 = arith.constant 3.200000e+01 : f32
    %5 = vector.broadcast %cst_4 : f32 to vector<16x1xf32>
    %6 = arith.divf %4, %5 : vector<16x1xf32>
    %7 = vector.broadcast %6 : vector<16x1xf32> to vector<16x32xf32>
    %8 = arith.subf %0, %7 : vector<16x32xf32>
    %9 = vector.broadcast %6 : vector<16x1xf32> to vector<16x32xf32>
    %10 = arith.subf %0, %9 : vector<16x32xf32>
    %11 = arith.mulf %8, %10 : vector<16x32xf32>
    %cst_5 = arith.constant dense<0.000000e+00> : vector<16xf32>
    %12 = vector.multi_reduction <add>, %11, %cst_5 [1] : vector<16x32xf32> to vector<16xf32>
    %13 = vector.shape_cast %12 : vector<16xf32> to vector<16x1xf32>
    %cst_6 = arith.constant 3.200000e+01 : f32
    %14 = vector.broadcast %cst_6 : f32 to vector<16x1xf32>
    %15 = arith.divf %13, %14 : vector<16x1xf32>
    %16 = vector.broadcast %6 : vector<16x1xf32> to vector<16x32xf32>
    %17 = arith.subf %0, %16 : vector<16x32xf32>
    %cst_7 = arith.constant 9.99999996E-13 : f32
    %18 = vector.broadcast %cst_7 : f32 to vector<16x1xf32>
    %19 = arith.addf %15, %18 : vector<16x1xf32>
    %20 = math.rsqrt %19 : vector<16x1xf32>
    %21 = vector.broadcast %20 : vector<16x1xf32> to vector<16x32xf32>
    %22 = arith.mulf %17, %21 : vector<16x32xf32>
    %23 = vector.broadcast %1 : vector<1x32xf32> to vector<16x32xf32>
    %24 = arith.mulf %22, %23 : vector<16x32xf32>
    %25 = vector.broadcast %2 : vector<1x32xf32> to vector<16x32xf32>
    %26 = arith.addf %24, %25 : vector<16x32xf32>
    %c0_8 = arith.constant 0 : index
    %c0_9 = arith.constant 0 : index
    %27 = vector.load %arg1[%c0_8, %c0_9] : memref<16x16xf32, #tpu.memory_space<vmem>>, vector<16x16xf32>
    %cst_10 = arith.constant 0.000000e+00 : f32
    %28 = vector.broadcast %cst_10 : f32 to vector<16x32xf32>
    %c0_11 = arith.constant 0 : index
    %c0_12 = arith.constant 0 : index
    %29 = vector.load %arg2[%c0_11, %c0_12] : memref<32x320xf32, #tpu.memory_space<vmem>>, vector<32x8xf32>
    %c0_13 = arith.constant 0 : index
    %c32 = arith.constant 32 : index
    %30 = vector.load %arg2[%c0_13, %c32] : memref<32x320xf32, #tpu.memory_space<vmem>>, vector<32x8xf32>
    %c0_14 = arith.constant 0 : index
    %c64 = arith.constant 64 : index
    %31 = vector.load %arg2[%c0_14, %c64] : memref<32x320xf32, #tpu.memory_space<vmem>>, vector<32x8xf32>
    %c2 = arith.constant 2 : index
    %c0_15 = arith.constant 0 : index
    %32 = vector.load %arg4[%c2, %c0_15] : memref<13x128xf32, #tpu.memory_space<vmem>>, vector<1x8xf32>
    %c3 = arith.constant 3 : index
    %c0_16 = arith.constant 0 : index
    %33 = vector.load %arg4[%c3, %c0_16] : memref<13x128xf32, #tpu.memory_space<vmem>>, vector<1x8xf32>
    %c4 = arith.constant 4 : index
    %c0_17 = arith.constant 0 : index
    %34 = vector.load %arg4[%c4, %c0_17] : memref<13x128xf32, #tpu.memory_space<vmem>>, vector<1x8xf32>
    %cst_18 = arith.constant dense<0.000000e+00> : vector<16x8xf32>
    %35 = tpu.matmul %26, %29, %cst_18 {dimension_numbers = #tpu.dot_dimension_numbers<[1], [0], [0], [1], [0, 0, 1, 1], [], []>} : vector<16x32xf32>, vector<32x8xf32>, vector<16x8xf32> -> vector<16x8xf32>
    %36 = vector.broadcast %32 : vector<1x8xf32> to vector<16x8xf32>
    %37 = arith.addf %35, %36 : vector<16x8xf32>
    %cst_19 = arith.constant dense<0.000000e+00> : vector<16x8xf32>
    %38 = tpu.matmul %26, %30, %cst_19 {dimension_numbers = #tpu.dot_dimension_numbers<[1], [0], [0], [1], [0, 0, 1, 1], [], []>} : vector<16x32xf32>, vector<32x8xf32>, vector<16x8xf32> -> vector<16x8xf32>
    %39 = vector.broadcast %33 : vector<1x8xf32> to vector<16x8xf32>
    %40 = arith.addf %38, %39 : vector<16x8xf32>
    %cst_20 = arith.constant dense<0.000000e+00> : vector<16x8xf32>
    %41 = tpu.matmul %26, %31, %cst_20 {dimension_numbers = #tpu.dot_dimension_numbers<[1], [0], [0], [1], [0, 0, 1, 1], [], []>} : vector<16x32xf32>, vector<32x8xf32>, vector<16x8xf32> -> vector<16x8xf32>
    %42 = vector.broadcast %34 : vector<1x8xf32> to vector<16x8xf32>
    %43 = arith.addf %41, %42 : vector<16x8xf32>
    %cst_21 = arith.constant dense<0.000000e+00> : vector<16x16xf32>
    %44 = tpu.matmul %37, %40, %cst_21 {dimension_numbers = #tpu.dot_dimension_numbers<[1], [1], [0], [0], [0, 0, 1, 0], [], []>} : vector<16x8xf32>, vector<16x8xf32>, vector<16x16xf32> -> vector<16x16xf32>
    %cst_22 = arith.constant 0.353553385 : f32
    %45 = vector.broadcast %cst_22 : f32 to vector<16x16xf32>
    %46 = arith.mulf %44, %45 : vector<16x16xf32>
    %47 = arith.addf %46, %27 : vector<16x16xf32>
    %cst_23 = arith.constant dense<0xFF800000> : vector<16xf32>
    %48 = vector.multi_reduction <maximumf>, %47, %cst_23 [1] : vector<16x16xf32> to vector<16xf32>
    %49 = vector.shape_cast %48 : vector<16xf32> to vector<16x1xf32>
    %50 = vector.broadcast %49 : vector<16x1xf32> to vector<16x16xf32>
    %51 = arith.subf %47, %50 : vector<16x16xf32>
    %52 = math.exp %51 : vector<16x16xf32>
    %cst_24 = arith.constant dense<0.000000e+00> : vector<16xf32>
    %53 = vector.multi_reduction <add>, %52, %cst_24 [1] : vector<16x16xf32> to vector<16xf32>
    %54 = vector.shape_cast %53 : vector<16xf32> to vector<16x1xf32>
    %55 = tpu.reciprocal %54 {approx = true} : vector<16x1xf32> -> vector<16x1xf32>
    %56 = vector.broadcast %55 : vector<16x1xf32> to vector<16x16xf32>
    %57 = arith.mulf %52, %56 : vector<16x16xf32>
    %cst_25 = arith.constant dense<0.000000e+00> : vector<16x8xf32>
    %58 = tpu.matmul %57, %43, %cst_25 {dimension_numbers = #tpu.dot_dimension_numbers<[1], [0], [0], [1], [0, 0, 1, 1], [], []>} : vector<16x16xf32>, vector<16x8xf32>, vector<16x8xf32> -> vector<16x8xf32>
    %c0_26 = arith.constant 0 : index
    %c96 = arith.constant 96 : index
    %59 = vector.load %arg2[%c0_26, %c96] : memref<32x320xf32, #tpu.memory_space<vmem>>, vector<8x32xf32>
    %cst_27 = arith.constant dense<0.000000e+00> : vector<16x32xf32>
    %60 = tpu.matmul %58, %59, %cst_27 {dimension_numbers = #tpu.dot_dimension_numbers<[1], [0], [0], [1], [0, 0, 1, 1], [], []>} : vector<16x8xf32>, vector<8x32xf32>, vector<16x32xf32> -> vector<16x32xf32>
    %61 = arith.addf %28, %60 : vector<16x32xf32>
    %c0_28 = arith.constant 0 : index
    %c8 = arith.constant 8 : index
    %62 = vector.load %arg2[%c0_28, %c8] : memref<32x320xf32, #tpu.memory_space<vmem>>, vector<32x8xf32>
    %c0_29 = arith.constant 0 : index
    %c40 = arith.constant 40 : index
    %63 = vector.load %arg2[%c0_29, %c40] : memref<32x320xf32, #tpu.memory_space<vmem>>, vector<32x8xf32>
    %c0_30 = arith.constant 0 : index
    %c72 = arith.constant 72 : index
    %64 = vector.load %arg2[%c0_30, %c72] : memref<32x320xf32, #tpu.memory_space<vmem>>, vector<32x8xf32>
    %c2_31 = arith.constant 2 : index
    %c8_32 = arith.constant 8 : index
    %65 = vector.load %arg4[%c2_31, %c8_32] : memref<13x128xf32, #tpu.memory_space<vmem>>, vector<1x8xf32>
    %c3_33 = arith.constant 3 : index
    %c8_34 = arith.constant 8 : index
    %66 = vector.load %arg4[%c3_33, %c8_34] : memref<13x128xf32, #tpu.memory_space<vmem>>, vector<1x8xf32>
    %c4_35 = arith.constant 4 : index
    %c8_36 = arith.constant 8 : index
    %67 = vector.load %arg4[%c4_35, %c8_36] : memref<13x128xf32, #tpu.memory_space<vmem>>, vector<1x8xf32>
    %cst_37 = arith.constant dense<0.000000e+00> : vector<16x8xf32>
    %68 = tpu.matmul %26, %62, %cst_37 {dimension_numbers = #tpu.dot_dimension_numbers<[1], [0], [0], [1], [0, 0, 1, 1], [], []>} : vector<16x32xf32>, vector<32x8xf32>, vector<16x8xf32> -> vector<16x8xf32>
    %69 = vector.broadcast %65 : vector<1x8xf32> to vector<16x8xf32>
    %70 = arith.addf %68, %69 : vector<16x8xf32>
    %cst_38 = arith.constant dense<0.000000e+00> : vector<16x8xf32>
    %71 = tpu.matmul %26, %63, %cst_38 {dimension_numbers = #tpu.dot_dimension_numbers<[1], [0], [0], [1], [0, 0, 1, 1], [], []>} : vector<16x32xf32>, vector<32x8xf32>, vector<16x8xf32> -> vector<16x8xf32>
    %72 = vector.broadcast %66 : vector<1x8xf32> to vector<16x8xf32>
    %73 = arith.addf %71, %72 : vector<16x8xf32>
    %cst_39 = arith.constant dense<0.000000e+00> : vector<16x8xf32>
    %74 = tpu.matmul %26, %64, %cst_39 {dimension_numbers = #tpu.dot_dimension_numbers<[1], [0], [0], [1], [0, 0, 1, 1], [], []>} : vector<16x32xf32>, vector<32x8xf32>, vector<16x8xf32> -> vector<16x8xf32>
    %75 = vector.broadcast %67 : vector<1x8xf32> to vector<16x8xf32>
    %76 = arith.addf %74, %75 : vector<16x8xf32>
    %cst_40 = arith.constant dense<0.000000e+00> : vector<16x16xf32>
    %77 = tpu.matmul %70, %73, %cst_40 {dimension_numbers = #tpu.dot_dimension_numbers<[1], [1], [0], [0], [0, 0, 1, 0], [], []>} : vector<16x8xf32>, vector<16x8xf32>, vector<16x16xf32> -> vector<16x16xf32>
    %cst_41 = arith.constant 0.353553385 : f32
    %78 = vector.broadcast %cst_41 : f32 to vector<16x16xf32>
    %79 = arith.mulf %77, %78 : vector<16x16xf32>
    %80 = arith.addf %79, %27 : vector<16x16xf32>
    %cst_42 = arith.constant dense<0xFF800000> : vector<16xf32>
    %81 = vector.multi_reduction <maximumf>, %80, %cst_42 [1] : vector<16x16xf32> to vector<16xf32>
    %82 = vector.shape_cast %81 : vector<16xf32> to vector<16x1xf32>
    %83 = vector.broadcast %82 : vector<16x1xf32> to vector<16x16xf32>
    %84 = arith.subf %80, %83 : vector<16x16xf32>
    %85 = math.exp %84 : vector<16x16xf32>
    %cst_43 = arith.constant dense<0.000000e+00> : vector<16xf32>
    %86 = vector.multi_reduction <add>, %85, %cst_43 [1] : vector<16x16xf32> to vector<16xf32>
    %87 = vector.shape_cast %86 : vector<16xf32> to vector<16x1xf32>
    %88 = tpu.reciprocal %87 {approx = true} : vector<16x1xf32> -> vector<16x1xf32>
    %89 = vector.broadcast %88 : vector<16x1xf32> to vector<16x16xf32>
    %90 = arith.mulf %85, %89 : vector<16x16xf32>
    %cst_44 = arith.constant dense<0.000000e+00> : vector<16x8xf32>
    %91 = tpu.matmul %90, %76, %cst_44 {dimension_numbers = #tpu.dot_dimension_numbers<[1], [0], [0], [1], [0, 0, 1, 1], [], []>} : vector<16x16xf32>, vector<16x8xf32>, vector<16x8xf32> -> vector<16x8xf32>
    %c8_45 = arith.constant 8 : index
    %c96_46 = arith.constant 96 : index
    %92 = vector.load %arg2[%c8_45, %c96_46] : memref<32x320xf32, #tpu.memory_space<vmem>>, vector<8x32xf32>
    %cst_47 = arith.constant dense<0.000000e+00> : vector<16x32xf32>
    %93 = tpu.matmul %91, %92, %cst_47 {dimension_numbers = #tpu.dot_dimension_numbers<[1], [0], [0], [1], [0, 0, 1, 1], [], []>} : vector<16x8xf32>, vector<8x32xf32>, vector<16x32xf32> -> vector<16x32xf32>
    %94 = arith.addf %61, %93 : vector<16x32xf32>
    %c0_48 = arith.constant 0 : index
    %c16 = arith.constant 16 : index
    %95 = vector.load %arg2[%c0_48, %c16] : memref<32x320xf32, #tpu.memory_space<vmem>>, vector<32x8xf32>
    %c0_49 = arith.constant 0 : index
    %c48 = arith.constant 48 : index
    %96 = vector.load %arg2[%c0_49, %c48] : memref<32x320xf32, #tpu.memory_space<vmem>>, vector<32x8xf32>
    %c0_50 = arith.constant 0 : index
    %c80 = arith.constant 80 : index
    %97 = vector.load %arg2[%c0_50, %c80] : memref<32x320xf32, #tpu.memory_space<vmem>>, vector<32x8xf32>
    %c2_51 = arith.constant 2 : index
    %c16_52 = arith.constant 16 : index
    %98 = vector.load %arg4[%c2_51, %c16_52] : memref<13x128xf32, #tpu.memory_space<vmem>>, vector<1x8xf32>
    %c3_53 = arith.constant 3 : index
    %c16_54 = arith.constant 16 : index
    %99 = vector.load %arg4[%c3_53, %c16_54] : memref<13x128xf32, #tpu.memory_space<vmem>>, vector<1x8xf32>
    %c4_55 = arith.constant 4 : index
    %c16_56 = arith.constant 16 : index
    %100 = vector.load %arg4[%c4_55, %c16_56] : memref<13x128xf32, #tpu.memory_space<vmem>>, vector<1x8xf32>
    %cst_57 = arith.constant dense<0.000000e+00> : vector<16x8xf32>
    %101 = tpu.matmul %26, %95, %cst_57 {dimension_numbers = #tpu.dot_dimension_numbers<[1], [0], [0], [1], [0, 0, 1, 1], [], []>} : vector<16x32xf32>, vector<32x8xf32>, vector<16x8xf32> -> vector<16x8xf32>
    %102 = vector.broadcast %98 : vector<1x8xf32> to vector<16x8xf32>
    %103 = arith.addf %101, %102 : vector<16x8xf32>
    %cst_58 = arith.constant dense<0.000000e+00> : vector<16x8xf32>
    %104 = tpu.matmul %26, %96, %cst_58 {dimension_numbers = #tpu.dot_dimension_numbers<[1], [0], [0], [1], [0, 0, 1, 1], [], []>} : vector<16x32xf32>, vector<32x8xf32>, vector<16x8xf32> -> vector<16x8xf32>
    %105 = vector.broadcast %99 : vector<1x8xf32> to vector<16x8xf32>
    %106 = arith.addf %104, %105 : vector<16x8xf32>
    %cst_59 = arith.constant dense<0.000000e+00> : vector<16x8xf32>
    %107 = tpu.matmul %26, %97, %cst_59 {dimension_numbers = #tpu.dot_dimension_numbers<[1], [0], [0], [1], [0, 0, 1, 1], [], []>} : vector<16x32xf32>, vector<32x8xf32>, vector<16x8xf32> -> vector<16x8xf32>
    %108 = vector.broadcast %100 : vector<1x8xf32> to vector<16x8xf32>
    %109 = arith.addf %107, %108 : vector<16x8xf32>
    %cst_60 = arith.constant dense<0.000000e+00> : vector<16x16xf32>
    %110 = tpu.matmul %103, %106, %cst_60 {dimension_numbers = #tpu.dot_dimension_numbers<[1], [1], [0], [0], [0, 0, 1, 0], [], []>} : vector<16x8xf32>, vector<16x8xf32>, vector<16x16xf32> -> vector<16x16xf32>
    %cst_61 = arith.constant 0.353553385 : f32
    %111 = vector.broadcast %cst_61 : f32 to vector<16x16xf32>
    %112 = arith.mulf %110, %111 : vector<16x16xf32>
    %113 = arith.addf %112, %27 : vector<16x16xf32>
    %cst_62 = arith.constant dense<0xFF800000> : vector<16xf32>
    %114 = vector.multi_reduction <maximumf>, %113, %cst_62 [1] : vector<16x16xf32> to vector<16xf32>
    %115 = vector.shape_cast %114 : vector<16xf32> to vector<16x1xf32>
    %116 = vector.broadcast %115 : vector<16x1xf32> to vector<16x16xf32>
    %117 = arith.subf %113, %116 : vector<16x16xf32>
    %118 = math.exp %117 : vector<16x16xf32>
    %cst_63 = arith.constant dense<0.000000e+00> : vector<16xf32>
    %119 = vector.multi_reduction <add>, %118, %cst_63 [1] : vector<16x16xf32> to vector<16xf32>
    %120 = vector.shape_cast %119 : vector<16xf32> to vector<16x1xf32>
    %121 = tpu.reciprocal %120 {approx = true} : vector<16x1xf32> -> vector<16x1xf32>
    %122 = vector.broadcast %121 : vector<16x1xf32> to vector<16x16xf32>
    %123 = arith.mulf %118, %122 : vector<16x16xf32>
    %cst_64 = arith.constant dense<0.000000e+00> : vector<16x8xf32>
    %124 = tpu.matmul %123, %109, %cst_64 {dimension_numbers = #tpu.dot_dimension_numbers<[1], [0], [0], [1], [0, 0, 1, 1], [], []>} : vector<16x16xf32>, vector<16x8xf32>, vector<16x8xf32> -> vector<16x8xf32>
    %c16_65 = arith.constant 16 : index
    %c96_66 = arith.constant 96 : index
    %125 = vector.load %arg2[%c16_65, %c96_66] : memref<32x320xf32, #tpu.memory_space<vmem>>, vector<8x32xf32>
    %cst_67 = arith.constant dense<0.000000e+00> : vector<16x32xf32>
    %126 = tpu.matmul %124, %125, %cst_67 {dimension_numbers = #tpu.dot_dimension_numbers<[1], [0], [0], [1], [0, 0, 1, 1], [], []>} : vector<16x8xf32>, vector<8x32xf32>, vector<16x32xf32> -> vector<16x32xf32>
    %127 = arith.addf %94, %126 : vector<16x32xf32>
    %c0_68 = arith.constant 0 : index
    %c24 = arith.constant 24 : index
    %128 = vector.load %arg2[%c0_68, %c24] : memref<32x320xf32, #tpu.memory_space<vmem>>, vector<32x8xf32>
    %c0_69 = arith.constant 0 : index
    %c56 = arith.constant 56 : index
    %129 = vector.load %arg2[%c0_69, %c56] : memref<32x320xf32, #tpu.memory_space<vmem>>, vector<32x8xf32>
    %c0_70 = arith.constant 0 : index
    %c88 = arith.constant 88 : index
    %130 = vector.load %arg2[%c0_70, %c88] : memref<32x320xf32, #tpu.memory_space<vmem>>, vector<32x8xf32>
    %c2_71 = arith.constant 2 : index
    %c24_72 = arith.constant 24 : index
    %131 = vector.load %arg4[%c2_71, %c24_72] : memref<13x128xf32, #tpu.memory_space<vmem>>, vector<1x8xf32>
    %c3_73 = arith.constant 3 : index
    %c24_74 = arith.constant 24 : index
    %132 = vector.load %arg4[%c3_73, %c24_74] : memref<13x128xf32, #tpu.memory_space<vmem>>, vector<1x8xf32>
    %c4_75 = arith.constant 4 : index
    %c24_76 = arith.constant 24 : index
    %133 = vector.load %arg4[%c4_75, %c24_76] : memref<13x128xf32, #tpu.memory_space<vmem>>, vector<1x8xf32>
    %cst_77 = arith.constant dense<0.000000e+00> : vector<16x8xf32>
    %134 = tpu.matmul %26, %128, %cst_77 {dimension_numbers = #tpu.dot_dimension_numbers<[1], [0], [0], [1], [0, 0, 1, 1], [], []>} : vector<16x32xf32>, vector<32x8xf32>, vector<16x8xf32> -> vector<16x8xf32>
    %135 = vector.broadcast %131 : vector<1x8xf32> to vector<16x8xf32>
    %136 = arith.addf %134, %135 : vector<16x8xf32>
    %cst_78 = arith.constant dense<0.000000e+00> : vector<16x8xf32>
    %137 = tpu.matmul %26, %129, %cst_78 {dimension_numbers = #tpu.dot_dimension_numbers<[1], [0], [0], [1], [0, 0, 1, 1], [], []>} : vector<16x32xf32>, vector<32x8xf32>, vector<16x8xf32> -> vector<16x8xf32>
    %138 = vector.broadcast %132 : vector<1x8xf32> to vector<16x8xf32>
    %139 = arith.addf %137, %138 : vector<16x8xf32>
    %cst_79 = arith.constant dense<0.000000e+00> : vector<16x8xf32>
    %140 = tpu.matmul %26, %130, %cst_79 {dimension_numbers = #tpu.dot_dimension_numbers<[1], [0], [0], [1], [0, 0, 1, 1], [], []>} : vector<16x32xf32>, vector<32x8xf32>, vector<16x8xf32> -> vector<16x8xf32>
    %141 = vector.broadcast %133 : vector<1x8xf32> to vector<16x8xf32>
    %142 = arith.addf %140, %141 : vector<16x8xf32>
    %cst_80 = arith.constant dense<0.000000e+00> : vector<16x16xf32>
    %143 = tpu.matmul %136, %139, %cst_80 {dimension_numbers = #tpu.dot_dimension_numbers<[1], [1], [0], [0], [0, 0, 1, 0], [], []>} : vector<16x8xf32>, vector<16x8xf32>, vector<16x16xf32> -> vector<16x16xf32>
    %cst_81 = arith.constant 0.353553385 : f32
    %144 = vector.broadcast %cst_81 : f32 to vector<16x16xf32>
    %145 = arith.mulf %143, %144 : vector<16x16xf32>
    %146 = arith.addf %145, %27 : vector<16x16xf32>
    %cst_82 = arith.constant dense<0xFF800000> : vector<16xf32>
    %147 = vector.multi_reduction <maximumf>, %146, %cst_82 [1] : vector<16x16xf32> to vector<16xf32>
    %148 = vector.shape_cast %147 : vector<16xf32> to vector<16x1xf32>
    %149 = vector.broadcast %148 : vector<16x1xf32> to vector<16x16xf32>
    %150 = arith.subf %146, %149 : vector<16x16xf32>
    %151 = math.exp %150 : vector<16x16xf32>
    %cst_83 = arith.constant dense<0.000000e+00> : vector<16xf32>
    %152 = vector.multi_reduction <add>, %151, %cst_83 [1] : vector<16x16xf32> to vector<16xf32>
    %153 = vector.shape_cast %152 : vector<16xf32> to vector<16x1xf32>
    %154 = tpu.reciprocal %153 {approx = true} : vector<16x1xf32> -> vector<16x1xf32>
    %155 = vector.broadcast %154 : vector<16x1xf32> to vector<16x16xf32>
    %156 = arith.mulf %151, %155 : vector<16x16xf32>
    %cst_84 = arith.constant dense<0.000000e+00> : vector<16x8xf32>
    %157 = tpu.matmul %156, %142, %cst_84 {dimension_numbers = #tpu.dot_dimension_numbers<[1], [0], [0], [1], [0, 0, 1, 1], [], []>} : vector<16x16xf32>, vector<16x8xf32>, vector<16x8xf32> -> vector<16x8xf32>
    %c24_85 = arith.constant 24 : index
    %c96_86 = arith.constant 96 : index
    %158 = vector.load %arg2[%c24_85, %c96_86] : memref<32x320xf32, #tpu.memory_space<vmem>>, vector<8x32xf32>
    %cst_87 = arith.constant dense<0.000000e+00> : vector<16x32xf32>
    %159 = tpu.matmul %157, %158, %cst_87 {dimension_numbers = #tpu.dot_dimension_numbers<[1], [0], [0], [1], [0, 0, 1, 1], [], []>} : vector<16x8xf32>, vector<8x32xf32>, vector<16x32xf32> -> vector<16x32xf32>
    %160 = arith.addf %127, %159 : vector<16x32xf32>
    %c5 = arith.constant 5 : index
    %c0_88 = arith.constant 0 : index
    %161 = vector.load %arg4[%c5, %c0_88] : memref<13x128xf32, #tpu.memory_space<vmem>>, vector<1x32xf32>
    %162 = vector.broadcast %161 : vector<1x32xf32> to vector<16x32xf32>
    %163 = arith.addf %160, %162 : vector<16x32xf32>
    %164 = arith.addf %26, %163 : vector<16x32xf32>
    %c6 = arith.constant 6 : index
    %c0_89 = arith.constant 0 : index
    %165 = vector.load %arg4[%c6, %c0_89] : memref<13x128xf32, #tpu.memory_space<vmem>>, vector<1x32xf32>
    %c7 = arith.constant 7 : index
    %c0_90 = arith.constant 0 : index
    %166 = vector.load %arg4[%c7, %c0_90] : memref<13x128xf32, #tpu.memory_space<vmem>>, vector<1x32xf32>
    %cst_91 = arith.constant dense<0.000000e+00> : vector<16xf32>
    %167 = vector.multi_reduction <add>, %164, %cst_91 [1] : vector<16x32xf32> to vector<16xf32>
    %168 = vector.shape_cast %167 : vector<16xf32> to vector<16x1xf32>
    %cst_92 = arith.constant 3.200000e+01 : f32
    %169 = vector.broadcast %cst_92 : f32 to vector<16x1xf32>
    %170 = arith.divf %168, %169 : vector<16x1xf32>
    %171 = vector.broadcast %170 : vector<16x1xf32> to vector<16x32xf32>
    %172 = arith.subf %164, %171 : vector<16x32xf32>
    %173 = vector.broadcast %170 : vector<16x1xf32> to vector<16x32xf32>
    %174 = arith.subf %164, %173 : vector<16x32xf32>
    %175 = arith.mulf %172, %174 : vector<16x32xf32>
    %cst_93 = arith.constant dense<0.000000e+00> : vector<16xf32>
    %176 = vector.multi_reduction <add>, %175, %cst_93 [1] : vector<16x32xf32> to vector<16xf32>
    %177 = vector.shape_cast %176 : vector<16xf32> to vector<16x1xf32>
    %cst_94 = arith.constant 3.200000e+01 : f32
    %178 = vector.broadcast %cst_94 : f32 to vector<16x1xf32>
    %179 = arith.divf %177, %178 : vector<16x1xf32>
    %180 = vector.broadcast %170 : vector<16x1xf32> to vector<16x32xf32>
    %181 = arith.subf %164, %180 : vector<16x32xf32>
    %cst_95 = arith.constant 9.99999996E-13 : f32
    %182 = vector.broadcast %cst_95 : f32 to vector<16x1xf32>
    %183 = arith.addf %179, %182 : vector<16x1xf32>
    %184 = math.rsqrt %183 : vector<16x1xf32>
    %185 = vector.broadcast %184 : vector<16x1xf32> to vector<16x32xf32>
    %186 = arith.mulf %181, %185 : vector<16x32xf32>
    %187 = vector.broadcast %165 : vector<1x32xf32> to vector<16x32xf32>
    %188 = arith.mulf %186, %187 : vector<16x32xf32>
    %189 = vector.broadcast %166 : vector<1x32xf32> to vector<16x32xf32>
    %190 = arith.addf %188, %189 : vector<16x32xf32>
    %c0_96 = arith.constant 0 : index
    %c128 = arith.constant 128 : index
    %191 = vector.load %arg2[%c0_96, %c128] : memref<32x320xf32, #tpu.memory_space<vmem>>, vector<32x64xf32>
    %cst_97 = arith.constant dense<0.000000e+00> : vector<16x64xf32>
    %192 = tpu.matmul %190, %191, %cst_97 {dimension_numbers = #tpu.dot_dimension_numbers<[1], [0], [0], [1], [0, 0, 1, 1], [], []>} : vector<16x32xf32>, vector<32x64xf32>, vector<16x64xf32> -> vector<16x64xf32>
    %c8_98 = arith.constant 8 : index
    %c0_99 = arith.constant 0 : index
    %193 = vector.load %arg4[%c8_98, %c0_99] : memref<13x128xf32, #tpu.memory_space<vmem>>, vector<1x64xf32>
    %194 = vector.broadcast %193 : vector<1x64xf32> to vector<16x64xf32>
    %195 = arith.addf %192, %194 : vector<16x64xf32>
    %cst_100 = arith.constant 5.000000e-01 : f32
    %196 = vector.broadcast %cst_100 : f32 to vector<16x64xf32>
    %197 = arith.mulf %196, %195 : vector<16x64xf32>
    %cst_101 = arith.constant 4.471500e-02 : f32
    %198 = vector.broadcast %cst_101 : f32 to vector<16x64xf32>
    %199 = arith.mulf %198, %195 : vector<16x64xf32>
    %200 = arith.mulf %199, %195 : vector<16x64xf32>
    %201 = arith.mulf %200, %195 : vector<16x64xf32>
    %202 = arith.addf %195, %201 : vector<16x64xf32>
    %cst_102 = arith.constant 0.797884583 : f32
    %203 = vector.broadcast %cst_102 : f32 to vector<16x64xf32>
    %204 = arith.mulf %203, %202 : vector<16x64xf32>
    %205 = math.tanh %204 : vector<16x64xf32>
    %cst_103 = arith.constant 1.000000e+00 : f32
    %206 = vector.broadcast %cst_103 : f32 to vector<16x64xf32>
    %207 = arith.addf %206, %205 : vector<16x64xf32>
    %208 = arith.mulf %197, %207 : vector<16x64xf32>
    %c0_104 = arith.constant 0 : index
    %c0_105 = arith.constant 0 : index
    %209 = vector.load %arg3[%c0_104, %c0_105] : memref<64x32xf32, #tpu.memory_space<vmem>>, vector<64x32xf32>
    %cst_106 = arith.constant dense<0.000000e+00> : vector<16x32xf32>
    %210 = tpu.matmul %208, %209, %cst_106 {dimension_numbers = #tpu.dot_dimension_numbers<[1], [0], [0], [1], [0, 0, 1, 1], [], []>} : vector<16x64xf32>, vector<64x32xf32>, vector<16x32xf32> -> vector<16x32xf32>
    %c9 = arith.constant 9 : index
    %c0_107 = arith.constant 0 : index
    %211 = vector.load %arg4[%c9, %c0_107] : memref<13x128xf32, #tpu.memory_space<vmem>>, vector<1x32xf32>
    %212 = vector.broadcast %211 : vector<1x32xf32> to vector<16x32xf32>
    %213 = arith.addf %210, %212 : vector<16x32xf32>
    %214 = arith.addf %190, %213 : vector<16x32xf32>
    %c10 = arith.constant 10 : index
    %c0_108 = arith.constant 0 : index
    %215 = vector.load %arg4[%c10, %c0_108] : memref<13x128xf32, #tpu.memory_space<vmem>>, vector<1x32xf32>
    %c11 = arith.constant 11 : index
    %c0_109 = arith.constant 0 : index
    %216 = vector.load %arg4[%c11, %c0_109] : memref<13x128xf32, #tpu.memory_space<vmem>>, vector<1x32xf32>
    %cst_110 = arith.constant dense<0.000000e+00> : vector<16xf32>
    %217 = vector.multi_reduction <add>, %214, %cst_110 [1] : vector<16x32xf32> to vector<16xf32>
    %218 = vector.shape_cast %217 : vector<16xf32> to vector<16x1xf32>
    %cst_111 = arith.constant 3.200000e+01 : f32
    %219 = vector.broadcast %cst_111 : f32 to vector<16x1xf32>
    %220 = arith.divf %218, %219 : vector<16x1xf32>
    %221 = vector.broadcast %220 : vector<16x1xf32> to vector<16x32xf32>
    %222 = arith.subf %214, %221 : vector<16x32xf32>
    %223 = vector.broadcast %220 : vector<16x1xf32> to vector<16x32xf32>
    %224 = arith.subf %214, %223 : vector<16x32xf32>
    %225 = arith.mulf %222, %224 : vector<16x32xf32>
    %cst_112 = arith.constant dense<0.000000e+00> : vector<16xf32>
    %226 = vector.multi_reduction <add>, %225, %cst_112 [1] : vector<16x32xf32> to vector<16xf32>
    %227 = vector.shape_cast %226 : vector<16xf32> to vector<16x1xf32>
    %cst_113 = arith.constant 3.200000e+01 : f32
    %228 = vector.broadcast %cst_113 : f32 to vector<16x1xf32>
    %229 = arith.divf %227, %228 : vector<16x1xf32>
    %230 = vector.broadcast %220 : vector<16x1xf32> to vector<16x32xf32>
    %231 = arith.subf %214, %230 : vector<16x32xf32>
    %cst_114 = arith.constant 9.99999996E-13 : f32
    %232 = vector.broadcast %cst_114 : f32 to vector<16x1xf32>
    %233 = arith.addf %229, %232 : vector<16x1xf32>
    %234 = math.rsqrt %233 : vector<16x1xf32>
    %235 = vector.broadcast %234 : vector<16x1xf32> to vector<16x32xf32>
    %236 = arith.mulf %231, %235 : vector<16x32xf32>
    %237 = vector.broadcast %215 : vector<1x32xf32> to vector<16x32xf32>
    %238 = arith.mulf %236, %237 : vector<16x32xf32>
    %239 = vector.broadcast %216 : vector<1x32xf32> to vector<16x32xf32>
    %240 = arith.addf %238, %239 : vector<16x32xf32>
    %c0_115 = arith.constant 0 : index
    %c192 = arith.constant 192 : index
    %241 = vector.load %arg2[%c0_115, %c192] : memref<32x320xf32, #tpu.memory_space<vmem>>, vector<32x128xf32>
    %cst_116 = arith.constant dense<0.000000e+00> : vector<16x128xf32>
    %242 = tpu.matmul %240, %241, %cst_116 {dimension_numbers = #tpu.dot_dimension_numbers<[1], [0], [0], [1], [0, 0, 1, 1], [], []>} : vector<16x32xf32>, vector<32x128xf32>, vector<16x128xf32> -> vector<16x128xf32>
    %c12 = arith.constant 12 : index
    %c0_117 = arith.constant 0 : index
    %243 = vector.load %arg4[%c12, %c0_117] : memref<13x128xf32, #tpu.memory_space<vmem>>, vector<1x128xf32>
    %244 = vector.broadcast %243 : vector<1x128xf32> to vector<16x128xf32>
    %245 = arith.addf %242, %244 : vector<16x128xf32>
    %c0_118 = arith.constant 0 : index
    %c0_119 = arith.constant 0 : index
    %246 = vector.load %arg5[%c0_118, %c0_119] : memref<16x128xf32, #tpu.memory_space<vmem>>, vector<16x128xf32>
    tpu.vector_store %arg5[%c0_118, %c0_119], %245 {strides = array<i32>} : memref<16x128xf32, #tpu.memory_space<vmem>>, vector<16x128xf32>,
    return
  }
}

</mosaic_0001>

<llo_original>
// kernel: tpu_custom_call.1
$region0: #{tpu_custom_call.1}
  #allocation0 [shape = 'u32[]', space=smem, size = 0x4, offset = 0x4, fixed_abs, tag = 'smem constant byte address 0x4 - core index']
  #allocation1 [shape = 'u32[144,128]{1,0:T(1,128)}', space=vmem, size = 0x12000, scoped, tag = 'internal scratch']
  %s0 = inlined_call_operand.hbm [shape: f32[16,32], index: 0, kind: input, shape index: {}]
  %s1 = inlined_call_operand.hbm [shape: f32[16,16], index: 1, kind: input, shape index: {}]
  %s2 = inlined_call_operand.vmem [shape: f32[32,320], index: 2, kind: input, shape index: {}]
  %s3 = inlined_call_operand.vmem [shape: f32[64,32], index: 3, kind: input, shape index: {}]
  %s4 = inlined_call_operand.hbm [shape: f32[13,128], index: 4, kind: input, shape index: {}]
  %s5 = inlined_call_operand.hbm [shape: f32[16,128], index: 5, kind: output, shape index: {}]
  %s6 = sld [smem:[#allocation0]]
  $region42: #{tpu_custom_call.1} parent=0
    _
  %s8 = ssub.s32 1, %s6
  %s9 = scalar_select 0, %s8, %s6
  $region1: #{tpu_custom_call.1} parent=0
    #allocation2 [shape = 'u8[8192]{0}', space=vmem, size = 0x2000, scoped, tag = 'input window, operand 0, single buffered']
    #allocation3 [shape = 's32[1]{0}', space=sflag, size = 0x4, scoped, tag = 'scoped memory for tpu_custom_call.1']
    #allocation4 [shape = 's32[1]{0}', space=sflag, size = 0x4, scoped, tag = 'scoped memory for tpu_custom_call.1']
    #allocation5 [shape = 'u8[8192]{0}', space=vmem, size = 0x2000, scoped, tag = 'input window, operand 1, single buffered']
    #allocation6 [shape = 's32[1]{0}', space=sflag, size = 0x4, scoped, tag = 'scoped memory for tpu_custom_call.1']
    #allocation7 [shape = 'u8[8192]{0}', space=vmem, size = 0x2000, scoped, tag = 'input window, operand 4, single buffered']
    #allocation8 [shape = 'u8[8192]{0}', space=vmem, size = 0x2000, scoped, tag = 'output window, operand 0, single buffered']
    %10 = vsyncpa [#allocation3], 0
    %11 = vsyncpa [#allocation6], 0
    %12 = vsyncpa [#allocation4], 0
    // Predicated region
    $region2: #{tpu_custom_call.1} parent=1 // pred_check
      _
    $region3: #{tpu_custom_call.1} parent=1 // pred_check_branch
      %14 = sbr.rel (0) target = $region5
    $region4: #{tpu_custom_call.1} parent=1 // pred_region
      %s16 = ssub.s32 256, 256
      %17 = vsyncadd [#allocation3], %s16
      %s18 = sshll.u32 [#allocation2], 4
      %s19 = int_to_ptr.vmem [resolvable:$true] %s18
      %24 = dma.hbm_to_vmem [thread:$0]  %s0, 256, %s19, [#allocation3], 128, 128, 8
    $region5: #{tpu_custom_call.1} parent=1 // pred_fallthru
      _
    // Predicated region
    $region6: #{tpu_custom_call.1} parent=1 // pred_check
      _
    $region7: #{tpu_custom_call.1} parent=1 // pred_check_branch
      %26 = sbr.rel (0) target = $region9
    $region8: #{tpu_custom_call.1} parent=1 // pred_region
      %s28 = ssub.s32 256, 256
      %29 = vsyncadd [#allocation6], %s28
      %s30 = sshll.u32 [#allocation5], 4
      %s31 = int_to_ptr.vmem [resolvable:$true] %s30
      %36 = dma.hbm_to_vmem [thread:$0]  %s1, 256, %s31, [#allocation6], 128, 128, 8
    $region9: #{tpu_custom_call.1} parent=1 // pred_fallthru
      _
    // Predicated region
    $region10: #{tpu_custom_call.1} parent=1 // pred_check
      _
    $region11: #{tpu_custom_call.1} parent=1 // pred_check_branch
      %38 = sbr.rel (0) target = $region13
    $region12: #{tpu_custom_call.1} parent=1 // pred_region
      _
    $region13: #{tpu_custom_call.1} parent=1 // pred_fallthru
      _
    // Predicated region
    $region14: #{tpu_custom_call.1} parent=1 // pred_check
      _
    $region15: #{tpu_custom_call.1} parent=1 // pred_check_branch
      %40 = sbr.rel (0) target = $region17
    $region16: #{tpu_custom_call.1} parent=1 // pred_region
      _
    $region17: #{tpu_custom_call.1} parent=1 // pred_fallthru
      _
    // Predicated region
    $region18: #{tpu_custom_call.1} parent=1 // pred_check
      _
    $region19: #{tpu_custom_call.1} parent=1 // pred_check_branch
      %42 = sbr.rel (0) target = $region21
    $region20: #{tpu_custom_call.1} parent=1 // pred_region
      %s44 = ssub.s32 256, 256
      %45 = vsyncadd [#allocation6], %s44
      %s46 = sshll.u32 [#allocation7], 4
      %s47 = int_to_ptr.vmem [resolvable:$true] %s46
      %52 = dma.hbm_to_vmem [thread:$0]  %s4, 256, %s47, [#allocation6], 128, 128, 8
    $region21: #{tpu_custom_call.1} parent=1 // pred_fallthru
      _
    // Predicated region
    $region22: #{tpu_custom_call.1} parent=1 // pred_check
      _
    $region23: #{tpu_custom_call.1} parent=1 // pred_check_branch
      %54 = sbr.rel (0) target = $region25
    $region24: #{tpu_custom_call.1} parent=1 // pred_region
      %55 = dma.done [#allocation3], 256
    $region25: #{tpu_custom_call.1} parent=1 // pred_fallthru
      _
    // Predicated region
    $region26: #{tpu_custom_call.1} parent=1 // pred_check
      _
    $region27: #{tpu_custom_call.1} parent=1 // pred_check_branch
      %57 = sbr.rel (0) target = $region29
    $region28: #{tpu_custom_call.1} parent=1 // pred_region
      %58 = dma.done [#allocation6], 256
    $region29: #{tpu_custom_call.1} parent=1 // pred_fallthru
      _
    // Predicated region
    $region30: #{tpu_custom_call.1} parent=1 // pred_check
      _
    $region31: #{tpu_custom_call.1} parent=1 // pred_check_branch
      %60 = sbr.rel (0) target = $region33
    $region32: #{tpu_custom_call.1} parent=1 // pred_region
      %61 = dma.done [#allocation6], 256
    $region33: #{tpu_custom_call.1} parent=1 // pred_fallthru
      _
    %v62 = vld [vmem:[#allocation2] sm:$0xff]
    %v63 = vld [vmem:[#allocation2 + $0x8] sm:$0xff]
    %v64 = vld [vmem:[#allocation7] sm:$0x1]
    %v65 = vld [vmem:[#allocation7 + $0x1] sm:$0x1]
    %vm66 = vcmask 261120
    %v67 = vsel %vm66, %v62, 0.0
    %68 = vadd.xlane.f32.xlu0 %v67
    %v69 = vpop.xlane.xlu0 %68
    %v70 = vsel %vm66, %v63, 0.0
    %71 = vadd.xlane.f32.xlu0 %v70
    %v72 = vpop.xlane.xlu0 %71
    %v73 = vrcp.pop 32.0
    %v74 = vmul.f32 %v69, %v73
    %v75 = vmul.f32 %v72, %v73
    %v76 = vsub.f32 %v62, %v74
    %v77 = vsub.f32 %v63, %v75
    %v78 = vmul.f32 %v76, %v76
    %v79 = vmul.f32 %v77, %v77
    %v80 = vsel %vm66, %v78, 0.0
    %81 = vadd.xlane.f32.xlu0 %v80
    %v82 = vpop.xlane.xlu0 %81
    %v83 = vsel %vm66, %v79, 0.0
    %84 = vadd.xlane.f32.xlu0 %v83
    %v85 = vpop.xlane.xlu0 %84
    %v86 = vmul.f32 %v82, %v73
    %v87 = vmul.f32 %v85, %v73
    %v88 = vadd.f32 %v86, 1e-12
    %v89 = vadd.f32 %v87, 1e-12
    %v90 = vrsqrt.pop %v88
    %v91 = vrsqrt.pop %v89
    %v92 = vmul.f32 %v76, %v90
    %v93 = vmul.f32 %v77, %v91
    %v94 = vlaneseq
    %v95 = vshrl.u32 %v94, 7
    %v96 = vsub.s32 0, %v95
    %v97 = vrot.slane %v64, %v96
    %v98 = vmul.f32 %v92, %v97
    %v99 = vmul.f32 %v93, %v97
    %v100 = vlaneseq
    %v101 = vshrl.u32 %v100, 7
    %v102 = vsub.s32 0, %v101
    %v103 = vrot.slane %v65, %v102
    %v104 = vadd.f32 %v98, %v103
    %v105 = vadd.f32 %v99, %v103
    %v106 = vld [vmem:[#allocation5] sm:$0xff]
    %v107 = vld [vmem:[#allocation5 + $0x8] sm:$0xff]
    %v108 = vld [vmem:[%s2] sm:$0xff]
    %v109 = vld [vmem:[%s2 + $0x18] sm:$0xff]
    %v110 = vld [vmem:[%s2 + $0x30] sm:$0xff]
    %v111 = vld [vmem:[%s2 + $0x48] sm:$0xff]
    %v112 = vld [vmem:[#allocation7 + $0x2] sm:$0x1]
    %v113 = vld [vmem:[#allocation7 + $0x3] sm:$0x1]
    %v114 = vld [vmem:[#allocation7 + $0x4] sm:$0x1]
    %v115 = vlaneseq
    %v116 = vshrl.u32 %v115, 7
    %v117 = vsub.s32 0, %v116
    %v118 = vrot.slane %v112, %v117
    %v120 = vsel %vm66, %v104, 0
    %v123 = vsel %vm66, %v105, 0
    %125 = vmatprep.subr.mxu0 0.0
    %126 = vmatpush1.msra.mxu0 %v108
    %127 = vmatprep.subr.mxu0 0.0
    %128 = vmatpush1.msra.mxu0 %v109
    %129 = vmatprep.subr.mxu0 0.0
    %130 = vmatpush1.msra.mxu0 %v110
    %131 = vmatprep.subr.mxu0 0.0
    %132 = vmatpush1.msra.mxu0 %v111
    %133 = vmatprep.subr.mxu0 0.0
    %134 = vmatpush1.msra.mxu0 0.0
    %135 = vmatprep.subr.mxu0 0.0
    %136 = vmatpush1.msra.mxu0 0.0
    %137 = vmatprep.subr.mxu0 0.0
    %138 = vmatpush1.msra.mxu0 0.0
    %139 = vmatprep.subr.mxu0 0.0
    %140 = vmatpush1.msra.mxu0 0.0
    %141 = vmatprep.subr.mxu0 0.0
    %142 = vmatpush1.msra.mxu0 0.0
    %143 = vmatprep.subr.mxu0 0.0
    %144 = vmatpush1.msra.mxu0 0.0
    %145 = vmatprep.subr.mxu0 0.0
    %146 = vmatpush1.msra.mxu0 0.0
    %147 = vmatprep.subr.mxu0 0.0
    %148 = vmatpush1.msra.mxu0 0.0
    %149 = vmatprep.subr.mxu0 0.0
    %150 = vmatpush1.msra.mxu0 0.0
    %151 = vmatprep.subr.mxu0 0.0
    %152 = vmatpush1.msra.mxu0 0.0
    %153 = vmatprep.subr.mxu0 0.0
    %154 = vmatpush1.msra.mxu0 0.0
    %155 = vmatprep.subr.mxu0 0.0
    %156 = vmatpush1.msra.mxu0 0.0
    %157 = vmatprep.subr.mxu0 0.0
    %158 = vmatpush1.msra.mxu0 0.0
    %159 = vmatprep.subr.mxu0 0.0
    %160 = vmatpush1.msra.mxu0 0.0
    %161 = vmatprep.subr.mxu0 0.0
    %162 = vmatpush1.msra.mxu0 0.0
    %163 = vmatprep.subr.mxu0 0.0
    %164 = vmatpush1.msra.mxu0 0.0
    %165 = vmatprep.subr.mxu0 0.0
    %166 = vmatpush1.msra.mxu0 0.0
    %167 = vmatprep.subr.mxu0 0.0
    %168 = vmatpush1.msra.mxu0 0.0
    %169 = vmatprep.subr.mxu0 0.0
    %170 = vmatpush1.msra.mxu0 0.0
    %171 = vmatprep.subr.mxu0 0.0
    %172 = vmatpush1.msra.mxu0 0.0
    %173 = vmatprep.subr.mxu0 0.0
    %174 = vmatpush1.msra.mxu0 0.0
    %175 = vmatprep.subr.mxu0 0.0
    %176 = vmatpush1.msra.mxu0 0.0
    %177 = vmatprep.subr.mxu0 0.0
    %178 = vmatpush1.msra.mxu0 0.0
    %179 = vmatprep.subr.mxu0 0.0
    %180 = vmatpush1.msra.mxu0 0.0
    %181 = vmatprep.subr.mxu0 0.0
    %182 = vmatpush1.msra.mxu0 0.0
    %183 = vmatprep.subr.mxu0 0.0
    %184 = vmatpush1.msra.mxu0 0.0
    %185 = vmatprep.subr.mxu0 0.0
    %186 = vmatpush1.msra.mxu0 0.0
    %187 = vmatprep.subr.mxu0 0.0
    %188 = vmatpush1.msra.mxu0 0.0
    %189 = vmatprep.mubr.f32.mxu0 0.0
    %190 = vmatmul.mubr.f32.gmra.mrb[0].mxu0 %v120
    %v191 = vpop.f32.mrb[0].mxu0
    %v192 = vadd.f32 %v118, %v191
    %v193 = vpop.f32.mrb[0].mxu0
    %194 = vmatprep.mubr.f32.mxu0 0.0
    %195 = vmatmul.mubr.f32.gmra.mrb[0].mxu0 %v123
    %v196 = vpop.f32.mrb[0].mxu0
    %v197 = vadd.f32 %v118, %v196
    %v198 = vpop.f32.mrb[0].mxu0
    %199 = vdwg.mxu0
    %v200 = vlaneseq
    %v201 = vshrl.u32 %v200, 7
    %v202 = vsub.s32 0, %v201
    %v203 = vrot.slane %v113, %v202
    %208 = vrot.lane.b32.xlu0 %v108, 96
    %v209 = vpop.permute.xlu0 %208
    %210 = vrot.lane.b32.xlu0 %v109, 96
    %v211 = vpop.permute.xlu0 %210
    %212 = vrot.lane.b32.xlu0 %v110, 96
    %v213 = vpop.permute.xlu0 %212
    %214 = vrot.lane.b32.xlu0 %v111, 96
    %v215 = vpop.permute.xlu0 %214
    %220 = vmatprep.subr.mxu0 0.0
    %221 = vmatpush1.msra.mxu0 %v209
    %222 = vmatprep.subr.mxu0 0.0
    %223 = vmatpush1.msra.mxu0 %v211
    %224 = vmatprep.subr.mxu0 0.0
    %225 = vmatpush1.msra.mxu0 %v213
    %226 = vmatprep.subr.mxu0 0.0
    %227 = vmatpush1.msra.mxu0 %v215
    %228 = vmatprep.subr.mxu0 0.0
    %229 = vmatpush1.msra.mxu0 0.0
    %230 = vmatprep.subr.mxu0 0.0
    %231 = vmatpush1.msra.mxu0 0.0
    %232 = vmatprep.subr.mxu0 0.0
    %233 = vmatpush1.msra.mxu0 0.0
    %234 = vmatprep.subr.mxu0 0.0
    %235 = vmatpush1.msra.mxu0 0.0
    %236 = vmatprep.subr.mxu0 0.0
    %237 = vmatpush1.msra.mxu0 0.0
    %238 = vmatprep.subr.mxu0 0.0
    %239 = vmatpush1.msra.mxu0 0.0
    %240 = vmatprep.subr.mxu0 0.0
    %241 = vmatpush1.msra.mxu0 0.0
    %242 = vmatprep.subr.mxu0 0.0
    %243 = vmatpush1.msra.mxu0 0.0
    %244 = vmatprep.subr.mxu0 0.0
    %245 = vmatpush1.msra.mxu0 0.0
    %246 = vmatprep.subr.mxu0 0.0
    %247 = vmatpush1.msra.mxu0 0.0
    %248 = vmatprep.subr.mxu0 0.0
    %249 = vmatpush1.msra.mxu0 0.0
    %250 = vmatprep.subr.mxu0 0.0
    %251 = vmatpush1.msra.mxu0 0.0
    %252 = vmatprep.subr.mxu0 0.0
    %253 = vmatpush1.msra.mxu0 0.0
    %254 = vmatprep.subr.mxu0 0.0
    %255 = vmatpush1.msra.mxu0 0.0
    %256 = vmatprep.subr.mxu0 0.0
    %257 = vmatpush1.msra.mxu0 0.0
    %258 = vmatprep.subr.mxu0 0.0
    %259 = vmatpush1.msra.mxu0 0.0
    %260 = vmatprep.subr.mxu0 0.0
    %261 = vmatpush1.msra.mxu0 0.0
    %262 = vmatprep.subr.mxu0 0.0
    %263 = vmatpush1.msra.mxu0 0.0
    %264 = vmatprep.subr.mxu0 0.0
    %265 = vmatpush1.msra.mxu0 0.0
    %266 = vmatprep.subr.mxu0 0.0
    %267 = vmatpush1.msra.mxu0 0.0
    %268 = vmatprep.subr.mxu0 0.0
    %269 = vmatpush1.msra.mxu0 0.0
    %270 = vmatprep.subr.mxu0 0.0
    %271 = vmatpush1.msra.mxu0 0.0
    %272 = vmatprep.subr.mxu0 0.0
    %273 = vmatpush1.msra.mxu0 0.0
    %274 = vmatprep.subr.mxu0 0.0
    %275 = vmatpush1.msra.mxu0 0.0
    %276 = vmatprep.subr.mxu0 0.0
    %277 = vmatpush1.msra.mxu0 0.0
    %278 = vmatprep.subr.mxu0 0.0
    %279 = vmatpush1.msra.mxu0 0.0
    %280 = vmatprep.subr.mxu0 0.0
    %281 = vmatpush1.msra.mxu0 0.0
    %282 = vmatprep.subr.mxu0 0.0
    %283 = vmatpush1.msra.mxu0 0.0
    %284 = vmatprep.mubr.f32.mxu0 0.0
    %285 = vmatmul.mubr.f32.gmra.mrb[0].mxu0 %v120
    %v286 = vpop.f32.mrb[0].mxu0
    %v287 = vadd.f32 %v203, %v286
    %v288 = vpop.f32.mrb[0].mxu0
    %289 = vmatprep.mubr.f32.mxu0 0.0
    %290 = vmatmul.mubr.f32.gmra.mrb[0].mxu0 %v123
    %v291 = vpop.f32.mrb[0].mxu0
    %v292 = vadd.f32 %v203, %v291
    %v293 = vpop.f32.mrb[0].mxu0
    %294 = vdwg.mxu0
    %v295 = vlaneseq
    %v296 = vshrl.u32 %v295, 7
    %v297 = vsub.s32 0, %v296
    %v298 = vrot.slane %v114, %v297
    %299 = vrot.lane.b32.xlu0 %v108, 64
    %v300 = vpop.permute.xlu0 %299
    %301 = vrot.lane.b32.xlu0 %v109, 64
    %v302 = vpop.permute.xlu0 %301
    %303 = vrot.lane.b32.xlu0 %v110, 64
    %v304 = vpop.permute.xlu0 %303
    %305 = vrot.lane.b32.xlu0 %v111, 64
    %v306 = vpop.permute.xlu0 %305
    %311 = vmatprep.subr.mxu0 0.0
    %312 = vmatpush1.msra.mxu0 %v300
    %313 = vmatprep.subr.mxu0 0.0
    %314 = vmatpush1.msra.mxu0 %v302
    %315 = vmatprep.subr.mxu0 0.0
    %316 = vmatpush1.msra.mxu0 %v304
    %317 = vmatprep.subr.mxu0 0.0
    %318 = vmatpush1.msra.mxu0 %v306
    %319 = vmatprep.subr.mxu0 0.0
    %320 = vmatpush1.msra.mxu0 0.0
    %321 = vmatprep.subr.mxu0 0.0
    %322 = vmatpush1.msra.mxu0 0.0
    %323 = vmatprep.subr.mxu0 0.0
    %324 = vmatpush1.msra.mxu0 0.0
    %325 = vmatprep.subr.mxu0 0.0
    %326 = vmatpush1.msra.mxu0 0.0
    %327 = vmatprep.subr.mxu0 0.0
    %328 = vmatpush1.msra.mxu0 0.0
    %329 = vmatprep.subr.mxu0 0.0
    %330 = vmatpush1.msra.mxu0 0.0
    %331 = vmatprep.subr.mxu0 0.0
    %332 = vmatpush1.msra.mxu0 0.0
    %333 = vmatprep.subr.mxu0 0.0
    %334 = vmatpush1.msra.mxu0 0.0
    %335 = vmatprep.subr.mxu0 0.0
    %336 = vmatpush1.msra.mxu0 0.0
    %337 = vmatprep.subr.mxu0 0.0
    %338 = vmatpush1.msra.mxu0 0.0
    %339 = vmatprep.subr.mxu0 0.0
    %340 = vmatpush1.msra.mxu0 0.0
    %341 = vmatprep.subr.mxu0 0.0
    %342 = vmatpush1.msra.mxu0 0.0
    %343 = vmatprep.subr.mxu0 0.0
    %344 = vmatpush1.msra.mxu0 0.0
    %345 = vmatprep.subr.mxu0 0.0
    %346 = vmatpush1.msra.mxu0 0.0
    %347 = vmatprep.subr.mxu0 0.0
    %348 = vmatpush1.msra.mxu0 0.0
    %349 = vmatprep.subr.mxu0 0.0
    %350 = vmatpush1.msra.mxu0 0.0
    %351 = vmatprep.subr.mxu0 0.0
    %352 = vmatpush1.msra.mxu0 0.0
    %353 = vmatprep.subr.mxu0 0.0
    %354 = vmatpush1.msra.mxu0 0.0
    %355 = vmatprep.subr.mxu0 0.0
    %356 = vmatpush1.msra.mxu0 0.0
    %357 = vmatprep.subr.mxu0 0.0
    %358 = vmatpush1.msra.mxu0 0.0
    %359 = vmatprep.subr.mxu0 0.0
    %360 = vmatpush1.msra.mxu0 0.0
    %361 = vmatprep.subr.mxu0 0.0
    %362 = vmatpush1.msra.mxu0 0.0
    %363 = vmatprep.subr.mxu0 0.0
    %364 = vmatpush1.msra.mxu0 0.0
    %365 = vmatprep.subr.mxu0 0.0
    %366 = vmatpush1.msra.mxu0 0.0
    %367 = vmatprep.subr.mxu0 0.0
    %368 = vmatpush1.msra.mxu0 0.0
    %369 = vmatprep.subr.mxu0 0.0
    %370 = vmatpush1.msra.mxu0 0.0
    %371 = vmatprep.subr.mxu0 0.0
    %372 = vmatpush1.msra.mxu0 0.0
    %373 = vmatprep.subr.mxu0 0.0
    %374 = vmatpush1.msra.mxu0 0.0
    %375 = vmatprep.mubr.f32.mxu0 0.0
    %376 = vmatmul.mubr.f32.gmra.mrb[0].mxu0 %v120
    %v377 = vpop.f32.mrb[0].mxu0
    %v378 = vadd.f32 %v298, %v377
    %v379 = vpop.f32.mrb[0].mxu0
    %380 = vmatprep.mubr.f32.mxu0 0.0
    %381 = vmatmul.mubr.f32.gmra.mrb[0].mxu0 %v123
    %v382 = vpop.f32.mrb[0].mxu0
    %v383 = vadd.f32 %v298, %v382
    %v384 = vpop.f32.mrb[0].mxu0
    %385 = vdwg.mxu0
    %vm386 = vcmask 64512
    %v388 = vsel %vm386, %v192, 0
    %v391 = vsel %vm386, %v197, 0
    %v394 = vsel %vm386, %v287, 0
    %v397 = vsel %vm386, %v292, 0
    %399 = vmatprep.subr.mxu0 0.0
    %400 = vmatpush1.xpose.msra.mxu0 %v394
    %401 = vmatprep.subr.mxu0 0.0
    %402 = vmatpush1.xpose.msra.mxu0 %v397
    %403 = vmatprep.subr.mxu0 0.0
    %404 = vmatpush1.xpose.msra.mxu0 0.0
    %405 = vmatprep.subr.mxu0 0.0
    %406 = vmatpush1.xpose.msra.mxu0 0.0
    %407 = vmatprep.subr.mxu0 0.0
    %408 = vmatpush1.xpose.msra.mxu0 0.0
    %409 = vmatprep.subr.mxu0 0.0
    %410 = vmatpush1.xpose.msra.mxu0 0.0
    %411 = vmatprep.subr.mxu0 0.0
    %412 = vmatpush1.xpose.msra.mxu0 0.0
    %413 = vmatprep.subr.mxu0 0.0
    %414 = vmatpush1.xpose.msra.mxu0 0.0
    %415 = vmatprep.subr.mxu0 0.0
    %416 = vmatpush1.xpose.msra.mxu0 0.0
    %417 = vmatprep.subr.mxu0 0.0
    %418 = vmatpush1.xpose.msra.mxu0 0.0
    %419 = vmatprep.subr.mxu0 0.0
    %420 = vmatpush1.xpose.msra.mxu0 0.0
    %421 = vmatprep.subr.mxu0 0.0
    %422 = vmatpush1.xpose.msra.mxu0 0.0
    %423 = vmatprep.subr.mxu0 0.0
    %424 = vmatpush1.xpose.msra.mxu0 0.0
    %425 = vmatprep.subr.mxu0 0.0
    %426 = vmatpush1.xpose.msra.mxu0 0.0
    %427 = vmatprep.subr.mxu0 0.0
    %428 = vmatpush1.xpose.msra.mxu0 0.0
    %429 = vmatprep.subr.mxu0 0.0
    %430 = vmatpush1.xpose.msra.mxu0 0.0
    %431 = vmatprep.subr.mxu0 0.0
    %432 = vmatpush1.xpose.msra.mxu0 0.0
    %433 = vmatprep.subr.mxu0 0.0
    %434 = vmatpush1.xpose.msra.mxu0 0.0
    %435 = vmatprep.subr.mxu0 0.0
    %436 = vmatpush1.xpose.msra.mxu0 0.0
    %437 = vmatprep.subr.mxu0 0.0
    %438 = vmatpush1.xpose.msra.mxu0 0.0
    %439 = vmatprep.subr.mxu0 0.0
    %440 = vmatpush1.xpose.msra.mxu0 0.0
    %441 = vmatprep.subr.mxu0 0.0
    %442 = vmatpush1.xpose.msra.mxu0 0.0
    %443 = vmatprep.subr.mxu0 0.0
    %444 = vmatpush1.xpose.msra.mxu0 0.0
    %445 = vmatprep.subr.mxu0 0.0
    %446 = vmatpush1.xpose.msra.mxu0 0.0
    %447 = vmatprep.subr.mxu0 0.0
    %448 = vmatpush1.xpose.msra.mxu0 0.0
    %449 = vmatprep.subr.mxu0 0.0
    %450 = vmatpush1.xpose.msra.mxu0 0.0
    %451 = vmatprep.subr.mxu0 0.0
    %452 = vmatpush1.xpose.msra.mxu0 0.0
    %453 = vmatprep.subr.mxu0 0.0
    %454 = vmatpush1.xpose.msra.mxu0 0.0
    %455 = vmatprep.subr.mxu0 0.0
    %456 = vmatpush1.xpose.msra.mxu0 0.0
    %457 = vmatprep.subr.mxu0 0.0
    %458 = vmatpush1.xpose.msra.mxu0 0.0
    %459 = vmatprep.subr.mxu0 0.0
    %460 = vmatpush1.xpose.msra.mxu0 0.0
    %461 = vmatprep.subr.mxu0 0.0
    %462 = vmatpush1.xpose.msra.mxu0 0.0
    %463 = vmatprep.mubr.f32.mxu0 0.0
    %464 = vmatmul.mubr.f32.gmra.mrb[0].mxu0 %v388
    %v465 = vpop.f32.mrb[0].mxu0
    %v466 = vadd.f32 0.0, %v465
    %v467 = vpop.f32.mrb[0].mxu0
    %468 = vmatprep.mubr.f32.mxu0 0.0
    %469 = vmatmul.mubr.f32.gmra.mrb[0].mxu0 %v391
    %v470 = vpop.f32.mrb[0].mxu0
    %v471 = vadd.f32 0.0, %v470
    %v472 = vpop.f32.mrb[0].mxu0
    %473 = vdwg.mxu0
    %v474 = vmul.f32 %v466, 0.35355338
    %v475 = vmul.f32 %v471, 0.35355338
    %v476 = vadd.f32 %v474, %v106
    %v477 = vadd.f32 %v475, %v107
    %vm478 = vcmask 130048
    %v479 = vsel %vm478, %v476, -inf
    %480 = vmax.xlane.f32.xlu0 %v479
    %v481 = vpop.xlane.xlu0 %480
    %v482 = vsel %vm478, %v477, -inf
    %483 = vmax.xlane.f32.xlu0 %v482
    %v484 = vpop.xlane.xlu0 %483
    %v485 = vsub.f32 %v476, %v481
    %v486 = vsub.f32 %v477, %v484
    %v487 = vmul.f32 %v485, 1.442695
    %v488 = vpow.pop %v487
    %v489 = vmul.f32 %v486, 1.442695
    %v490 = vpow.pop %v489
    %v491 = vsel %vm478, %v488, 0.0
    %492 = vadd.xlane.f32.xlu0 %v491
    %v493 = vpop.xlane.xlu0 %492
    %v494 = vsel %vm478, %v490, 0.0
    %495 = vadd.xlane.f32.xlu0 %v494
    %v496 = vpop.xlane.xlu0 %495
    %v497 = vrcp.pop %v493
    %v498 = vrcp.pop %v496
    %v499 = vmul.f32 %v488, %v497
    %v500 = vmul.f32 %v490, %v498
    %v502 = vsel %vm478, %v499, 0
    %v505 = vsel %vm478, %v500, 0
    %507 = vmatprep.subr.mxu0 0.0
    %508 = vmatpush1.msra.mxu0 %v378
    %509 = vmatprep.subr.mxu0 0.0
    %510 = vmatpush1.msra.mxu0 %v383
    %511 = vmatprep.subr.mxu0 0.0
    %512 = vmatpush1.msra.mxu0 0.0
    %513 = vmatprep.subr.mxu0 0.0
    %514 = vmatpush1.msra.mxu0 0.0
    %515 = vmatprep.subr.mxu0 0.0
    %516 = vmatpush1.msra.mxu0 0.0
    %517 = vmatprep.subr.mxu0 0.0
    %518 = vmatpush1.msra.mxu0 0.0
    %519 = vmatprep.subr.mxu0 0.0
    %520 = vmatpush1.msra.mxu0 0.0
    %521 = vmatprep.subr.mxu0 0.0
    %522 = vmatpush1.msra.mxu0 0.0
    %523 = vmatprep.subr.mxu0 0.0
    %524 = vmatpush1.msra.mxu0 0.0
    %525 = vmatprep.subr.mxu0 0.0
    %526 = vmatpush1.msra.mxu0 0.0
    %527 = vmatprep.subr.mxu0 0.0
    %528 = vmatpush1.msra.mxu0 0.0
    %529 = vmatprep.subr.mxu0 0.0
    %530 = vmatpush1.msra.mxu0 0.0
    %531 = vmatprep.subr.mxu0 0.0
    %532 = vmatpush1.msra.mxu0 0.0
    %533 = vmatprep.subr.mxu0 0.0
    %534 = vmatpush1.msra.mxu0 0.0
    %535 = vmatprep.subr.mxu0 0.0
    %536 = vmatpush1.msra.mxu0 0.0
    %537 = vmatprep.subr.mxu0 0.0
    %538 = vmatpush1.msra.mxu0 0.0
    %539 = vmatprep.subr.mxu0 0.0
    %540 = vmatpush1.msra.mxu0 0.0
    %541 = vmatprep.subr.mxu0 0.0
    %542 = vmatpush1.msra.mxu0 0.0
    %543 = vmatprep.subr.mxu0 0.0
    %544 = vmatpush1.msra.mxu0 0.0
    %545 = vmatprep.subr.mxu0 0.0
    %546 = vmatpush1.msra.mxu0 0.0
    %547 = vmatprep.subr.mxu0 0.0
    %548 = vmatpush1.msra.mxu0 0.0
    %549 = vmatprep.subr.mxu0 0.0
    %550 = vmatpush1.msra.mxu0 0.0
    %551 = vmatprep.subr.mxu0 0.0
    %552 = vmatpush1.msra.mxu0 0.0
    %553 = vmatprep.subr.mxu0 0.0
    %554 = vmatpush1.msra.mxu0 0.0
    %555 = vmatprep.subr.mxu0 0.0
    %556 = vmatpush1.msra.mxu0 0.0
    %557 = vmatprep.subr.mxu0 0.0
    %558 = vmatpush1.msra.mxu0 0.0
    %559 = vmatprep.subr.mxu0 0.0
    %560 = vmatpush1.msra.mxu0 0.0
    %561 = vmatprep.subr.mxu0 0.0
    %562 = vmatpush1.msra.mxu0 0.0
    %563 = vmatprep.subr.mxu0 0.0
    %564 = vmatpush1.msra.mxu0 0.0
    %565 = vmatprep.subr.mxu0 0.0
    %566 = vmatpush1.msra.mxu0 0.0
    %567 = vmatprep.subr.mxu0 0.0
    %568 = vmatpush1.msra.mxu0 0.0
    %569 = vmatprep.subr.mxu0 0.0
    %570 = vmatpush1.msra.mxu0 0.0
    %571 = vmatprep.mubr.f32.mxu0 0.0
    %572 = vmatmul.mubr.f32.gmra.mrb[0].mxu0 %v502
    %v573 = vpop.f32.mrb[0].mxu0
    %v574 = vadd.f32 0.0, %v573
    %v575 = vpop.f32.mrb[0].mxu0
    %576 = vmatprep.mubr.f32.mxu0 0.0
    %577 = vmatmul.mubr.f32.gmra.mrb[0].mxu0 %v505
    %v578 = vpop.f32.mrb[0].mxu0
    %v579 = vadd.f32 0.0, %v578
    %v580 = vpop.f32.mrb[0].mxu0
    %581 = vdwg.mxu0
    %v582 = vld [vmem:[%s2] sm:$0xff]
    %583 = vrot.lane.b32.xlu0 %v108, 120
    %v584 = vpop.permute.xlu0 %583
    %585 = vrot.lane.b32.xlu0 %v109, 120
    %v586 = vpop.permute.xlu0 %585
    %587 = vrot.lane.b32.xlu0 %v110, 120
    %v588 = vpop.permute.xlu0 %587
    %589 = vrot.lane.b32.xlu0 %v111, 120
    %v590 = vpop.permute.xlu0 %589
    %596 = vrot.lane.b32.xlu0 %v118, 120
    %v597 = vpop.permute.xlu0 %596
    %599 = vmatprep.subr.mxu0 0.0
    %600 = vmatpush1.msra.mxu0 %v584
    %601 = vmatprep.subr.mxu0 0.0
    %602 = vmatpush1.msra.mxu0 %v586
    %603 = vmatprep.subr.mxu0 0.0
    %604 = vmatpush1.msra.mxu0 %v588
    %605 = vmatprep.subr.mxu0 0.0
    %606 = vmatpush1.msra.mxu0 %v590
    %607 = vmatprep.subr.mxu0 0.0
    %608 = vmatpush1.msra.mxu0 0.0
    %609 = vmatprep.subr.mxu0 0.0
    %610 = vmatpush1.msra.mxu0 0.0
    %611 = vmatprep.subr.mxu0 0.0
    %612 = vmatpush1.msra.mxu0 0.0
    %613 = vmatprep.subr.mxu0 0.0
    %614 = vmatpush1.msra.mxu0 0.0
    %615 = vmatprep.subr.mxu0 0.0
    %616 = vmatpush1.msra.mxu0 0.0
    %617 = vmatprep.subr.mxu0 0.0
    %618 = vmatpush1.msra.mxu0 0.0
    %619 = vmatprep.subr.mxu0 0.0
    %620 = vmatpush1.msra.mxu0 0.0
    %621 = vmatprep.subr.mxu0 0.0
    %622 = vmatpush1.msra.mxu0 0.0
    %623 = vmatprep.subr.mxu0 0.0
    %624 = vmatpush1.msra.mxu0 0.0
    %625 = vmatprep.subr.mxu0 0.0
    %626 = vmatpush1.msra.mxu0 0.0
    %627 = vmatprep.subr.mxu0 0.0
    %628 = vmatpush1.msra.mxu0 0.0
    %629 = vmatprep.subr.mxu0 0.0
    %630 = vmatpush1.msra.mxu0 0.0
    %631 = vmatprep.subr.mxu0 0.0
    %632 = vmatpush1.msra.mxu0 0.0
    %633 = vmatprep.subr.mxu0 0.0
    %634 = vmatpush1.msra.mxu0 0.0
    %635 = vmatprep.subr.mxu0 0.0
    %636 = vmatpush1.msra.mxu0 0.0
    %637 = vmatprep.subr.mxu0 0.0
    %638 = vmatpush1.msra.mxu0 0.0
    %639 = vmatprep.subr.mxu0 0.0
    %640 = vmatpush1.msra.mxu0 0.0
    %641 = vmatprep.subr.mxu0 0.0
    %642 = vmatpush1.msra.mxu0 0.0
    %643 = vmatprep.subr.mxu0 0.0
    %644 = vmatpush1.msra.mxu0 0.0
    %645 = vmatprep.subr.mxu0 0.0
    %646 = vmatpush1.msra.mxu0 0.0
    %647 = vmatprep.subr.mxu0 0.0
    %648 = vmatpush1.msra.mxu0 0.0
    %649 = vmatprep.subr.mxu0 0.0
    %650 = vmatpush1.msra.mxu0 0.0
    %651 = vmatprep.subr.mxu0 0.0
    %652 = vmatpush1.msra.mxu0 0.0
    %653 = vmatprep.subr.mxu0 0.0
    %654 = vmatpush1.msra.mxu0 0.0
    %655 = vmatprep.subr.mxu0 0.0
    %656 = vmatpush1.msra.mxu0 0.0
    %657 = vmatprep.subr.mxu0 0.0
    %658 = vmatpush1.msra.mxu0 0.0
    %659 = vmatprep.subr.mxu0 0.0
    %660 = vmatpush1.msra.mxu0 0.0
    %661 = vmatprep.subr.mxu0 0.0
    %662 = vmatpush1.msra.mxu0 0.0
    %663 = vmatprep.mubr.f32.mxu0 0.0
    %664 = vmatmul.mubr.f32.gmra.mrb[0].mxu0 %v120
    %v665 = vpop.f32.mrb[0].mxu0
    %v666 = vadd.f32 %v597, %v665
    %v667 = vpop.f32.mrb[0].mxu0
    %668 = vmatprep.mubr.f32.mxu0 0.0
    %669 = vmatmul.mubr.f32.gmra.mrb[0].mxu0 %v123
    %v670 = vpop.f32.mrb[0].mxu0
    %v671 = vadd.f32 %v597, %v670
    %v672 = vpop.f32.mrb[0].mxu0
    %673 = vdwg.mxu0
    %674 = vrot.lane.b32.xlu0 %v108, 88
    %v675 = vpop.permute.xlu0 %674
    %676 = vrot.lane.b32.xlu0 %v109, 88
    %v677 = vpop.permute.xlu0 %676
    %678 = vrot.lane.b32.xlu0 %v110, 88
    %v679 = vpop.permute.xlu0 %678
    %680 = vrot.lane.b32.xlu0 %v111, 88
    %v681 = vpop.permute.xlu0 %680
    %687 = vrot.lane.b32.xlu0 %v203, 120
    %v688 = vpop.permute.xlu0 %687
    %690 = vmatprep.subr.mxu0 0.0
    %691 = vmatpush1.msra.mxu0 %v675
    %692 = vmatprep.subr.mxu0 0.0
    %693 = vmatpush1.msra.mxu0 %v677
    %694 = vmatprep.subr.mxu0 0.0
    %695 = vmatpush1.msra.mxu0 %v679
    %696 = vmatprep.subr.mxu0 0.0
    %697 = vmatpush1.msra.mxu0 %v681
    %698 = vmatprep.subr.mxu0 0.0
    %699 = vmatpush1.msra.mxu0 0.0
    %700 = vmatprep.subr.mxu0 0.0
    %701 = vmatpush1.msra.mxu0 0.0
    %702 = vmatprep.subr.mxu0 0.0
    %703 = vmatpush1.msra.mxu0 0.0
    %704 = vmatprep.subr.mxu0 0.0
    %705 = vmatpush1.msra.mxu0 0.0
    %706 = vmatprep.subr.mxu0 0.0
    %707 = vmatpush1.msra.mxu0 0.0
    %708 = vmatprep.subr.mxu0 0.0
    %709 = vmatpush1.msra.mxu0 0.0
    %710 = vmatprep.subr.mxu0 0.0
    %711 = vmatpush1.msra.mxu0 0.0
    %712 = vmatprep.subr.mxu0 0.0
    %713 = vmatpush1.msra.mxu0 0.0
    %714 = vmatprep.subr.mxu0 0.0
    %715 = vmatpush1.msra.mxu0 0.0
    %716 = vmatprep.subr.mxu0 0.0
    %717 = vmatpush1.msra.mxu0 0.0
    %718 = vmatprep.subr.mxu0 0.0
    %719 = vmatpush1.msra.mxu0 0.0
    %720 = vmatprep.subr.mxu0 0.0
    %721 = vmatpush1.msra.mxu0 0.0
    %722 = vmatprep.subr.mxu0 0.0
    %723 = vmatpush1.msra.mxu0 0.0
    %724 = vmatprep.subr.mxu0 0.0
    %725 = vmatpush1.msra.mxu0 0.0
    %726 = vmatprep.subr.mxu0 0.0
    %727 = vmatpush1.msra.mxu0 0.0
    %728 = vmatprep.subr.mxu0 0.0
    %729 = vmatpush1.msra.mxu0 0.0
    %730 = vmatprep.subr.mxu0 0.0
    %731 = vmatpush1.msra.mxu0 0.0
    %732 = vmatprep.subr.mxu0 0.0
    %733 = vmatpush1.msra.mxu0 0.0
    %734 = vmatprep.subr.mxu0 0.0
    %735 = vmatpush1.msra.mxu0 0.0
    %736 = vmatprep.subr.mxu0 0.0
    %737 = vmatpush1.msra.mxu0 0.0
    %738 = vmatprep.subr.mxu0 0.0
    %739 = vmatpush1.msra.mxu0 0.0
    %740 = vmatprep.subr.mxu0 0.0
    %741 = vmatpush1.msra.mxu0 0.0
    %742 = vmatprep.subr.mxu0 0.0
    %743 = vmatpush1.msra.mxu0 0.0
    %744 = vmatprep.subr.mxu0 0.0
    %745 = vmatpush1.msra.mxu0 0.0
    %746 = vmatprep.subr.mxu0 0.0
    %747 = vmatpush1.msra.mxu0 0.0
    %748 = vmatprep.subr.mxu0 0.0
    %749 = vmatpush1.msra.mxu0 0.0
    %750 = vmatprep.subr.mxu0 0.0
    %751 = vmatpush1.msra.mxu0 0.0
    %752 = vmatprep.subr.mxu0 0.0
    %753 = vmatpush1.msra.mxu0 0.0
    %754 = vmatprep.mubr.f32.mxu0 0.0
    %755 = vmatmul.mubr.f32.gmra.mrb[0].mxu0 %v120
    %v756 = vpop.f32.mrb[0].mxu0
    %v757 = vadd.f32 %v688, %v756
    %v758 = vpop.f32.mrb[0].mxu0
    %759 = vmatprep.mubr.f32.mxu0 0.0
    %760 = vmatmul.mubr.f32.gmra.mrb[0].mxu0 %v123
    %v761 = vpop.f32.mrb[0].mxu0
    %v762 = vadd.f32 %v688, %v761
    %v763 = vpop.f32.mrb[0].mxu0
    %764 = vdwg.mxu0
    %765 = vrot.lane.b32.xlu0 %v108, 56
    %v766 = vpop.permute.xlu0 %765
    %767 = vrot.lane.b32.xlu0 %v109, 56
    %v768 = vpop.permute.xlu0 %767
    %769 = vrot.lane.b32.xlu0 %v110, 56
    %v770 = vpop.permute.xlu0 %769
    %771 = vrot.lane.b32.xlu0 %v111, 56
    %v772 = vpop.permute.xlu0 %771
    %778 = vrot.lane.b32.xlu0 %v298, 120
    %v779 = vpop.permute.xlu0 %778
    %781 = vmatprep.subr.mxu0 0.0
    %782 = vmatpush1.msra.mxu0 %v766
    %783 = vmatprep.subr.mxu0 0.0
    %784 = vmatpush1.msra.mxu0 %v768
    %785 = vmatprep.subr.mxu0 0.0
    %786 = vmatpush1.msra.mxu0 %v770
    %787 = vmatprep.subr.mxu0 0.0
    %788 = vmatpush1.msra.mxu0 %v772
    %789 = vmatprep.subr.mxu0 0.0
    %790 = vmatpush1.msra.mxu0 0.0
    %791 = vmatprep.subr.mxu0 0.0
    %792 = vmatpush1.msra.mxu0 0.0
    %793 = vmatprep.subr.mxu0 0.0
    %794 = vmatpush1.msra.mxu0 0.0
    %795 = vmatprep.subr.mxu0 0.0
    %796 = vmatpush1.msra.mxu0 0.0
    %797 = vmatprep.subr.mxu0 0.0
    %798 = vmatpush1.msra.mxu0 0.0
    %799 = vmatprep.subr.mxu0 0.0
    %800 = vmatpush1.msra.mxu0 0.0
    %801 = vmatprep.subr.mxu0 0.0
    %802 = vmatpush1.msra.mxu0 0.0
    %803 = vmatprep.subr.mxu0 0.0
    %804 = vmatpush1.msra.mxu0 0.0
    %805 = vmatprep.subr.mxu0 0.0
    %806 = vmatpush1.msra.mxu0 0.0
    %807 = vmatprep.subr.mxu0 0.0
    %808 = vmatpush1.msra.mxu0 0.0
    %809 = vmatprep.subr.mxu0 0.0
    %810 = vmatpush1.msra.mxu0 0.0
    %811 = vmatprep.subr.mxu0 0.0
    %812 = vmatpush1.msra.mxu0 0.0
    %813 = vmatprep.subr.mxu0 0.0
    %814 = vmatpush1.msra.mxu0 0.0
    %815 = vmatprep.subr.mxu0 0.0
    %816 = vmatpush1.msra.mxu0 0.0
    %817 = vmatprep.subr.mxu0 0.0
    %818 = vmatpush1.msra.mxu0 0.0
    %819 = vmatprep.subr.mxu0 0.0
    %820 = vmatpush1.msra.mxu0 0.0
    %821 = vmatprep.subr.mxu0 0.0
    %822 = vmatpush1.msra.mxu0 0.0
    %823 = vmatprep.subr.mxu0 0.0
    %824 = vmatpush1.msra.mxu0 0.0
    %825 = vmatprep.subr.mxu0 0.0
    %826 = vmatpush1.msra.mxu0 0.0
    %827 = vmatprep.subr.mxu0 0.0
    %828 = vmatpush1.msra.mxu0 0.0
    %829 = vmatprep.subr.mxu0 0.0
    %830 = vmatpush1.msra.mxu0 0.0
    %831 = vmatprep.subr.mxu0 0.0
    %832 = vmatpush1.msra.mxu0 0.0
    %833 = vmatprep.subr.mxu0 0.0
    %834 = vmatpush1.msra.mxu0 0.0
    %835 = vmatprep.subr.mxu0 0.0
    %836 = vmatpush1.msra.mxu0 0.0
    %837 = vmatprep.subr.mxu0 0.0
    %838 = vmatpush1.msra.mxu0 0.0
    %839 = vmatprep.subr.mxu0 0.0
    %840 = vmatpush1.msra.mxu0 0.0
    %841 = vmatprep.subr.mxu0 0.0
    %842 = vmatpush1.msra.mxu0 0.0
    %843 = vmatprep.subr.mxu0 0.0
    %844 = vmatpush1.msra.mxu0 0.0
    %845 = vmatprep.mubr.f32.mxu0 0.0
    %846 = vmatmul.mubr.f32.gmra.mrb[0].mxu0 %v120
    %v847 = vpop.f32.mrb[0].mxu0
    %v848 = vadd.f32 %v779, %v847
    %v849 = vpop.f32.mrb[0].mxu0
    %850 = vmatprep.mubr.f32.mxu0 0.0
    %851 = vmatmul.mubr.f32.gmra.mrb[0].mxu0 %v123
    %v852 = vpop.f32.mrb[0].mxu0
    %v853 = vadd.f32 %v779, %v852
    %v854 = vpop.f32.mrb[0].mxu0
    %855 = vdwg.mxu0
    %v857 = vsel %vm386, %v666, 0
    %v860 = vsel %vm386, %v671, 0
    %v863 = vsel %vm386, %v757, 0
    %v866 = vsel %vm386, %v762, 0
    %868 = vmatprep.subr.mxu0 0.0
    %869 = vmatpush1.xpose.msra.mxu0 %v863
    %870 = vmatprep.subr.mxu0 0.0
    %871 = vmatpush1.xpose.msra.mxu0 %v866
    %872 = vmatprep.subr.mxu0 0.0
    %873 = vmatpush1.xpose.msra.mxu0 0.0
    %874 = vmatprep.subr.mxu0 0.0
    %875 = vmatpush1.xpose.msra.mxu0 0.0
    %876 = vmatprep.subr.mxu0 0.0
    %877 = vmatpush1.xpose.msra.mxu0 0.0
    %878 = vmatprep.subr.mxu0 0.0
    %879 = vmatpush1.xpose.msra.mxu0 0.0
    %880 = vmatprep.subr.mxu0 0.0
    %881 = vmatpush1.xpose.msra.mxu0 0.0
    %882 = vmatprep.subr.mxu0 0.0
    %883 = vmatpush1.xpose.msra.mxu0 0.0
    %884 = vmatprep.subr.mxu0 0.0
    %885 = vmatpush1.xpose.msra.mxu0 0.0
    %886 = vmatprep.subr.mxu0 0.0
    %887 = vmatpush1.xpose.msra.mxu0 0.0
    %888 = vmatprep.subr.mxu0 0.0
    %889 = vmatpush1.xpose.msra.mxu0 0.0
    %890 = vmatprep.subr.mxu0 0.0
    %891 = vmatpush1.xpose.msra.mxu0 0.0
    %892 = vmatprep.subr.mxu0 0.0
    %893 = vmatpush1.xpose.msra.mxu0 0.0
    %894 = vmatprep.subr.mxu0 0.0
    %895 = vmatpush1.xpose.msra.mxu0 0.0
    %896 = vmatprep.subr.mxu0 0.0
    %897 = vmatpush1.xpose.msra.mxu0 0.0
    %898 = vmatprep.subr.mxu0 0.0
    %899 = vmatpush1.xpose.msra.mxu0 0.0
    %900 = vmatprep.subr.mxu0 0.0
    %901 = vmatpush1.xpose.msra.mxu0 0.0
    %902 = vmatprep.subr.mxu0 0.0
    %903 = vmatpush1.xpose.msra.mxu0 0.0
    %904 = vmatprep.subr.mxu0 0.0
    %905 = vmatpush1.xpose.msra.mxu0 0.0
    %906 = vmatprep.subr.mxu0 0.0
    %907 = vmatpush1.xpose.msra.mxu0 0.0
    %908 = vmatprep.subr.mxu0 0.0
    %909 = vmatpush1.xpose.msra.mxu0 0.0
    %910 = vmatprep.subr.mxu0 0.0
    %911 = vmatpush1.xpose.msra.mxu0 0.0
    %912 = vmatprep.subr.mxu0 0.0
    %913 = vmatpush1.xpose.msra.mxu0 0.0
    %914 = vmatprep.subr.mxu0 0.0
    %915 = vmatpush1.xpose.msra.mxu0 0.0
    %916 = vmatprep.subr.mxu0 0.0
    %917 = vmatpush1.xpose.msra.mxu0 0.0
    %918 = vmatprep.subr.mxu0 0.0
    %919 = vmatpush1.xpose.msra.mxu0 0.0
    %920 = vmatprep.subr.mxu0 0.0
    %921 = vmatpush1.xpose.msra.mxu0 0.0
    %922 = vmatprep.subr.mxu0 0.0
    %923 = vmatpush1.xpose.msra.mxu0 0.0
    %924 = vmatprep.subr.mxu0 0.0
    %925 = vmatpush1.xpose.msra.mxu0 0.0
    %926 = vmatprep.subr.mxu0 0.0
    %927 = vmatpush1.xpose.msra.mxu0 0.0
    %928 = vmatprep.subr.mxu0 0.0
    %929 = vmatpush1.xpose.msra.mxu0 0.0
    %930 = vmatprep.subr.mxu0 0.0
    %931 = vmatpush1.xpose.msra.mxu0 0.0
    %932 = vmatprep.mubr.f32.mxu0 0.0
    %933 = vmatmul.mubr.f32.gmra.mrb[0].mxu0 %v857
    %v934 = vpop.f32.mrb[0].mxu0
    %v935 = vadd.f32 0.0, %v934
    %v936 = vpop.f32.mrb[0].mxu0
    %937 = vmatprep.mubr.f32.mxu0 0.0
    %938 = vmatmul.mubr.f32.gmra.mrb[0].mxu0 %v860
    %v939 = vpop.f32.mrb[0].mxu0
    %v940 = vadd.f32 0.0, %v939
    %v941 = vpop.f32.mrb[0].mxu0
    %942 = vdwg.mxu0
    %v943 = vmul.f32 %v935, 0.35355338
    %v944 = vmul.f32 %v940, 0.35355338
    %v945 = vadd.f32 %v943, %v106
    %v946 = vadd.f32 %v944, %v107
    %v947 = vsel %vm478, %v945, -inf
    %948 = vmax.xlane.f32.xlu0 %v947
    %v949 = vpop.xlane.xlu0 %948
    %v950 = vsel %vm478, %v946, -inf
    %951 = vmax.xlane.f32.xlu0 %v950
    %v952 = vpop.xlane.xlu0 %951
    %v953 = vsub.f32 %v945, %v949
    %v954 = vsub.f32 %v946, %v952
    %v955 = vmul.f32 %v953, 1.442695
    %v956 = vpow.pop %v955
    %v957 = vmul.f32 %v954, 1.442695
    %v958 = vpow.pop %v957
    %v959 = vsel %vm478, %v956, 0.0
    %960 = vadd.xlane.f32.xlu0 %v959
    %v961 = vpop.xlane.xlu0 %960
    %v962 = vsel %vm478, %v958, 0.0
    %963 = vadd.xlane.f32.xlu0 %v962
    %v964 = vpop.xlane.xlu0 %963
    %v965 = vrcp.pop %v961
    %v966 = vrcp.pop %v964
    %v967 = vmul.f32 %v956, %v965
    %v968 = vmul.f32 %v958, %v966
    %v970 = vsel %vm478, %v967, 0
    %v973 = vsel %vm478, %v968, 0
    %975 = vmatprep.subr.mxu0 0.0
    %976 = vmatpush1.msra.mxu0 %v848
    %977 = vmatprep.subr.mxu0 0.0
    %978 = vmatpush1.msra.mxu0 %v853
    %979 = vmatprep.subr.mxu0 0.0
    %980 = vmatpush1.msra.mxu0 0.0
    %981 = vmatprep.subr.mxu0 0.0
    %982 = vmatpush1.msra.mxu0 0.0
    %983 = vmatprep.subr.mxu0 0.0
    %984 = vmatpush1.msra.mxu0 0.0
    %985 = vmatprep.subr.mxu0 0.0
    %986 = vmatpush1.msra.mxu0 0.0
    %987 = vmatprep.subr.mxu0 0.0
    %988 = vmatpush1.msra.mxu0 0.0
    %989 = vmatprep.subr.mxu0 0.0
    %990 = vmatpush1.msra.mxu0 0.0
    %991 = vmatprep.subr.mxu0 0.0
    %992 = vmatpush1.msra.mxu0 0.0
    %993 = vmatprep.subr.mxu0 0.0
    %994 = vmatpush1.msra.mxu0 0.0
    %995 = vmatprep.subr.mxu0 0.0
    %996 = vmatpush1.msra.mxu0 0.0
    %997 = vmatprep.subr.mxu0 0.0
    %998 = vmatpush1.msra.mxu0 0.0
    %999 = vmatprep.subr.mxu0 0.0
    %1000 = vmatpush1.msra.mxu0 0.0
    %1001 = vmatprep.subr.mxu0 0.0
    %1002 = vmatpush1.msra.mxu0 0.0
    %1003 = vmatprep.subr.mxu0 0.0
    %1004 = vmatpush1.msra.mxu0 0.0
    %1005 = vmatprep.subr.mxu0 0.0
    %1006 = vmatpush1.msra.mxu0 0.0
    %1007 = vmatprep.subr.mxu0 0.0
    %1008 = vmatpush1.msra.mxu0 0.0
    %1009 = vmatprep.subr.mxu0 0.0
    %1010 = vmatpush1.msra.mxu0 0.0
    %1011 = vmatprep.subr.mxu0 0.0
    %1012 = vmatpush1.msra.mxu0 0.0
    %1013 = vmatprep.subr.mxu0 0.0
    %1014 = vmatpush1.msra.mxu0 0.0
    %1015 = vmatprep.subr.mxu0 0.0
    %1016 = vmatpush1.msra.mxu0 0.0
    %1017 = vmatprep.subr.mxu0 0.0
    %1018 = vmatpush1.msra.mxu0 0.0
    %1019 = vmatprep.subr.mxu0 0.0
    %1020 = vmatpush1.msra.mxu0 0.0
    %1021 = vmatprep.subr.mxu0 0.0
    %1022 = vmatpush1.msra.mxu0 0.0
    %1023 = vmatprep.subr.mxu0 0.0
    %1024 = vmatpush1.msra.mxu0 0.0
    %1025 = vmatprep.subr.mxu0 0.0
    %1026 = vmatpush1.msra.mxu0 0.0
    %1027 = vmatprep.subr.mxu0 0.0
    %1028 = vmatpush1.msra.mxu0 0.0
    %1029 = vmatprep.subr.mxu0 0.0
    %1030 = vmatpush1.msra.mxu0 0.0
    %1031 = vmatprep.subr.mxu0 0.0
    %1032 = vmatpush1.msra.mxu0 0.0
    %1033 = vmatprep.subr.mxu0 0.0
    %1034 = vmatpush1.msra.mxu0 0.0
    %1035 = vmatprep.subr.mxu0 0.0
    %1036 = vmatpush1.msra.mxu0 0.0
    %1037 = vmatprep.subr.mxu0 0.0
    %1038 = vmatpush1.msra.mxu0 0.0
    %1039 = vmatprep.mubr.f32.mxu0 0.0
    %1040 = vmatmul.mubr.f32.gmra.mrb[0].mxu0 %v970
    %v1041 = vpop.f32.mrb[0].mxu0
    %v1042 = vadd.f32 0.0, %v1041
    %v1043 = vpop.f32.mrb[0].mxu0
    %1044 = vmatprep.mubr.f32.mxu0 0.0
    %1045 = vmatmul.mubr.f32.gmra.mrb[0].mxu0 %v973
    %v1046 = vpop.f32.mrb[0].mxu0
    %v1047 = vadd.f32 0.0, %v1046
    %v1048 = vpop.f32.mrb[0].mxu0
    %1049 = vdwg.mxu0
    %v1050 = vld [vmem:[%s2 + $0x18] sm:$0xff]
    %1052 = vrot.lane.b32.xlu0 %v1050, 32
    %v1053 = vpop.permute.xlu0 %1052
    %v1056 = vsel %vm386, %v1042, 0
    %v1059 = vsel %vm386, %v1047, 0
    %1061 = vmatprep.subr.mxu0 0.0
    %1062 = vmatpush1.msra.mxu0 %v1053
    %1063 = vmatprep.subr.mxu0 0.0
    %1064 = vmatpush1.msra.mxu0 0.0
    %1065 = vmatprep.subr.mxu0 0.0
    %1066 = vmatpush1.msra.mxu0 0.0
    %1067 = vmatprep.subr.mxu0 0.0
    %1068 = vmatpush1.msra.mxu0 0.0
    %1069 = vmatprep.subr.mxu0 0.0
    %1070 = vmatpush1.msra.mxu0 0.0
    %1071 = vmatprep.subr.mxu0 0.0
    %1072 = vmatpush1.msra.mxu0 0.0
    %1073 = vmatprep.subr.mxu0 0.0
    %1074 = vmatpush1.msra.mxu0 0.0
    %1075 = vmatprep.subr.mxu0 0.0
    %1076 = vmatpush1.msra.mxu0 0.0
    %1077 = vmatprep.subr.mxu0 0.0
    %1078 = vmatpush1.msra.mxu0 0.0
    %1079 = vmatprep.subr.mxu0 0.0
    %1080 = vmatpush1.msra.mxu0 0.0
    %1081 = vmatprep.subr.mxu0 0.0
    %1082 = vmatpush1.msra.mxu0 0.0
    %1083 = vmatprep.subr.mxu0 0.0
    %1084 = vmatpush1.msra.mxu0 0.0
    %1085 = vmatprep.subr.mxu0 0.0
    %1086 = vmatpush1.msra.mxu0 0.0
    %1087 = vmatprep.subr.mxu0 0.0
    %1088 = vmatpush1.msra.mxu0 0.0
    %1089 = vmatprep.subr.mxu0 0.0
    %1090 = vmatpush1.msra.mxu0 0.0
    %1091 = vmatprep.subr.mxu0 0.0
    %1092 = vmatpush1.msra.mxu0 0.0
    %1093 = vmatprep.subr.mxu0 0.0
    %1094 = vmatpush1.msra.mxu0 0.0
    %1095 = vmatprep.subr.mxu0 0.0
    %1096 = vmatpush1.msra.mxu0 0.0
    %1097 = vmatprep.subr.mxu0 0.0
    %1098 = vmatpush1.msra.mxu0 0.0
    %1099 = vmatprep.subr.mxu0 0.0
    %1100 = vmatpush1.msra.mxu0 0.0
    %1101 = vmatprep.subr.mxu0 0.0
    %1102 = vmatpush1.msra.mxu0 0.0
    %1103 = vmatprep.subr.mxu0 0.0
    %1104 = vmatpush1.msra.mxu0 0.0
    %1105 = vmatprep.subr.mxu0 0.0
    %1106 = vmatpush1.msra.mxu0 0.0
    %1107 = vmatprep.subr.mxu0 0.0
    %1108 = vmatpush1.msra.mxu0 0.0
    %1109 = vmatprep.subr.mxu0 0.0
    %1110 = vmatpush1.msra.mxu0 0.0
    %1111 = vmatprep.subr.mxu0 0.0
    %1112 = vmatpush1.msra.mxu0 0.0
    %1113 = vmatprep.subr.mxu0 0.0
    %1114 = vmatpush1.msra.mxu0 0.0
    %1115 = vmatprep.subr.mxu0 0.0
    %1116 = vmatpush1.msra.mxu0 0.0
    %1117 = vmatprep.subr.mxu0 0.0
    %1118 = vmatpush1.msra.mxu0 0.0
    %1119 = vmatprep.subr.mxu0 0.0
    %1120 = vmatpush1.msra.mxu0 0.0
    %1121 = vmatprep.subr.mxu0 0.0
    %1122 = vmatpush1.msra.mxu0 0.0
    %1123 = vmatprep.subr.mxu0 0.0
    %1124 = vmatpush1.msra.mxu0 0.0
    %1125 = vmatprep.mubr.f32.mxu0 0.0
    %1126 = vmatmul.mubr.f32.gmra.mrb[0].mxu0 %v1056
    %v1127 = vpop.f32.mrb[0].mxu0
    %v1128 = vadd.f32 0.0, %v1127
    %v1129 = vpop.f32.mrb[0].mxu0
    %1130 = vmatprep.mubr.f32.mxu0 0.0
    %1131 = vmatmul.mubr.f32.gmra.mrb[0].mxu0 %v1059
    %v1132 = vpop.f32.mrb[0].mxu0
    %v1133 = vadd.f32 0.0, %v1132
    %v1134 = vpop.f32.mrb[0].mxu0
    %1135 = vdwg.mxu0
    %1137 = vrot.lane.b32.xlu0 %v582, 32
    %v1138 = vpop.permute.xlu0 %1137
    %v1141 = vsel %vm386, %v574, 0
    %v1144 = vsel %vm386, %v579, 0
    %1146 = vmatprep.subr.mxu0 0.0
    %1147 = vmatpush1.msra.mxu0 %v1138
    %1148 = vmatprep.subr.mxu0 0.0
    %1149 = vmatpush1.msra.mxu0 0.0
    %1150 = vmatprep.subr.mxu0 0.0
    %1151 = vmatpush1.msra.mxu0 0.0
    %1152 = vmatprep.subr.mxu0 0.0
    %1153 = vmatpush1.msra.mxu0 0.0
    %1154 = vmatprep.subr.mxu0 0.0
    %1155 = vmatpush1.msra.mxu0 0.0
    %1156 = vmatprep.subr.mxu0 0.0
    %1157 = vmatpush1.msra.mxu0 0.0
    %1158 = vmatprep.subr.mxu0 0.0
    %1159 = vmatpush1.msra.mxu0 0.0
    %1160 = vmatprep.subr.mxu0 0.0
    %1161 = vmatpush1.msra.mxu0 0.0
    %1162 = vmatprep.subr.mxu0 0.0
    %1163 = vmatpush1.msra.mxu0 0.0
    %1164 = vmatprep.subr.mxu0 0.0
    %1165 = vmatpush1.msra.mxu0 0.0
    %1166 = vmatprep.subr.mxu0 0.0
    %1167 = vmatpush1.msra.mxu0 0.0
    %1168 = vmatprep.subr.mxu0 0.0
    %1169 = vmatpush1.msra.mxu0 0.0
    %1170 = vmatprep.subr.mxu0 0.0
    %1171 = vmatpush1.msra.mxu0 0.0
    %1172 = vmatprep.subr.mxu0 0.0
    %1173 = vmatpush1.msra.mxu0 0.0
    %1174 = vmatprep.subr.mxu0 0.0
    %1175 = vmatpush1.msra.mxu0 0.0
    %1176 = vmatprep.subr.mxu0 0.0
    %1177 = vmatpush1.msra.mxu0 0.0
    %1178 = vmatprep.subr.mxu0 0.0
    %1179 = vmatpush1.msra.mxu0 0.0
    %1180 = vmatprep.subr.mxu0 0.0
    %1181 = vmatpush1.msra.mxu0 0.0
    %1182 = vmatprep.subr.mxu0 0.0
    %1183 = vmatpush1.msra.mxu0 0.0
    %1184 = vmatprep.subr.mxu0 0.0
    %1185 = vmatpush1.msra.mxu0 0.0
    %1186 = vmatprep.subr.mxu0 0.0
    %1187 = vmatpush1.msra.mxu0 0.0
    %1188 = vmatprep.subr.mxu0 0.0
    %1189 = vmatpush1.msra.mxu0 0.0
    %1190 = vmatprep.subr.mxu0 0.0
    %1191 = vmatpush1.msra.mxu0 0.0
    %1192 = vmatprep.subr.mxu0 0.0
    %1193 = vmatpush1.msra.mxu0 0.0
    %1194 = vmatprep.subr.mxu0 0.0
    %1195 = vmatpush1.msra.mxu0 0.0
    %1196 = vmatprep.subr.mxu0 0.0
    %1197 = vmatpush1.msra.mxu0 0.0
    %1198 = vmatprep.subr.mxu0 0.0
    %1199 = vmatpush1.msra.mxu0 0.0
    %1200 = vmatprep.subr.mxu0 0.0
    %1201 = vmatpush1.msra.mxu0 0.0
    %1202 = vmatprep.subr.mxu0 0.0
    %1203 = vmatpush1.msra.mxu0 0.0
    %1204 = vmatprep.subr.mxu0 0.0
    %1205 = vmatpush1.msra.mxu0 0.0
    %1206 = vmatprep.subr.mxu0 0.0
    %1207 = vmatpush1.msra.mxu0 0.0
    %1208 = vmatprep.subr.mxu0 0.0
    %1209 = vmatpush1.msra.mxu0 0.0
    %1210 = vmatprep.mubr.f32.mxu0 0.0
    %1211 = vmatmul.mubr.f32.gmra.mrb[0].mxu0 %v1141
    %v1212 = vpop.f32.mrb[0].mxu0
    %v1213 = vadd.f32 %v1128, %v1212
    %v1214 = vpop.f32.mrb[0].mxu0
    %1215 = vmatprep.mubr.f32.mxu0 0.0
    %1216 = vmatmul.mubr.f32.gmra.mrb[0].mxu0 %v1144
    %v1217 = vpop.f32.mrb[0].mxu0
    %v1218 = vadd.f32 %v1133, %v1217
    %v1219 = vpop.f32.mrb[0].mxu0
    %1220 = vdwg.mxu0
    %1221 = vrot.lane.b32.xlu0 %v108, 112
    %v1222 = vpop.permute.xlu0 %1221
    %1223 = vrot.lane.b32.xlu0 %v109, 112
    %v1224 = vpop.permute.xlu0 %1223
    %1225 = vrot.lane.b32.xlu0 %v110, 112
    %v1226 = vpop.permute.xlu0 %1225
    %1227 = vrot.lane.b32.xlu0 %v111, 112
    %v1228 = vpop.permute.xlu0 %1227
    %1233 = vrot.lane.b32.xlu0 %v118, 112
    %v1234 = vpop.permute.xlu0 %1233
    %1236 = vmatprep.subr.mxu0 0.0
    %1237 = vmatpush1.msra.mxu0 %v1222
    %1238 = vmatprep.subr.mxu0 0.0
    %1239 = vmatpush1.msra.mxu0 %v1224
    %1240 = vmatprep.subr.mxu0 0.0
    %1241 = vmatpush1.msra.mxu0 %v1226
    %1242 = vmatprep.subr.mxu0 0.0
    %1243 = vmatpush1.msra.mxu0 %v1228
    %1244 = vmatprep.subr.mxu0 0.0
    %1245 = vmatpush1.msra.mxu0 0.0
    %1246 = vmatprep.subr.mxu0 0.0
    %1247 = vmatpush1.msra.mxu0 0.0
    %1248 = vmatprep.subr.mxu0 0.0
    %1249 = vmatpush1.msra.mxu0 0.0
    %1250 = vmatprep.subr.mxu0 0.0
    %1251 = vmatpush1.msra.mxu0 0.0
    %1252 = vmatprep.subr.mxu0 0.0
    %1253 = vmatpush1.msra.mxu0 0.0
    %1254 = vmatprep.subr.mxu0 0.0
    %1255 = vmatpush1.msra.mxu0 0.0
    %1256 = vmatprep.subr.mxu0 0.0
    %1257 = vmatpush1.msra.mxu0 0.0
    %1258 = vmatprep.subr.mxu0 0.0
    %1259 = vmatpush1.msra.mxu0 0.0
    %1260 = vmatprep.subr.mxu0 0.0
    %1261 = vmatpush1.msra.mxu0 0.0
    %1262 = vmatprep.subr.mxu0 0.0
    %1263 = vmatpush1.msra.mxu0 0.0
    %1264 = vmatprep.subr.mxu0 0.0
    %1265 = vmatpush1.msra.mxu0 0.0
    %1266 = vmatprep.subr.mxu0 0.0
    %1267 = vmatpush1.msra.mxu0 0.0
    %1268 = vmatprep.subr.mxu0 0.0
    %1269 = vmatpush1.msra.mxu0 0.0
    %1270 = vmatprep.subr.mxu0 0.0
    %1271 = vmatpush1.msra.mxu0 0.0
    %1272 = vmatprep.subr.mxu0 0.0
    %1273 = vmatpush1.msra.mxu0 0.0
    %1274 = vmatprep.subr.mxu0 0.0
    %1275 = vmatpush1.msra.mxu0 0.0
    %1276 = vmatprep.subr.mxu0 0.0
    %1277 = vmatpush1.msra.mxu0 0.0
    %1278 = vmatprep.subr.mxu0 0.0
    %1279 = vmatpush1.msra.mxu0 0.0
    %1280 = vmatprep.subr.mxu0 0.0
    %1281 = vmatpush1.msra.mxu0 0.0
    %1282 = vmatprep.subr.mxu0 0.0
    %1283 = vmatpush1.msra.mxu0 0.0
    %1284 = vmatprep.subr.mxu0 0.0
    %1285 = vmatpush1.msra.mxu0 0.0
    %1286 = vmatprep.subr.mxu0 0.0
    %1287 = vmatpush1.msra.mxu0 0.0
    %1288 = vmatprep.subr.mxu0 0.0
    %1289 = vmatpush1.msra.mxu0 0.0
    %1290 = vmatprep.subr.mxu0 0.0
    %1291 = vmatpush1.msra.mxu0 0.0
    %1292 = vmatprep.subr.mxu0 0.0
    %1293 = vmatpush1.msra.mxu0 0.0
    %1294 = vmatprep.subr.mxu0 0.0
    %1295 = vmatpush1.msra.mxu0 0.0
    %1296 = vmatprep.subr.mxu0 0.0
    %1297 = vmatpush1.msra.mxu0 0.0
    %1298 = vmatprep.subr.mxu0 0.0
    %1299 = vmatpush1.msra.mxu0 0.0
    %1300 = vmatprep.mubr.f32.mxu0 0.0
    %1301 = vmatmul.mubr.f32.gmra.mrb[0].mxu0 %v120
    %v1302 = vpop.f32.mrb[0].mxu0
    %v1303 = vadd.f32 %v1234, %v1302
    %v1304 = vpop.f32.mrb[0].mxu0
    %1305 = vmatprep.mubr.f32.mxu0 0.0
    %1306 = vmatmul.mubr.f32.gmra.mrb[0].mxu0 %v123
    %v1307 = vpop.f32.mrb[0].mxu0
    %v1308 = vadd.f32 %v1234, %v1307
    %v1309 = vpop.f32.mrb[0].mxu0
    %1310 = vdwg.mxu0
    %1311 = vrot.lane.b32.xlu0 %v108, 80
    %v1312 = vpop.permute.xlu0 %1311
    %1313 = vrot.lane.b32.xlu0 %v109, 80
    %v1314 = vpop.permute.xlu0 %1313
    %1315 = vrot.lane.b32.xlu0 %v110, 80
    %v1316 = vpop.permute.xlu0 %1315
    %1317 = vrot.lane.b32.xlu0 %v111, 80
    %v1318 = vpop.permute.xlu0 %1317
    %1323 = vrot.lane.b32.xlu0 %v203, 112
    %v1324 = vpop.permute.xlu0 %1323
    %1326 = vmatprep.subr.mxu0 0.0
    %1327 = vmatpush1.msra.mxu0 %v1312
    %1328 = vmatprep.subr.mxu0 0.0
    %1329 = vmatpush1.msra.mxu0 %v1314
    %1330 = vmatprep.subr.mxu0 0.0
    %1331 = vmatpush1.msra.mxu0 %v1316
    %1332 = vmatprep.subr.mxu0 0.0
    %1333 = vmatpush1.msra.mxu0 %v1318
    %1334 = vmatprep.subr.mxu0 0.0
    %1335 = vmatpush1.msra.mxu0 0.0
    %1336 = vmatprep.subr.mxu0 0.0
    %1337 = vmatpush1.msra.mxu0 0.0
    %1338 = vmatprep.subr.mxu0 0.0
    %1339 = vmatpush1.msra.mxu0 0.0
    %1340 = vmatprep.subr.mxu0 0.0
    %1341 = vmatpush1.msra.mxu0 0.0
    %1342 = vmatprep.subr.mxu0 0.0
    %1343 = vmatpush1.msra.mxu0 0.0
    %1344 = vmatprep.subr.mxu0 0.0
    %1345 = vmatpush1.msra.mxu0 0.0
    %1346 = vmatprep.subr.mxu0 0.0
    %1347 = vmatpush1.msra.mxu0 0.0
    %1348 = vmatprep.subr.mxu0 0.0
    %1349 = vmatpush1.msra.mxu0 0.0
    %1350 = vmatprep.subr.mxu0 0.0
    %1351 = vmatpush1.msra.mxu0 0.0
    %1352 = vmatprep.subr.mxu0 0.0
    %1353 = vmatpush1.msra.mxu0 0.0
    %1354 = vmatprep.subr.mxu0 0.0
    %1355 = vmatpush1.msra.mxu0 0.0
    %1356 = vmatprep.subr.mxu0 0.0
    %1357 = vmatpush1.msra.mxu0 0.0
    %1358 = vmatprep.subr.mxu0 0.0
    %1359 = vmatpush1.msra.mxu0 0.0
    %1360 = vmatprep.subr.mxu0 0.0
    %1361 = vmatpush1.msra.mxu0 0.0
    %1362 = vmatprep.subr.mxu0 0.0
    %1363 = vmatpush1.msra.mxu0 0.0
    %1364 = vmatprep.subr.mxu0 0.0
    %1365 = vmatpush1.msra.mxu0 0.0
    %1366 = vmatprep.subr.mxu0 0.0
    %1367 = vmatpush1.msra.mxu0 0.0
    %1368 = vmatprep.subr.mxu0 0.0
    %1369 = vmatpush1.msra.mxu0 0.0
    %1370 = vmatprep.subr.mxu0 0.0
    %1371 = vmatpush1.msra.mxu0 0.0
    %1372 = vmatprep.subr.mxu0 0.0
    %1373 = vmatpush1.msra.mxu0 0.0
    %1374 = vmatprep.subr.mxu0 0.0
    %1375 = vmatpush1.msra.mxu0 0.0
    %1376 = vmatprep.subr.mxu0 0.0
    %1377 = vmatpush1.msra.mxu0 0.0
    %1378 = vmatprep.subr.mxu0 0.0
    %1379 = vmatpush1.msra.mxu0 0.0
    %1380 = vmatprep.subr.mxu0 0.0
    %1381 = vmatpush1.msra.mxu0 0.0
    %1382 = vmatprep.subr.mxu0 0.0
    %1383 = vmatpush1.msra.mxu0 0.0
    %1384 = vmatprep.subr.mxu0 0.0
    %1385 = vmatpush1.msra.mxu0 0.0
    %1386 = vmatprep.subr.mxu0 0.0
    %1387 = vmatpush1.msra.mxu0 0.0
    %1388 = vmatprep.subr.mxu0 0.0
    %1389 = vmatpush1.msra.mxu0 0.0
    %1390 = vmatprep.mubr.f32.mxu0 0.0
    %1391 = vmatmul.mubr.f32.gmra.mrb[0].mxu0 %v120
    %v1392 = vpop.f32.mrb[0].mxu0
    %v1393 = vadd.f32 %v1324, %v1392
    %v1394 = vpop.f32.mrb[0].mxu0
    %1395 = vmatprep.mubr.f32.mxu0 0.0
    %1396 = vmatmul.mubr.f32.gmra.mrb[0].mxu0 %v123
    %v1397 = vpop.f32.mrb[0].mxu0
    %v1398 = vadd.f32 %v1324, %v1397
    %v1399 = vpop.f32.mrb[0].mxu0
    %1400 = vdwg.mxu0
    %1401 = vrot.lane.b32.xlu0 %v108, 48
    %v1402 = vpop.permute.xlu0 %1401
    %1403 = vrot.lane.b32.xlu0 %v109, 48
    %v1404 = vpop.permute.xlu0 %1403
    %1405 = vrot.lane.b32.xlu0 %v110, 48
    %v1406 = vpop.permute.xlu0 %1405
    %1407 = vrot.lane.b32.xlu0 %v111, 48
    %v1408 = vpop.permute.xlu0 %1407
    %1413 = vrot.lane.b32.xlu0 %v298, 112
    %v1414 = vpop.permute.xlu0 %1413
    %1416 = vmatprep.subr.mxu0 0.0
    %1417 = vmatpush1.msra.mxu0 %v1402
    %1418 = vmatprep.subr.mxu0 0.0
    %1419 = vmatpush1.msra.mxu0 %v1404
    %1420 = vmatprep.subr.mxu0 0.0
    %1421 = vmatpush1.msra.mxu0 %v1406
    %1422 = vmatprep.subr.mxu0 0.0
    %1423 = vmatpush1.msra.mxu0 %v1408
    %1424 = vmatprep.subr.mxu0 0.0
    %1425 = vmatpush1.msra.mxu0 0.0
    %1426 = vmatprep.subr.mxu0 0.0
    %1427 = vmatpush1.msra.mxu0 0.0
    %1428 = vmatprep.subr.mxu0 0.0
    %1429 = vmatpush1.msra.mxu0 0.0
    %1430 = vmatprep.subr.mxu0 0.0
    %1431 = vmatpush1.msra.mxu0 0.0
    %1432 = vmatprep.subr.mxu0 0.0
    %1433 = vmatpush1.msra.mxu0 0.0
    %1434 = vmatprep.subr.mxu0 0.0
    %1435 = vmatpush1.msra.mxu0 0.0
    %1436 = vmatprep.subr.mxu0 0.0
    %1437 = vmatpush1.msra.mxu0 0.0
    %1438 = vmatprep.subr.mxu0 0.0
    %1439 = vmatpush1.msra.mxu0 0.0
    %1440 = vmatprep.subr.mxu0 0.0
    %1441 = vmatpush1.msra.mxu0 0.0
    %1442 = vmatprep.subr.mxu0 0.0
    %1443 = vmatpush1.msra.mxu0 0.0
    %1444 = vmatprep.subr.mxu0 0.0
    %1445 = vmatpush1.msra.mxu0 0.0
    %1446 = vmatprep.subr.mxu0 0.0
    %1447 = vmatpush1.msra.mxu0 0.0
    %1448 = vmatprep.subr.mxu0 0.0
    %1449 = vmatpush1.msra.mxu0 0.0
    %1450 = vmatprep.subr.mxu0 0.0
    %1451 = vmatpush1.msra.mxu0 0.0
    %1452 = vmatprep.subr.mxu0 0.0
    %1453 = vmatpush1.msra.mxu0 0.0
    %1454 = vmatprep.subr.mxu0 0.0
    %1455 = vmatpush1.msra.mxu0 0.0
    %1456 = vmatprep.subr.mxu0 0.0
    %1457 = vmatpush1.msra.mxu0 0.0
    %1458 = vmatprep.subr.mxu0 0.0
    %1459 = vmatpush1.msra.mxu0 0.0
    %1460 = vmatprep.subr.mxu0 0.0
    %1461 = vmatpush1.msra.mxu0 0.0
    %1462 = vmatprep.subr.mxu0 0.0
    %1463 = vmatpush1.msra.mxu0 0.0
    %1464 = vmatprep.subr.mxu0 0.0
    %1465 = vmatpush1.msra.mxu0 0.0
    %1466 = vmatprep.subr.mxu0 0.0
    %1467 = vmatpush1.msra.mxu0 0.0
    %1468 = vmatprep.subr.mxu0 0.0
    %1469 = vmatpush1.msra.mxu0 0.0
    %1470 = vmatprep.subr.mxu0 0.0
    %1471 = vmatpush1.msra.mxu0 0.0
    %1472 = vmatprep.subr.mxu0 0.0
    %1473 = vmatpush1.msra.mxu0 0.0
    %1474 = vmatprep.subr.mxu0 0.0
    %1475 = vmatpush1.msra.mxu0 0.0
    %1476 = vmatprep.subr.mxu0 0.0
    %1477 = vmatpush1.msra.mxu0 0.0
    %1478 = vmatprep.subr.mxu0 0.0
    %1479 = vmatpush1.msra.mxu0 0.0
    %1480 = vmatprep.mubr.f32.mxu0 0.0
    %1481 = vmatmul.mubr.f32.gmra.mrb[0].mxu0 %v120
    %v1482 = vpop.f32.mrb[0].mxu0
    %v1483 = vadd.f32 %v1414, %v1482
    %v1484 = vpop.f32.mrb[0].mxu0
    %1485 = vmatprep.mubr.f32.mxu0 0.0
    %1486 = vmatmul.mubr.f32.gmra.mrb[0].mxu0 %v123
    %v1487 = vpop.f32.mrb[0].mxu0
    %v1488 = vadd.f32 %v1414, %v1487
    %v1489 = vpop.f32.mrb[0].mxu0
    %1490 = vdwg.mxu0
    %v1492 = vsel %vm386, %v1303, 0
    %v1495 = vsel %vm386, %v1308, 0
    %v1498 = vsel %vm386, %v1393, 0
    %v1501 = vsel %vm386, %v1398, 0
    %1503 = vmatprep.subr.mxu0 0.0
    %1504 = vmatpush1.xpose.msra.mxu0 %v1498
    %1505 = vmatprep.subr.mxu0 0.0
    %1506 = vmatpush1.xpose.msra.mxu0 %v1501
    %1507 = vmatprep.subr.mxu0 0.0
    %1508 = vmatpush1.xpose.msra.mxu0 0.0
    %1509 = vmatprep.subr.mxu0 0.0
    %1510 = vmatpush1.xpose.msra.mxu0 0.0
    %1511 = vmatprep.subr.mxu0 0.0
    %1512 = vmatpush1.xpose.msra.mxu0 0.0
    %1513 = vmatprep.subr.mxu0 0.0
    %1514 = vmatpush1.xpose.msra.mxu0 0.0
    %1515 = vmatprep.subr.mxu0 0.0
    %1516 = vmatpush1.xpose.msra.mxu0 0.0
    %1517 = vmatprep.subr.mxu0 0.0
    %1518 = vmatpush1.xpose.msra.mxu0 0.0
    %1519 = vmatprep.subr.mxu0 0.0
    %1520 = vmatpush1.xpose.msra.mxu0 0.0
    %1521 = vmatprep.subr.mxu0 0.0
    %1522 = vmatpush1.xpose.msra.mxu0 0.0
    %1523 = vmatprep.subr.mxu0 0.0
    %1524 = vmatpush1.xpose.msra.mxu0 0.0
    %1525 = vmatprep.subr.mxu0 0.0
    %1526 = vmatpush1.xpose.msra.mxu0 0.0
    %1527 = vmatprep.subr.mxu0 0.0
    %1528 = vmatpush1.xpose.msra.mxu0 0.0
    %1529 = vmatprep.subr.mxu0 0.0
    %1530 = vmatpush1.xpose.msra.mxu0 0.0
    %1531 = vmatprep.subr.mxu0 0.0
    %1532 = vmatpush1.xpose.msra.mxu0 0.0
    %1533 = vmatprep.subr.mxu0 0.0
    %1534 = vmatpush1.xpose.msra.mxu0 0.0
    %1535 = vmatprep.subr.mxu0 0.0
    %1536 = vmatpush1.xpose.msra.mxu0 0.0
    %1537 = vmatprep.subr.mxu0 0.0
    %1538 = vmatpush1.xpose.msra.mxu0 0.0
    %1539 = vmatprep.subr.mxu0 0.0
    %1540 = vmatpush1.xpose.msra.mxu0 0.0
    %1541 = vmatprep.subr.mxu0 0.0
    %1542 = vmatpush1.xpose.msra.mxu0 0.0
    %1543 = vmatprep.subr.mxu0 0.0
    %1544 = vmatpush1.xpose.msra.mxu0 0.0
    %1545 = vmatprep.subr.mxu0 0.0
    %1546 = vmatpush1.xpose.msra.mxu0 0.0
    %1547 = vmatprep.subr.mxu0 0.0
    %1548 = vmatpush1.xpose.msra.mxu0 0.0
    %1549 = vmatprep.subr.mxu0 0.0
    %1550 = vmatpush1.xpose.msra.mxu0 0.0
    %1551 = vmatprep.subr.mxu0 0.0
    %1552 = vmatpush1.xpose.msra.mxu0 0.0
    %1553 = vmatprep.subr.mxu0 0.0
    %1554 = vmatpush1.xpose.msra.mxu0 0.0
    %1555 = vmatprep.subr.mxu0 0.0
    %1556 = vmatpush1.xpose.msra.mxu0 0.0
    %1557 = vmatprep.subr.mxu0 0.0
    %1558 = vmatpush1.xpose.msra.mxu0 0.0
    %1559 = vmatprep.subr.mxu0 0.0
    %1560 = vmatpush1.xpose.msra.mxu0 0.0
    %1561 = vmatprep.subr.mxu0 0.0
    %1562 = vmatpush1.xpose.msra.mxu0 0.0
    %1563 = vmatprep.subr.mxu0 0.0
    %1564 = vmatpush1.xpose.msra.mxu0 0.0
    %1565 = vmatprep.subr.mxu0 0.0
    %1566 = vmatpush1.xpose.msra.mxu0 0.0
    %1567 = vmatprep.mubr.f32.mxu0 0.0
    %1568 = vmatmul.mubr.f32.gmra.mrb[0].mxu0 %v1492
    %v1569 = vpop.f32.mrb[0].mxu0
    %v1570 = vadd.f32 0.0, %v1569
    %v1571 = vpop.f32.mrb[0].mxu0
    %1572 = vmatprep.mubr.f32.mxu0 0.0
    %1573 = vmatmul.mubr.f32.gmra.mrb[0].mxu0 %v1495
    %v1574 = vpop.f32.mrb[0].mxu0
    %v1575 = vadd.f32 0.0, %v1574
    %v1576 = vpop.f32.mrb[0].mxu0
    %1577 = vdwg.mxu0
    %v1578 = vmul.f32 %v1570, 0.35355338
    %v1579 = vmul.f32 %v1575, 0.35355338
    %v1580 = vadd.f32 %v1578, %v106
    %v1581 = vadd.f32 %v1579, %v107
    %v1582 = vsel %vm478, %v1580, -inf
    %1583 = vmax.xlane.f32.xlu0 %v1582
    %v1584 = vpop.xlane.xlu0 %1583
    %v1585 = vsel %vm478, %v1581, -inf
    %1586 = vmax.xlane.f32.xlu0 %v1585
    %v1587 = vpop.xlane.xlu0 %1586
    %v1588 = vsub.f32 %v1580, %v1584
    %v1589 = vsub.f32 %v1581, %v1587
    %v1590 = vmul.f32 %v1588, 1.442695
    %v1591 = vpow.pop %v1590
    %v1592 = vmul.f32 %v1589, 1.442695
    %v1593 = vpow.pop %v1592
    %v1594 = vsel %vm478, %v1591, 0.0
    %1595 = vadd.xlane.f32.xlu0 %v1594
    %v1596 = vpop.xlane.xlu0 %1595
    %v1597 = vsel %vm478, %v1593, 0.0
    %1598 = vadd.xlane.f32.xlu0 %v1597
    %v1599 = vpop.xlane.xlu0 %1598
    %v1600 = vrcp.pop %v1596
    %v1601 = vrcp.pop %v1599
    %v1602 = vmul.f32 %v1591, %v1600
    %v1603 = vmul.f32 %v1593, %v1601
    %v1605 = vsel %vm478, %v1602, 0
    %v1608 = vsel %vm478, %v1603, 0
    %1610 = vmatprep.subr.mxu0 0.0
    %1611 = vmatpush1.msra.mxu0 %v1483
    %1612 = vmatprep.subr.mxu0 0.0
    %1613 = vmatpush1.msra.mxu0 %v1488
    %1614 = vmatprep.subr.mxu0 0.0
    %1615 = vmatpush1.msra.mxu0 0.0
    %1616 = vmatprep.subr.mxu0 0.0
    %1617 = vmatpush1.msra.mxu0 0.0
    %1618 = vmatprep.subr.mxu0 0.0
    %1619 = vmatpush1.msra.mxu0 0.0
    %1620 = vmatprep.subr.mxu0 0.0
    %1621 = vmatpush1.msra.mxu0 0.0
    %1622 = vmatprep.subr.mxu0 0.0
    %1623 = vmatpush1.msra.mxu0 0.0
    %1624 = vmatprep.subr.mxu0 0.0
    %1625 = vmatpush1.msra.mxu0 0.0
    %1626 = vmatprep.subr.mxu0 0.0
    %1627 = vmatpush1.msra.mxu0 0.0
    %1628 = vmatprep.subr.mxu0 0.0
    %1629 = vmatpush1.msra.mxu0 0.0
    %1630 = vmatprep.subr.mxu0 0.0
    %1631 = vmatpush1.msra.mxu0 0.0
    %1632 = vmatprep.subr.mxu0 0.0
    %1633 = vmatpush1.msra.mxu0 0.0
    %1634 = vmatprep.subr.mxu0 0.0
    %1635 = vmatpush1.msra.mxu0 0.0
    %1636 = vmatprep.subr.mxu0 0.0
    %1637 = vmatpush1.msra.mxu0 0.0
    %1638 = vmatprep.subr.mxu0 0.0
    %1639 = vmatpush1.msra.mxu0 0.0
    %1640 = vmatprep.subr.mxu0 0.0
    %1641 = vmatpush1.msra.mxu0 0.0
    %1642 = vmatprep.subr.mxu0 0.0
    %1643 = vmatpush1.msra.mxu0 0.0
    %1644 = vmatprep.subr.mxu0 0.0
    %1645 = vmatpush1.msra.mxu0 0.0
    %1646 = vmatprep.subr.mxu0 0.0
    %1647 = vmatpush1.msra.mxu0 0.0
    %1648 = vmatprep.subr.mxu0 0.0
    %1649 = vmatpush1.msra.mxu0 0.0
    %1650 = vmatprep.subr.mxu0 0.0
    %1651 = vmatpush1.msra.mxu0 0.0
    %1652 = vmatprep.subr.mxu0 0.0
    %1653 = vmatpush1.msra.mxu0 0.0
    %1654 = vmatprep.subr.mxu0 0.0
    %1655 = vmatpush1.msra.mxu0 0.0
    %1656 = vmatprep.subr.mxu0 0.0
    %1657 = vmatpush1.msra.mxu0 0.0
    %1658 = vmatprep.subr.mxu0 0.0
    %1659 = vmatpush1.msra.mxu0 0.0
    %1660 = vmatprep.subr.mxu0 0.0
    %1661 = vmatpush1.msra.mxu0 0.0
    %1662 = vmatprep.subr.mxu0 0.0
    %1663 = vmatpush1.msra.mxu0 0.0
    %1664 = vmatprep.subr.mxu0 0.0
    %1665 = vmatpush1.msra.mxu0 0.0
    %1666 = vmatprep.subr.mxu0 0.0
    %1667 = vmatpush1.msra.mxu0 0.0
    %1668 = vmatprep.subr.mxu0 0.0
    %1669 = vmatpush1.msra.mxu0 0.0
    %1670 = vmatprep.subr.mxu0 0.0
    %1671 = vmatpush1.msra.mxu0 0.0
    %1672 = vmatprep.subr.mxu0 0.0
    %1673 = vmatpush1.msra.mxu0 0.0
    %1674 = vmatprep.mubr.f32.mxu0 0.0
    %1675 = vmatmul.mubr.f32.gmra.mrb[0].mxu0 %v1605
    %v1676 = vpop.f32.mrb[0].mxu0
    %v1677 = vadd.f32 0.0, %v1676
    %v1678 = vpop.f32.mrb[0].mxu0
    %1679 = vmatprep.mubr.f32.mxu0 0.0
    %1680 = vmatmul.mubr.f32.gmra.mrb[0].mxu0 %v1608
    %v1681 = vpop.f32.mrb[0].mxu0
    %v1682 = vadd.f32 0.0, %v1681
    %v1683 = vpop.f32.mrb[0].mxu0
    %1684 = vdwg.mxu0
    %v1685 = vld [vmem:[%s2 + $0x30] sm:$0xff]
    %1687 = vrot.lane.b32.xlu0 %v1685, 32
    %v1688 = vpop.permute.xlu0 %1687
    %v1691 = vsel %vm386, %v1677, 0
    %v1694 = vsel %vm386, %v1682, 0
    %1696 = vmatprep.subr.mxu0 0.0
    %1697 = vmatpush1.msra.mxu0 %v1688
    %1698 = vmatprep.subr.mxu0 0.0
    %1699 = vmatpush1.msra.mxu0 0.0
    %1700 = vmatprep.subr.mxu0 0.0
    %1701 = vmatpush1.msra.mxu0 0.0
    %1702 = vmatprep.subr.mxu0 0.0
    %1703 = vmatpush1.msra.mxu0 0.0
    %1704 = vmatprep.subr.mxu0 0.0
    %1705 = vmatpush1.msra.mxu0 0.0
    %1706 = vmatprep.subr.mxu0 0.0
    %1707 = vmatpush1.msra.mxu0 0.0
    %1708 = vmatprep.subr.mxu0 0.0
    %1709 = vmatpush1.msra.mxu0 0.0
    %1710 = vmatprep.subr.mxu0 0.0
    %1711 = vmatpush1.msra.mxu0 0.0
    %1712 = vmatprep.subr.mxu0 0.0
    %1713 = vmatpush1.msra.mxu0 0.0
    %1714 = vmatprep.subr.mxu0 0.0
    %1715 = vmatpush1.msra.mxu0 0.0
    %1716 = vmatprep.subr.mxu0 0.0
    %1717 = vmatpush1.msra.mxu0 0.0
    %1718 = vmatprep.subr.mxu0 0.0
    %1719 = vmatpush1.msra.mxu0 0.0
    %1720 = vmatprep.subr.mxu0 0.0
    %1721 = vmatpush1.msra.mxu0 0.0
    %1722 = vmatprep.subr.mxu0 0.0
    %1723 = vmatpush1.msra.mxu0 0.0
    %1724 = vmatprep.subr.mxu0 0.0
    %1725 = vmatpush1.msra.mxu0 0.0
    %1726 = vmatprep.subr.mxu0 0.0
    %1727 = vmatpush1.msra.mxu0 0.0
    %1728 = vmatprep.subr.mxu0 0.0
    %1729 = vmatpush1.msra.mxu0 0.0
    %1730 = vmatprep.subr.mxu0 0.0
    %1731 = vmatpush1.msra.mxu0 0.0
    %1732 = vmatprep.subr.mxu0 0.0
    %1733 = vmatpush1.msra.mxu0 0.0
    %1734 = vmatprep.subr.mxu0 0.0
    %1735 = vmatpush1.msra.mxu0 0.0
    %1736 = vmatprep.subr.mxu0 0.0
    %1737 = vmatpush1.msra.mxu0 0.0
    %1738 = vmatprep.subr.mxu0 0.0
    %1739 = vmatpush1.msra.mxu0 0.0
    %1740 = vmatprep.subr.mxu0 0.0
    %1741 = vmatpush1.msra.mxu0 0.0
    %1742 = vmatprep.subr.mxu0 0.0
    %1743 = vmatpush1.msra.mxu0 0.0
    %1744 = vmatprep.subr.mxu0 0.0
    %1745 = vmatpush1.msra.mxu0 0.0
    %1746 = vmatprep.subr.mxu0 0.0
    %1747 = vmatpush1.msra.mxu0 0.0
    %1748 = vmatprep.subr.mxu0 0.0
    %1749 = vmatpush1.msra.mxu0 0.0
    %1750 = vmatprep.subr.mxu0 0.0
    %1751 = vmatpush1.msra.mxu0 0.0
    %1752 = vmatprep.subr.mxu0 0.0
    %1753 = vmatpush1.msra.mxu0 0.0
    %1754 = vmatprep.subr.mxu0 0.0
    %1755 = vmatpush1.msra.mxu0 0.0
    %1756 = vmatprep.subr.mxu0 0.0
    %1757 = vmatpush1.msra.mxu0 0.0
    %1758 = vmatprep.subr.mxu0 0.0
    %1759 = vmatpush1.msra.mxu0 0.0
    %1760 = vmatprep.mubr.f32.mxu0 0.0
    %1761 = vmatmul.mubr.f32.gmra.mrb[0].mxu0 %v1691
    %v1762 = vpop.f32.mrb[0].mxu0
    %v1763 = vadd.f32 0.0, %v1762
    %v1764 = vpop.f32.mrb[0].mxu0
    %1765 = vmatprep.mubr.f32.mxu0 0.0
    %1766 = vmatmul.mubr.f32.gmra.mrb[0].mxu0 %v1694
    %v1767 = vpop.f32.mrb[0].mxu0
    %v1768 = vadd.f32 0.0, %v1767
    %v1769 = vpop.f32.mrb[0].mxu0
    %1770 = vdwg.mxu0
    %v1771 = vadd.f32 %v1213, %v1763
    %v1772 = vadd.f32 %v1218, %v1768
    %1773 = vrot.lane.b32.xlu0 %v108, 104
    %v1774 = vpop.permute.xlu0 %1773
    %1775 = vrot.lane.b32.xlu0 %v109, 104
    %v1776 = vpop.permute.xlu0 %1775
    %1777 = vrot.lane.b32.xlu0 %v110, 104
    %v1778 = vpop.permute.xlu0 %1777
    %1779 = vrot.lane.b32.xlu0 %v111, 104
    %v1780 = vpop.permute.xlu0 %1779
    %1785 = vrot.lane.b32.xlu0 %v118, 104
    %v1786 = vpop.permute.xlu0 %1785
    %1788 = vmatprep.subr.mxu0 0.0
    %1789 = vmatpush1.msra.mxu0 %v1774
    %1790 = vmatprep.subr.mxu0 0.0
    %1791 = vmatpush1.msra.mxu0 %v1776
    %1792 = vmatprep.subr.mxu0 0.0
    %1793 = vmatpush1.msra.mxu0 %v1778
    %1794 = vmatprep.subr.mxu0 0.0
    %1795 = vmatpush1.msra.mxu0 %v1780
    %1796 = vmatprep.subr.mxu0 0.0
    %1797 = vmatpush1.msra.mxu0 0.0
    %1798 = vmatprep.subr.mxu0 0.0
    %1799 = vmatpush1.msra.mxu0 0.0
    %1800 = vmatprep.subr.mxu0 0.0
    %1801 = vmatpush1.msra.mxu0 0.0
    %1802 = vmatprep.subr.mxu0 0.0
    %1803 = vmatpush1.msra.mxu0 0.0
    %1804 = vmatprep.subr.mxu0 0.0
    %1805 = vmatpush1.msra.mxu0 0.0
    %1806 = vmatprep.subr.mxu0 0.0
    %1807 = vmatpush1.msra.mxu0 0.0
    %1808 = vmatprep.subr.mxu0 0.0
    %1809 = vmatpush1.msra.mxu0 0.0
    %1810 = vmatprep.subr.mxu0 0.0
    %1811 = vmatpush1.msra.mxu0 0.0
    %1812 = vmatprep.subr.mxu0 0.0
    %1813 = vmatpush1.msra.mxu0 0.0
    %1814 = vmatprep.subr.mxu0 0.0
    %1815 = vmatpush1.msra.mxu0 0.0
    %1816 = vmatprep.subr.mxu0 0.0
    %1817 = vmatpush1.msra.mxu0 0.0
    %1818 = vmatprep.subr.mxu0 0.0
    %1819 = vmatpush1.msra.mxu0 0.0
    %1820 = vmatprep.subr.mxu0 0.0
    %1821 = vmatpush1.msra.mxu0 0.0
    %1822 = vmatprep.subr.mxu0 0.0
    %1823 = vmatpush1.msra.mxu0 0.0
    %1824 = vmatprep.subr.mxu0 0.0
    %1825 = vmatpush1.msra.mxu0 0.0
    %1826 = vmatprep.subr.mxu0 0.0
    %1827 = vmatpush1.msra.mxu0 0.0
    %1828 = vmatprep.subr.mxu0 0.0
    %1829 = vmatpush1.msra.mxu0 0.0
    %1830 = vmatprep.subr.mxu0 0.0
    %1831 = vmatpush1.msra.mxu0 0.0
    %1832 = vmatprep.subr.mxu0 0.0
    %1833 = vmatpush1.msra.mxu0 0.0
    %1834 = vmatprep.subr.mxu0 0.0
    %1835 = vmatpush1.msra.mxu0 0.0
    %1836 = vmatprep.subr.mxu0 0.0
    %1837 = vmatpush1.msra.mxu0 0.0
    %1838 = vmatprep.subr.mxu0 0.0
    %1839 = vmatpush1.msra.mxu0 0.0
    %1840 = vmatprep.subr.mxu0 0.0
    %1841 = vmatpush1.msra.mxu0 0.0
    %1842 = vmatprep.subr.mxu0 0.0
    %1843 = vmatpush1.msra.mxu0 0.0
    %1844 = vmatprep.subr.mxu0 0.0
    %1845 = vmatpush1.msra.mxu0 0.0
    %1846 = vmatprep.subr.mxu0 0.0
    %1847 = vmatpush1.msra.mxu0 0.0
    %1848 = vmatprep.subr.mxu0 0.0
    %1849 = vmatpush1.msra.mxu0 0.0
    %1850 = vmatprep.subr.mxu0 0.0
    %1851 = vmatpush1.msra.mxu0 0.0
    %1852 = vmatprep.mubr.f32.mxu0 0.0
    %1853 = vmatmul.mubr.f32.gmra.mrb[0].mxu0 %v120
    %v1854 = vpop.f32.mrb[0].mxu0
    %v1855 = vadd.f32 %v1786, %v1854
    %v1856 = vpop.f32.mrb[0].mxu0
    %1857 = vmatprep.mubr.f32.mxu0 0.0
    %1858 = vmatmul.mubr.f32.gmra.mrb[0].mxu0 %v123
    %v1859 = vpop.f32.mrb[0].mxu0
    %v1860 = vadd.f32 %v1786, %v1859
    %v1861 = vpop.f32.mrb[0].mxu0
    %1862 = vdwg.mxu0
    %1863 = vrot.lane.b32.xlu0 %v108, 72
    %v1864 = vpop.permute.xlu0 %1863
    %1865 = vrot.lane.b32.xlu0 %v109, 72
    %v1866 = vpop.permute.xlu0 %1865
    %1867 = vrot.lane.b32.xlu0 %v110, 72
    %v1868 = vpop.permute.xlu0 %1867
    %1869 = vrot.lane.b32.xlu0 %v111, 72
    %v1870 = vpop.permute.xlu0 %1869
    %1875 = vrot.lane.b32.xlu0 %v203, 104
    %v1876 = vpop.permute.xlu0 %1875
    %1878 = vmatprep.subr.mxu0 0.0
    %1879 = vmatpush1.msra.mxu0 %v1864
    %1880 = vmatprep.subr.mxu0 0.0
    %1881 = vmatpush1.msra.mxu0 %v1866
    %1882 = vmatprep.subr.mxu0 0.0
    %1883 = vmatpush1.msra.mxu0 %v1868
    %1884 = vmatprep.subr.mxu0 0.0
    %1885 = vmatpush1.msra.mxu0 %v1870
    %1886 = vmatprep.subr.mxu0 0.0
    %1887 = vmatpush1.msra.mxu0 0.0
    %1888 = vmatprep.subr.mxu0 0.0
    %1889 = vmatpush1.msra.mxu0 0.0
    %1890 = vmatprep.subr.mxu0 0.0
    %1891 = vmatpush1.msra.mxu0 0.0
    %1892 = vmatprep.subr.mxu0 0.0
    %1893 = vmatpush1.msra.mxu0 0.0
    %1894 = vmatprep.subr.mxu0 0.0
    %1895 = vmatpush1.msra.mxu0 0.0
    %1896 = vmatprep.subr.mxu0 0.0
    %1897 = vmatpush1.msra.mxu0 0.0
    %1898 = vmatprep.subr.mxu0 0.0
    %1899 = vmatpush1.msra.mxu0 0.0
    %1900 = vmatprep.subr.mxu0 0.0
    %1901 = vmatpush1.msra.mxu0 0.0
    %1902 = vmatprep.subr.mxu0 0.0
    %1903 = vmatpush1.msra.mxu0 0.0
    %1904 = vmatprep.subr.mxu0 0.0
    %1905 = vmatpush1.msra.mxu0 0.0
    %1906 = vmatprep.subr.mxu0 0.0
    %1907 = vmatpush1.msra.mxu0 0.0
    %1908 = vmatprep.subr.mxu0 0.0
    %1909 = vmatpush1.msra.mxu0 0.0
    %1910 = vmatprep.subr.mxu0 0.0
    %1911 = vmatpush1.msra.mxu0 0.0
    %1912 = vmatprep.subr.mxu0 0.0
    %1913 = vmatpush1.msra.mxu0 0.0
    %1914 = vmatprep.subr.mxu0 0.0
    %1915 = vmatpush1.msra.mxu0 0.0
    %1916 = vmatprep.subr.mxu0 0.0
    %1917 = vmatpush1.msra.mxu0 0.0
    %1918 = vmatprep.subr.mxu0 0.0
    %1919 = vmatpush1.msra.mxu0 0.0
    %1920 = vmatprep.subr.mxu0 0.0
    %1921 = vmatpush1.msra.mxu0 0.0
    %1922 = vmatprep.subr.mxu0 0.0
    %1923 = vmatpush1.msra.mxu0 0.0
    %1924 = vmatprep.subr.mxu0 0.0
    %1925 = vmatpush1.msra.mxu0 0.0
    %1926 = vmatprep.subr.mxu0 0.0
    %1927 = vmatpush1.msra.mxu0 0.0
    %1928 = vmatprep.subr.mxu0 0.0
    %1929 = vmatpush1.msra.mxu0 0.0
    %1930 = vmatprep.subr.mxu0 0.0
    %1931 = vmatpush1.msra.mxu0 0.0
    %1932 = vmatprep.subr.mxu0 0.0
    %1933 = vmatpush1.msra.mxu0 0.0
    %1934 = vmatprep.subr.mxu0 0.0
    %1935 = vmatpush1.msra.mxu0 0.0
    %1936 = vmatprep.subr.mxu0 0.0
    %1937 = vmatpush1.msra.mxu0 0.0
    %1938 = vmatprep.subr.mxu0 0.0
    %1939 = vmatpush1.msra.mxu0 0.0
    %1940 = vmatprep.subr.mxu0 0.0
    %1941 = vmatpush1.msra.mxu0 0.0
    %1942 = vmatprep.mubr.f32.mxu0 0.0
    %1943 = vmatmul.mubr.f32.gmra.mrb[0].mxu0 %v120
    %v1944 = vpop.f32.mrb[0].mxu0
    %v1945 = vadd.f32 %v1876, %v1944
    %v1946 = vpop.f32.mrb[0].mxu0
    %1947 = vmatprep.mubr.f32.mxu0 0.0
    %1948 = vmatmul.mubr.f32.gmra.mrb[0].mxu0 %v123
    %v1949 = vpop.f32.mrb[0].mxu0
    %v1950 = vadd.f32 %v1876, %v1949
    %v1951 = vpop.f32.mrb[0].mxu0
    %1952 = vdwg.mxu0
    %1953 = vrot.lane.b32.xlu0 %v108, 40
    %v1954 = vpop.permute.xlu0 %1953
    %1955 = vrot.lane.b32.xlu0 %v109, 40
    %v1956 = vpop.permute.xlu0 %1955
    %1957 = vrot.lane.b32.xlu0 %v110, 40
    %v1958 = vpop.permute.xlu0 %1957
    %1959 = vrot.lane.b32.xlu0 %v111, 40
    %v1960 = vpop.permute.xlu0 %1959
    %1965 = vrot.lane.b32.xlu0 %v298, 104
    %v1966 = vpop.permute.xlu0 %1965
    %1968 = vmatprep.subr.mxu0 0.0
    %1969 = vmatpush1.msra.mxu0 %v1954
    %1970 = vmatprep.subr.mxu0 0.0
    %1971 = vmatpush1.msra.mxu0 %v1956
    %1972 = vmatprep.subr.mxu0 0.0
    %1973 = vmatpush1.msra.mxu0 %v1958
    %1974 = vmatprep.subr.mxu0 0.0
    %1975 = vmatpush1.msra.mxu0 %v1960
    %1976 = vmatprep.subr.mxu0 0.0
    %1977 = vmatpush1.msra.mxu0 0.0
    %1978 = vmatprep.subr.mxu0 0.0
    %1979 = vmatpush1.msra.mxu0 0.0
    %1980 = vmatprep.subr.mxu0 0.0
    %1981 = vmatpush1.msra.mxu0 0.0
    %1982 = vmatprep.subr.mxu0 0.0
    %1983 = vmatpush1.msra.mxu0 0.0
    %1984 = vmatprep.subr.mxu0 0.0
    %1985 = vmatpush1.msra.mxu0 0.0
    %1986 = vmatprep.subr.mxu0 0.0
    %1987 = vmatpush1.msra.mxu0 0.0
    %1988 = vmatprep.subr.mxu0 0.0
    %1989 = vmatpush1.msra.mxu0 0.0
    %1990 = vmatprep.subr.mxu0 0.0
    %1991 = vmatpush1.msra.mxu0 0.0
    %1992 = vmatprep.subr.mxu0 0.0
    %1993 = vmatpush1.msra.mxu0 0.0
    %1994 = vmatprep.subr.mxu0 0.0
    %1995 = vmatpush1.msra.mxu0 0.0
    %1996 = vmatprep.subr.mxu0 0.0
    %1997 = vmatpush1.msra.mxu0 0.0
    %1998 = vmatprep.subr.mxu0 0.0
    %1999 = vmatpush1.msra.mxu0 0.0
    %2000 = vmatprep.subr.mxu0 0.0
    %2001 = vmatpush1.msra.mxu0 0.0
    %2002 = vmatprep.subr.mxu0 0.0
    %2003 = vmatpush1.msra.mxu0 0.0
    %2004 = vmatprep.subr.mxu0 0.0
    %2005 = vmatpush1.msra.mxu0 0.0
    %2006 = vmatprep.subr.mxu0 0.0
    %2007 = vmatpush1.msra.mxu0 0.0
    %2008 = vmatprep.subr.mxu0 0.0
    %2009 = vmatpush1.msra.mxu0 0.0
    %2010 = vmatprep.subr.mxu0 0.0
    %2011 = vmatpush1.msra.mxu0 0.0
    %2012 = vmatprep.subr.mxu0 0.0
    %2013 = vmatpush1.msra.mxu0 0.0
    %2014 = vmatprep.subr.mxu0 0.0
    %2015 = vmatpush1.msra.mxu0 0.0
    %2016 = vmatprep.subr.mxu0 0.0
    %2017 = vmatpush1.msra.mxu0 0.0
    %2018 = vmatprep.subr.mxu0 0.0
    %2019 = vmatpush1.msra.mxu0 0.0
    %2020 = vmatprep.subr.mxu0 0.0
    %2021 = vmatpush1.msra.mxu0 0.0
    %2022 = vmatprep.subr.mxu0 0.0
    %2023 = vmatpush1.msra.mxu0 0.0
    %2024 = vmatprep.subr.mxu0 0.0
    %2025 = vmatpush1.msra.mxu0 0.0
    %2026 = vmatprep.subr.mxu0 0.0
    %2027 = vmatpush1.msra.mxu0 0.0
    %2028 = vmatprep.subr.mxu0 0.0
    %2029 = vmatpush1.msra.mxu0 0.0
    %2030 = vmatprep.subr.mxu0 0.0
    %2031 = vmatpush1.msra.mxu0 0.0
    %2032 = vmatprep.mubr.f32.mxu0 0.0
    %2033 = vmatmul.mubr.f32.gmra.mrb[0].mxu0 %v120
    %v2034 = vpop.f32.mrb[0].mxu0
    %v2035 = vadd.f32 %v1966, %v2034
    %v2036 = vpop.f32.mrb[0].mxu0
    %2037 = vmatprep.mubr.f32.mxu0 0.0
    %2038 = vmatmul.mubr.f32.gmra.mrb[0].mxu0 %v123
    %v2039 = vpop.f32.mrb[0].mxu0
    %v2040 = vadd.f32 %v1966, %v2039
    %v2041 = vpop.f32.mrb[0].mxu0
    %2042 = vdwg.mxu0
    %v2044 = vsel %vm386, %v1855, 0
    %v2047 = vsel %vm386, %v1860, 0
    %v2050 = vsel %vm386, %v1945, 0
    %v2053 = vsel %vm386, %v1950, 0
    %2055 = vmatprep.subr.mxu0 0.0
    %2056 = vmatpush1.xpose.msra.mxu0 %v2050
    %2057 = vmatprep.subr.mxu0 0.0
    %2058 = vmatpush1.xpose.msra.mxu0 %v2053
    %2059 = vmatprep.subr.mxu0 0.0
    %2060 = vmatpush1.xpose.msra.mxu0 0.0
    %2061 = vmatprep.subr.mxu0 0.0
    %2062 = vmatpush1.xpose.msra.mxu0 0.0
    %2063 = vmatprep.subr.mxu0 0.0
    %2064 = vmatpush1.xpose.msra.mxu0 0.0
    %2065 = vmatprep.subr.mxu0 0.0
    %2066 = vmatpush1.xpose.msra.mxu0 0.0
    %2067 = vmatprep.subr.mxu0 0.0
    %2068 = vmatpush1.xpose.msra.mxu0 0.0
    %2069 = vmatprep.subr.mxu0 0.0
    %2070 = vmatpush1.xpose.msra.mxu0 0.0
    %2071 = vmatprep.subr.mxu0 0.0
    %2072 = vmatpush1.xpose.msra.mxu0 0.0
    %2073 = vmatprep.subr.mxu0 0.0
    %2074 = vmatpush1.xpose.msra.mxu0 0.0
    %2075 = vmatprep.subr.mxu0 0.0
    %2076 = vmatpush1.xpose.msra.mxu0 0.0
    %2077 = vmatprep.subr.mxu0 0.0
    %2078 = vmatpush1.xpose.msra.mxu0 0.0
    %2079 = vmatprep.subr.mxu0 0.0
    %2080 = vmatpush1.xpose.msra.mxu0 0.0
    %2081 = vmatprep.subr.mxu0 0.0
    %2082 = vmatpush1.xpose.msra.mxu0 0.0
    %2083 = vmatprep.subr.mxu0 0.0
    %2084 = vmatpush1.xpose.msra.mxu0 0.0
    %2085 = vmatprep.subr.mxu0 0.0
    %2086 = vmatpush1.xpose.msra.mxu0 0.0
    %2087 = vmatprep.subr.mxu0 0.0
    %2088 = vmatpush1.xpose.msra.mxu0 0.0
    %2089 = vmatprep.subr.mxu0 0.0
    %2090 = vmatpush1.xpose.msra.mxu0 0.0
    %2091 = vmatprep.subr.mxu0 0.0
    %2092 = vmatpush1.xpose.msra.mxu0 0.0
    %2093 = vmatprep.subr.mxu0 0.0
    %2094 = vmatpush1.xpose.msra.mxu0 0.0
    %2095 = vmatprep.subr.mxu0 0.0
    %2096 = vmatpush1.xpose.msra.mxu0 0.0
    %2097 = vmatprep.subr.mxu0 0.0
    %2098 = vmatpush1.xpose.msra.mxu0 0.0
    %2099 = vmatprep.subr.mxu0 0.0
    %2100 = vmatpush1.xpose.msra.mxu0 0.0
    %2101 = vmatprep.subr.mxu0 0.0
    %2102 = vmatpush1.xpose.msra.mxu0 0.0
    %2103 = vmatprep.subr.mxu0 0.0
    %2104 = vmatpush1.xpose.msra.mxu0 0.0
    %2105 = vmatprep.subr.mxu0 0.0
    %2106 = vmatpush1.xpose.msra.mxu0 0.0
    %2107 = vmatprep.subr.mxu0 0.0
    %2108 = vmatpush1.xpose.msra.mxu0 0.0
    %2109 = vmatprep.subr.mxu0 0.0
    %2110 = vmatpush1.xpose.msra.mxu0 0.0
    %2111 = vmatprep.subr.mxu0 0.0
    %2112 = vmatpush1.xpose.msra.mxu0 0.0
    %2113 = vmatprep.subr.mxu0 0.0
    %2114 = vmatpush1.xpose.msra.mxu0 0.0
    %2115 = vmatprep.subr.mxu0 0.0
    %2116 = vmatpush1.xpose.msra.mxu0 0.0
    %2117 = vmatprep.subr.mxu0 0.0
    %2118 = vmatpush1.xpose.msra.mxu0 0.0
    %2119 = vmatprep.mubr.f32.mxu0 0.0
    %2120 = vmatmul.mubr.f32.gmra.mrb[0].mxu0 %v2044
    %v2121 = vpop.f32.mrb[0].mxu0
    %v2122 = vadd.f32 0.0, %v2121
    %v2123 = vpop.f32.mrb[0].mxu0
    %2124 = vmatprep.mubr.f32.mxu0 0.0
    %2125 = vmatmul.mubr.f32.gmra.mrb[0].mxu0 %v2047
    %v2126 = vpop.f32.mrb[0].mxu0
    %v2127 = vadd.f32 0.0, %v2126
    %v2128 = vpop.f32.mrb[0].mxu0
    %2129 = vdwg.mxu0
    %v2130 = vmul.f32 %v2122, 0.35355338
    %v2131 = vmul.f32 %v2127, 0.35355338
    %v2132 = vadd.f32 %v2130, %v106
    %v2133 = vadd.f32 %v2131, %v107
    %v2134 = vsel %vm478, %v2132, -inf
    %2135 = vmax.xlane.f32.xlu0 %v2134
    %v2136 = vpop.xlane.xlu0 %2135
    %v2137 = vsel %vm478, %v2133, -inf
    %2138 = vmax.xlane.f32.xlu0 %v2137
    %v2139 = vpop.xlane.xlu0 %2138
    %v2140 = vsub.f32 %v2132, %v2136
    %v2141 = vsub.f32 %v2133, %v2139
    %v2142 = vmul.f32 %v2140, 1.442695
    %v2143 = vpow.pop %v2142
    %v2144 = vmul.f32 %v2141, 1.442695
    %v2145 = vpow.pop %v2144
    %v2146 = vsel %vm478, %v2143, 0.0
    %2147 = vadd.xlane.f32.xlu0 %v2146
    %v2148 = vpop.xlane.xlu0 %2147
    %v2149 = vsel %vm478, %v2145, 0.0
    %2150 = vadd.xlane.f32.xlu0 %v2149
    %v2151 = vpop.xlane.xlu0 %2150
    %v2152 = vrcp.pop %v2148
    %v2153 = vrcp.pop %v2151
    %v2154 = vmul.f32 %v2143, %v2152
    %v2155 = vmul.f32 %v2145, %v2153
    %v2157 = vsel %vm478, %v2154, 0
    %v2160 = vsel %vm478, %v2155, 0
    %2162 = vmatprep.subr.mxu0 0.0
    %2163 = vmatpush1.msra.mxu0 %v2035
    %2164 = vmatprep.subr.mxu0 0.0
    %2165 = vmatpush1.msra.mxu0 %v2040
    %2166 = vmatprep.subr.mxu0 0.0
    %2167 = vmatpush1.msra.mxu0 0.0
    %2168 = vmatprep.subr.mxu0 0.0
    %2169 = vmatpush1.msra.mxu0 0.0
    %2170 = vmatprep.subr.mxu0 0.0
    %2171 = vmatpush1.msra.mxu0 0.0
    %2172 = vmatprep.subr.mxu0 0.0
    %2173 = vmatpush1.msra.mxu0 0.0
    %2174 = vmatprep.subr.mxu0 0.0
    %2175 = vmatpush1.msra.mxu0 0.0
    %2176 = vmatprep.subr.mxu0 0.0
    %2177 = vmatpush1.msra.mxu0 0.0
    %2178 = vmatprep.subr.mxu0 0.0
    %2179 = vmatpush1.msra.mxu0 0.0
    %2180 = vmatprep.subr.mxu0 0.0
    %2181 = vmatpush1.msra.mxu0 0.0
    %2182 = vmatprep.subr.mxu0 0.0
    %2183 = vmatpush1.msra.mxu0 0.0
    %2184 = vmatprep.subr.mxu0 0.0
    %2185 = vmatpush1.msra.mxu0 0.0
    %2186 = vmatprep.subr.mxu0 0.0
    %2187 = vmatpush1.msra.mxu0 0.0
    %2188 = vmatprep.subr.mxu0 0.0
    %2189 = vmatpush1.msra.mxu0 0.0
    %2190 = vmatprep.subr.mxu0 0.0
    %2191 = vmatpush1.msra.mxu0 0.0
    %2192 = vmatprep.subr.mxu0 0.0
    %2193 = vmatpush1.msra.mxu0 0.0
    %2194 = vmatprep.subr.mxu0 0.0
    %2195 = vmatpush1.msra.mxu0 0.0
    %2196 = vmatprep.subr.mxu0 0.0
    %2197 = vmatpush1.msra.mxu0 0.0
    %2198 = vmatprep.subr.mxu0 0.0
    %2199 = vmatpush1.msra.mxu0 0.0
    %2200 = vmatprep.subr.mxu0 0.0
    %2201 = vmatpush1.msra.mxu0 0.0
    %2202 = vmatprep.subr.mxu0 0.0
    %2203 = vmatpush1.msra.mxu0 0.0
    %2204 = vmatprep.subr.mxu0 0.0
    %2205 = vmatpush1.msra.mxu0 0.0
    %2206 = vmatprep.subr.mxu0 0.0
    %2207 = vmatpush1.msra.mxu0 0.0
    %2208 = vmatprep.subr.mxu0 0.0
    %2209 = vmatpush1.msra.mxu0 0.0
    %2210 = vmatprep.subr.mxu0 0.0
    %2211 = vmatpush1.msra.mxu0 0.0
    %2212 = vmatprep.subr.mxu0 0.0
    %2213 = vmatpush1.msra.mxu0 0.0
    %2214 = vmatprep.subr.mxu0 0.0
    %2215 = vmatpush1.msra.mxu0 0.0
    %2216 = vmatprep.subr.mxu0 0.0
    %2217 = vmatpush1.msra.mxu0 0.0
    %2218 = vmatprep.subr.mxu0 0.0
    %2219 = vmatpush1.msra.mxu0 0.0
    %2220 = vmatprep.subr.mxu0 0.0
    %2221 = vmatpush1.msra.mxu0 0.0
    %2222 = vmatprep.subr.mxu0 0.0
    %2223 = vmatpush1.msra.mxu0 0.0
    %2224 = vmatprep.subr.mxu0 0.0
    %2225 = vmatpush1.msra.mxu0 0.0
    %2226 = vmatprep.mubr.f32.mxu0 0.0
    %2227 = vmatmul.mubr.f32.gmra.mrb[0].mxu0 %v2157
    %v2228 = vpop.f32.mrb[0].mxu0
    %v2229 = vadd.f32 0.0, %v2228
    %v2230 = vpop.f32.mrb[0].mxu0
    %2231 = vmatprep.mubr.f32.mxu0 0.0
    %2232 = vmatmul.mubr.f32.gmra.mrb[0].mxu0 %v2160
    %v2233 = vpop.f32.mrb[0].mxu0
    %v2234 = vadd.f32 0.0, %v2233
    %v2235 = vpop.f32.mrb[0].mxu0
    %2236 = vdwg.mxu0
    %2237 = vrot.lane.b32.xlu0 %v111, 32
    %v2238 = vpop.permute.xlu0 %2237
    %v2241 = vsel %vm386, %v2229, 0
    %v2244 = vsel %vm386, %v2234, 0
    %2246 = vmatprep.subr.mxu0 0.0
    %2247 = vmatpush1.msra.mxu0 %v2238
    %2248 = vmatprep.subr.mxu0 0.0
    %2249 = vmatpush1.msra.mxu0 0.0
    %2250 = vmatprep.subr.mxu0 0.0
    %2251 = vmatpush1.msra.mxu0 0.0
    %2252 = vmatprep.subr.mxu0 0.0
    %2253 = vmatpush1.msra.mxu0 0.0
    %2254 = vmatprep.subr.mxu0 0.0
    %2255 = vmatpush1.msra.mxu0 0.0
    %2256 = vmatprep.subr.mxu0 0.0
    %2257 = vmatpush1.msra.mxu0 0.0
    %2258 = vmatprep.subr.mxu0 0.0
    %2259 = vmatpush1.msra.mxu0 0.0
    %2260 = vmatprep.subr.mxu0 0.0
    %2261 = vmatpush1.msra.mxu0 0.0
    %2262 = vmatprep.subr.mxu0 0.0
    %2263 = vmatpush1.msra.mxu0 0.0
    %2264 = vmatprep.subr.mxu0 0.0
    %2265 = vmatpush1.msra.mxu0 0.0
    %2266 = vmatprep.subr.mxu0 0.0
    %2267 = vmatpush1.msra.mxu0 0.0
    %2268 = vmatprep.subr.mxu0 0.0
    %2269 = vmatpush1.msra.mxu0 0.0
    %2270 = vmatprep.subr.mxu0 0.0
    %2271 = vmatpush1.msra.mxu0 0.0
    %2272 = vmatprep.subr.mxu0 0.0
    %2273 = vmatpush1.msra.mxu0 0.0
    %2274 = vmatprep.subr.mxu0 0.0
    %2275 = vmatpush1.msra.mxu0 0.0
    %2276 = vmatprep.subr.mxu0 0.0
    %2277 = vmatpush1.msra.mxu0 0.0
    %2278 = vmatprep.subr.mxu0 0.0
    %2279 = vmatpush1.msra.mxu0 0.0
    %2280 = vmatprep.subr.mxu0 0.0
    %2281 = vmatpush1.msra.mxu0 0.0
    %2282 = vmatprep.subr.mxu0 0.0
    %2283 = vmatpush1.msra.mxu0 0.0
    %2284 = vmatprep.subr.mxu0 0.0
    %2285 = vmatpush1.msra.mxu0 0.0
    %2286 = vmatprep.subr.mxu0 0.0
    %2287 = vmatpush1.msra.mxu0 0.0
    %2288 = vmatprep.subr.mxu0 0.0
    %2289 = vmatpush1.msra.mxu0 0.0
    %2290 = vmatprep.subr.mxu0 0.0
    %2291 = vmatpush1.msra.mxu0 0.0
    %2292 = vmatprep.subr.mxu0 0.0
    %2293 = vmatpush1.msra.mxu0 0.0
    %2294 = vmatprep.subr.mxu0 0.0
    %2295 = vmatpush1.msra.mxu0 0.0
    %2296 = vmatprep.subr.mxu0 0.0
    %2297 = vmatpush1.msra.mxu0 0.0
    %2298 = vmatprep.subr.mxu0 0.0
    %2299 = vmatpush1.msra.mxu0 0.0
    %2300 = vmatprep.subr.mxu0 0.0
    %2301 = vmatpush1.msra.mxu0 0.0
    %2302 = vmatprep.subr.mxu0 0.0
    %2303 = vmatpush1.msra.mxu0 0.0
    %2304 = vmatprep.subr.mxu0 0.0
    %2305 = vmatpush1.msra.mxu0 0.0
    %2306 = vmatprep.subr.mxu0 0.0
    %2307 = vmatpush1.msra.mxu0 0.0
    %2308 = vmatprep.subr.mxu0 0.0
    %2309 = vmatpush1.msra.mxu0 0.0
    %2310 = vmatprep.mubr.f32.mxu0 0.0
    %2311 = vmatmul.mubr.f32.gmra.mrb[0].mxu0 %v2241
    %v2312 = vpop.f32.mrb[0].mxu0
    %v2313 = vadd.f32 0.0, %v2312
    %v2314 = vpop.f32.mrb[0].mxu0
    %2315 = vmatprep.mubr.f32.mxu0 0.0
    %2316 = vmatmul.mubr.f32.gmra.mrb[0].mxu0 %v2244
    %v2317 = vpop.f32.mrb[0].mxu0
    %v2318 = vadd.f32 0.0, %v2317
    %v2319 = vpop.f32.mrb[0].mxu0
    %2320 = vdwg.mxu0
    %v2321 = vadd.f32 %v1771, %v2313
    %v2322 = vadd.f32 %v1772, %v2318
    %v2323 = vld [vmem:[#allocation7 + $0x5] sm:$0x1]
    %v2324 = vlaneseq
    %v2325 = vshrl.u32 %v2324, 7
    %v2326 = vsub.s32 0, %v2325
    %v2327 = vrot.slane %v2323, %v2326
    %v2328 = vadd.f32 %v2321, %v2327
    %v2329 = vadd.f32 %v2322, %v2327
    %v2330 = vadd.f32 %v104, %v2328
    %v2331 = vadd.f32 %v105, %v2329
    %v2332 = vld [vmem:[#allocation7 + $0x6] sm:$0x1]
    %v2333 = vld [vmem:[#allocation7 + $0x7] sm:$0x1]
    %v2334 = vsel %vm66, %v2330, 0.0
    %2335 = vadd.xlane.f32.xlu0 %v2334
    %v2336 = vpop.xlane.xlu0 %2335
    %v2337 = vsel %vm66, %v2331, 0.0
    %2338 = vadd.xlane.f32.xlu0 %v2337
    %v2339 = vpop.xlane.xlu0 %2338
    %v2340 = vmul.f32 %v2336, %v73
    %v2341 = vmul.f32 %v2339, %v73
    %v2342 = vsub.f32 %v2330, %v2340
    %v2343 = vsub.f32 %v2331, %v2341
    %v2344 = vmul.f32 %v2342, %v2342
    %v2345 = vmul.f32 %v2343, %v2343
    %v2346 = vsel %vm66, %v2344, 0.0
    %2347 = vadd.xlane.f32.xlu0 %v2346
    %v2348 = vpop.xlane.xlu0 %2347
    %v2349 = vsel %vm66, %v2345, 0.0
    %2350 = vadd.xlane.f32.xlu0 %v2349
    %v2351 = vpop.xlane.xlu0 %2350
    %v2352 = vmul.f32 %v2348, %v73
    %v2353 = vmul.f32 %v2351, %v73
    %v2354 = vadd.f32 %v2352, 1e-12
    %v2355 = vadd.f32 %v2353, 1e-12
    %v2356 = vrsqrt.pop %v2354
    %v2357 = vrsqrt.pop %v2355
    %v2358 = vmul.f32 %v2342, %v2356
    %v2359 = vmul.f32 %v2343, %v2357
    %v2360 = vlaneseq
    %v2361 = vshrl.u32 %v2360, 7
    %v2362 = vsub.s32 0, %v2361
    %v2363 = vrot.slane %v2332, %v2362
    %v2364 = vmul.f32 %v2358, %v2363
    %v2365 = vmul.f32 %v2359, %v2363
    %v2366 = vlaneseq
    %v2367 = vshrl.u32 %v2366, 7
    %v2368 = vsub.s32 0, %v2367
    %v2369 = vrot.slane %v2333, %v2368
    %v2370 = vadd.f32 %v2364, %v2369
    %v2371 = vadd.f32 %v2365, %v2369
    %v2372 = vld [vmem:[%s2 + $0x8] sm:$0xff]
    %v2373 = vld [vmem:[%s2 + $0x20] sm:$0xff]
    %v2374 = vld [vmem:[%s2 + $0x38] sm:$0xff]
    %v2375 = vld [vmem:[%s2 + $0x50] sm:$0xff]
    %v2376 = vld [vmem:[#allocation7 + $0x8] sm:$0x1]
    %v2377 = vlaneseq
    %v2378 = vshrl.u32 %v2377, 7
    %v2379 = vsub.s32 0, %v2378
    %v2380 = vrot.slane %v2376, %v2379
    %v2382 = vsel %vm66, %v2370, 0
    %v2385 = vsel %vm66, %v2371, 0
    %2387 = vmatprep.subr.mxu0 0.0
    %2388 = vmatpush1.msra.mxu0 %v2372
    %2389 = vmatprep.subr.mxu0 0.0
    %2390 = vmatpush1.msra.mxu0 %v2373
    %2391 = vmatprep.subr.mxu0 0.0
    %2392 = vmatpush1.msra.mxu0 %v2374
    %2393 = vmatprep.subr.mxu0 0.0
    %2394 = vmatpush1.msra.mxu0 %v2375
    %2395 = vmatprep.subr.mxu0 0.0
    %2396 = vmatpush1.msra.mxu0 0.0
    %2397 = vmatprep.subr.mxu0 0.0
    %2398 = vmatpush1.msra.mxu0 0.0
    %2399 = vmatprep.subr.mxu0 0.0
    %2400 = vmatpush1.msra.mxu0 0.0
    %2401 = vmatprep.subr.mxu0 0.0
    %2402 = vmatpush1.msra.mxu0 0.0
    %2403 = vmatprep.subr.mxu0 0.0
    %2404 = vmatpush1.msra.mxu0 0.0
    %2405 = vmatprep.subr.mxu0 0.0
    %2406 = vmatpush1.msra.mxu0 0.0
    %2407 = vmatprep.subr.mxu0 0.0
    %2408 = vmatpush1.msra.mxu0 0.0
    %2409 = vmatprep.subr.mxu0 0.0
    %2410 = vmatpush1.msra.mxu0 0.0
    %2411 = vmatprep.subr.mxu0 0.0
    %2412 = vmatpush1.msra.mxu0 0.0
    %2413 = vmatprep.subr.mxu0 0.0
    %2414 = vmatpush1.msra.mxu0 0.0
    %2415 = vmatprep.subr.mxu0 0.0
    %2416 = vmatpush1.msra.mxu0 0.0
    %2417 = vmatprep.subr.mxu0 0.0
    %2418 = vmatpush1.msra.mxu0 0.0
    %2419 = vmatprep.subr.mxu0 0.0
    %2420 = vmatpush1.msra.mxu0 0.0
    %2421 = vmatprep.subr.mxu0 0.0
    %2422 = vmatpush1.msra.mxu0 0.0
    %2423 = vmatprep.subr.mxu0 0.0
    %2424 = vmatpush1.msra.mxu0 0.0
    %2425 = vmatprep.subr.mxu0 0.0
    %2426 = vmatpush1.msra.mxu0 0.0
    %2427 = vmatprep.subr.mxu0 0.0
    %2428 = vmatpush1.msra.mxu0 0.0
    %2429 = vmatprep.subr.mxu0 0.0
    %2430 = vmatpush1.msra.mxu0 0.0
    %2431 = vmatprep.subr.mxu0 0.0
    %2432 = vmatpush1.msra.mxu0 0.0
    %2433 = vmatprep.subr.mxu0 0.0
    %2434 = vmatpush1.msra.mxu0 0.0
    %2435 = vmatprep.subr.mxu0 0.0
    %2436 = vmatpush1.msra.mxu0 0.0
    %2437 = vmatprep.subr.mxu0 0.0
    %2438 = vmatpush1.msra.mxu0 0.0
    %2439 = vmatprep.subr.mxu0 0.0
    %2440 = vmatpush1.msra.mxu0 0.0
    %2441 = vmatprep.subr.mxu0 0.0
    %2442 = vmatpush1.msra.mxu0 0.0
    %2443 = vmatprep.subr.mxu0 0.0
    %2444 = vmatpush1.msra.mxu0 0.0
    %2445 = vmatprep.subr.mxu0 0.0
    %2446 = vmatpush1.msra.mxu0 0.0
    %2447 = vmatprep.subr.mxu0 0.0
    %2448 = vmatpush1.msra.mxu0 0.0
    %2449 = vmatprep.subr.mxu0 0.0
    %2450 = vmatpush1.msra.mxu0 0.0
    %2451 = vmatprep.mubr.f32.mxu0 0.0
    %2452 = vmatmul.mubr.f32.gmra.mrb[0].mxu0 %v2382
    %v2453 = vpop.f32.mrb[0].mxu0
    %v2454 = vadd.f32 %v2380, %v2453
    %v2455 = vpop.f32.mrb[0].mxu0
    %2456 = vmatprep.mubr.f32.mxu0 0.0
    %2457 = vmatmul.mubr.f32.gmra.mrb[0].mxu0 %v2385
    %v2458 = vpop.f32.mrb[0].mxu0
    %v2459 = vadd.f32 %v2380, %v2458
    %v2460 = vpop.f32.mrb[0].mxu0
    %2461 = vdwg.mxu0
    %v2462 = vmul.f32 %v2454, 0.5
    %v2463 = vmul.f32 %v2459, 0.5
    %v2464 = vmul.f32 %v2454, 0.044715
    %v2465 = vmul.f32 %v2459, 0.044715
    %v2466 = vmul.f32 %v2464, %v2454
    %v2467 = vmul.f32 %v2465, %v2459
    %v2468 = vmul.f32 %v2466, %v2454
    %v2469 = vmul.f32 %v2467, %v2459
    %v2470 = vadd.f32 %v2454, %v2468
    %v2471 = vadd.f32 %v2459, %v2469
    %v2472 = vmul.f32 %v2470, 0.7978846
    %v2473 = vmul.f32 %v2471, 0.7978846
    %v2474 = vtanh.pop %v2472
    %v2475 = vtanh.pop %v2473
    %v2476 = vadd.f32 %v2474, 1.0
    %v2477 = vadd.f32 %v2475, 1.0
    %v2478 = vmul.f32 %v2462, %v2476
    %v2479 = vmul.f32 %v2463, %v2477
    %v2480 = vld [vmem:[%s3] sm:$0xff]
    %v2481 = vld [vmem:[%s3 + $0x8] sm:$0xff]
    %v2482 = vld [vmem:[%s3 + $0x10] sm:$0xff]
    %v2483 = vld [vmem:[%s3 + $0x18] sm:$0xff]
    %v2484 = vld [vmem:[%s3 + $0x20] sm:$0xff]
    %v2485 = vld [vmem:[%s3 + $0x28] sm:$0xff]
    %v2486 = vld [vmem:[%s3 + $0x30] sm:$0xff]
    %v2487 = vld [vmem:[%s3 + $0x38] sm:$0xff]
    %v2488 = vld [vmem:[#allocation7 + $0x9] sm:$0x1]
    %v2489 = vlaneseq
    %v2490 = vshrl.u32 %v2489, 7
    %v2491 = vsub.s32 0, %v2490
    %v2492 = vrot.slane %v2488, %v2491
    %vm2493 = vcmask 523264
    %v2495 = vsel %vm2493, %v2478, 0
    %v2498 = vsel %vm2493, %v2479, 0
    %2500 = vmatprep.subr.mxu0 0.0
    %2501 = vmatpush1.msra.mxu0 %v2480
    %2502 = vmatprep.subr.mxu0 0.0
    %2503 = vmatpush1.msra.mxu0 %v2481
    %2504 = vmatprep.subr.mxu0 0.0
    %2505 = vmatpush1.msra.mxu0 %v2482
    %2506 = vmatprep.subr.mxu0 0.0
    %2507 = vmatpush1.msra.mxu0 %v2483
    %2508 = vmatprep.subr.mxu0 0.0
    %2509 = vmatpush1.msra.mxu0 %v2484
    %2510 = vmatprep.subr.mxu0 0.0
    %2511 = vmatpush1.msra.mxu0 %v2485
    %2512 = vmatprep.subr.mxu0 0.0
    %2513 = vmatpush1.msra.mxu0 %v2486
    %2514 = vmatprep.subr.mxu0 0.0
    %2515 = vmatpush1.msra.mxu0 %v2487
    %2516 = vmatprep.subr.mxu0 0.0
    %2517 = vmatpush1.msra.mxu0 0.0
    %2518 = vmatprep.subr.mxu0 0.0
    %2519 = vmatpush1.msra.mxu0 0.0
    %2520 = vmatprep.subr.mxu0 0.0
    %2521 = vmatpush1.msra.mxu0 0.0
    %2522 = vmatprep.subr.mxu0 0.0
    %2523 = vmatpush1.msra.mxu0 0.0
    %2524 = vmatprep.subr.mxu0 0.0
    %2525 = vmatpush1.msra.mxu0 0.0
    %2526 = vmatprep.subr.mxu0 0.0
    %2527 = vmatpush1.msra.mxu0 0.0
    %2528 = vmatprep.subr.mxu0 0.0
    %2529 = vmatpush1.msra.mxu0 0.0
    %2530 = vmatprep.subr.mxu0 0.0
    %2531 = vmatpush1.msra.mxu0 0.0
    %2532 = vmatprep.subr.mxu0 0.0
    %2533 = vmatpush1.msra.mxu0 0.0
    %2534 = vmatprep.subr.mxu0 0.0
    %2535 = vmatpush1.msra.mxu0 0.0
    %2536 = vmatprep.subr.mxu0 0.0
    %2537 = vmatpush1.msra.mxu0 0.0
    %2538 = vmatprep.subr.mxu0 0.0
    %2539 = vmatpush1.msra.mxu0 0.0
    %2540 = vmatprep.subr.mxu0 0.0
    %2541 = vmatpush1.msra.mxu0 0.0
    %2542 = vmatprep.subr.mxu0 0.0
    %2543 = vmatpush1.msra.mxu0 0.0
    %2544 = vmatprep.subr.mxu0 0.0
    %2545 = vmatpush1.msra.mxu0 0.0
    %2546 = vmatprep.subr.mxu0 0.0
    %2547 = vmatpush1.msra.mxu0 0.0
    %2548 = vmatprep.subr.mxu0 0.0
    %2549 = vmatpush1.msra.mxu0 0.0
    %2550 = vmatprep.subr.mxu0 0.0
    %2551 = vmatpush1.msra.mxu0 0.0
    %2552 = vmatprep.subr.mxu0 0.0
    %2553 = vmatpush1.msra.mxu0 0.0
    %2554 = vmatprep.subr.mxu0 0.0
    %2555 = vmatpush1.msra.mxu0 0.0
    %2556 = vmatprep.subr.mxu0 0.0
    %2557 = vmatpush1.msra.mxu0 0.0
    %2558 = vmatprep.subr.mxu0 0.0
    %2559 = vmatpush1.msra.mxu0 0.0
    %2560 = vmatprep.subr.mxu0 0.0
    %2561 = vmatpush1.msra.mxu0 0.0
    %2562 = vmatprep.subr.mxu0 0.0
    %2563 = vmatpush1.msra.mxu0 0.0
    %2564 = vmatprep.mubr.f32.mxu0 0.0
    %2565 = vmatmul.mubr.f32.gmra.mrb[0].mxu0 %v2495
    %v2566 = vpop.f32.mrb[0].mxu0
    %v2567 = vadd.f32 %v2492, %v2566
    %v2568 = vpop.f32.mrb[0].mxu0
    %2569 = vmatprep.mubr.f32.mxu0 0.0
    %2570 = vmatmul.mubr.f32.gmra.mrb[0].mxu0 %v2498
    %v2571 = vpop.f32.mrb[0].mxu0
    %v2572 = vadd.f32 %v2492, %v2571
    %v2573 = vpop.f32.mrb[0].mxu0
    %2574 = vdwg.mxu0
    %v2575 = vadd.f32 %v2370, %v2567
    %v2576 = vadd.f32 %v2371, %v2572
    %v2577 = vld [vmem:[#allocation7 + $0xa] sm:$0x1]
    %v2578 = vld [vmem:[#allocation7 + $0xb] sm:$0x1]
    %v2579 = vsel %vm66, %v2575, 0.0
    %2580 = vadd.xlane.f32.xlu0 %v2579
    %v2581 = vpop.xlane.xlu0 %2580
    %v2582 = vsel %vm66, %v2576, 0.0
    %2583 = vadd.xlane.f32.xlu0 %v2582
    %v2584 = vpop.xlane.xlu0 %2583
    %v2585 = vmul.f32 %v2581, %v73
    %v2586 = vmul.f32 %v2584, %v73
    %v2587 = vsub.f32 %v2575, %v2585
    %v2588 = vsub.f32 %v2576, %v2586
    %v2589 = vmul.f32 %v2587, %v2587
    %v2590 = vmul.f32 %v2588, %v2588
    %v2591 = vsel %vm66, %v2589, 0.0
    %2592 = vadd.xlane.f32.xlu0 %v2591
    %v2593 = vpop.xlane.xlu0 %2592
    %v2594 = vsel %vm66, %v2590, 0.0
    %2595 = vadd.xlane.f32.xlu0 %v2594
    %v2596 = vpop.xlane.xlu0 %2595
    %v2597 = vmul.f32 %v2593, %v73
    %v2598 = vmul.f32 %v2596, %v73
    %v2599 = vadd.f32 %v2597, 1e-12
    %v2600 = vadd.f32 %v2598, 1e-12
    %v2601 = vrsqrt.pop %v2599
    %v2602 = vrsqrt.pop %v2600
    %v2603 = vmul.f32 %v2587, %v2601
    %v2604 = vmul.f32 %v2588, %v2602
    %v2605 = vlaneseq
    %v2606 = vshrl.u32 %v2605, 7
    %v2607 = vsub.s32 0, %v2606
    %v2608 = vrot.slane %v2577, %v2607
    %v2609 = vmul.f32 %v2603, %v2608
    %v2610 = vmul.f32 %v2604, %v2608
    %v2611 = vlaneseq
    %v2612 = vshrl.u32 %v2611, 7
    %v2613 = vsub.s32 0, %v2612
    %v2614 = vrot.slane %v2578, %v2613
    %v2615 = vadd.f32 %v2609, %v2614
    %v2616 = vadd.f32 %v2610, %v2614
    %v2617 = vld [vmem:[%s2 + $0x8] sm:$0xff]
    %v2618 = vld [vmem:[%s2 + $0x10] sm:$0xff]
    %v2619 = vld [vmem:[%s2 + $0x20] sm:$0xff]
    %v2620 = vld [vmem:[%s2 + $0x28] sm:$0xff]
    %v2621 = vld [vmem:[%s2 + $0x38] sm:$0xff]
    %v2622 = vld [vmem:[%s2 + $0x40] sm:$0xff]
    %v2623 = vld [vmem:[%s2 + $0x50] sm:$0xff]
    %v2624 = vld [vmem:[%s2 + $0x58] sm:$0xff]
    %v2625 = vld [vmem:[#allocation7 + $0xc] sm:$0x1]
    %v2626 = vlaneseq
    %v2627 = vshrl.u32 %v2626, 7
    %v2628 = vsub.s32 0, %v2627
    %v2629 = vrot.slane %v2625, %v2628
    %2638 = vrot.lane.b32.xlu0 %v2617, 64
    %v2639 = vpop.permute.xlu0 %2638
    %2640 = vrot.lane.b32.xlu0 %v2618, 64
    %v2641 = vpop.permute.xlu0 %2640
    %2642 = vrot.lane.b32.xlu0 %v2619, 64
    %v2643 = vpop.permute.xlu0 %2642
    %2644 = vrot.lane.b32.xlu0 %v2620, 64
    %v2645 = vpop.permute.xlu0 %2644
    %2646 = vrot.lane.b32.xlu0 %v2621, 64
    %v2647 = vpop.permute.xlu0 %2646
    %2648 = vrot.lane.b32.xlu0 %v2622, 64
    %v2649 = vpop.permute.xlu0 %2648
    %2650 = vrot.lane.b32.xlu0 %v2623, 64
    %v2651 = vpop.permute.xlu0 %2650
    %2652 = vrot.lane.b32.xlu0 %v2624, 64
    %v2653 = vpop.permute.xlu0 %2652
    %v2654 = vsel %vm2493, %v2639, %v2641
    %v2655 = vsel %vm2493, %v2643, %v2645
    %v2656 = vsel %vm2493, %v2647, %v2649
    %v2657 = vsel %vm2493, %v2651, %v2653
    %v2663 = vsel %vm66, %v2615, 0
    %v2666 = vsel %vm66, %v2616, 0
    %2668 = vmatprep.subr.mxu0 0.0
    %2669 = vmatpush1.msra.mxu0 %v2654
    %2670 = vmatprep.subr.mxu0 0.0
    %2671 = vmatpush1.msra.mxu0 %v2655
    %2672 = vmatprep.subr.mxu0 0.0
    %2673 = vmatpush1.msra.mxu0 %v2656
    %2674 = vmatprep.subr.mxu0 0.0
    %2675 = vmatpush1.msra.mxu0 %v2657
    %2676 = vmatprep.subr.mxu0 0.0
    %2677 = vmatpush1.msra.mxu0 0.0
    %2678 = vmatprep.subr.mxu0 0.0
    %2679 = vmatpush1.msra.mxu0 0.0
    %2680 = vmatprep.subr.mxu0 0.0
    %2681 = vmatpush1.msra.mxu0 0.0
    %2682 = vmatprep.subr.mxu0 0.0
    %2683 = vmatpush1.msra.mxu0 0.0
    %2684 = vmatprep.subr.mxu0 0.0
    %2685 = vmatpush1.msra.mxu0 0.0
    %2686 = vmatprep.subr.mxu0 0.0
    %2687 = vmatpush1.msra.mxu0 0.0
    %2688 = vmatprep.subr.mxu0 0.0
    %2689 = vmatpush1.msra.mxu0 0.0
    %2690 = vmatprep.subr.mxu0 0.0
    %2691 = vmatpush1.msra.mxu0 0.0
    %2692 = vmatprep.subr.mxu0 0.0
    %2693 = vmatpush1.msra.mxu0 0.0
    %2694 = vmatprep.subr.mxu0 0.0
    %2695 = vmatpush1.msra.mxu0 0.0
    %2696 = vmatprep.subr.mxu0 0.0
    %2697 = vmatpush1.msra.mxu0 0.0
    %2698 = vmatprep.subr.mxu0 0.0
    %2699 = vmatpush1.msra.mxu0 0.0
    %2700 = vmatprep.subr.mxu0 0.0
    %2701 = vmatpush1.msra.mxu0 0.0
    %2702 = vmatprep.subr.mxu0 0.0
    %2703 = vmatpush1.msra.mxu0 0.0
    %2704 = vmatprep.subr.mxu0 0.0
    %2705 = vmatpush1.msra.mxu0 0.0
    %2706 = vmatprep.subr.mxu0 0.0
    %2707 = vmatpush1.msra.mxu0 0.0
    %2708 = vmatprep.subr.mxu0 0.0
    %2709 = vmatpush1.msra.mxu0 0.0
    %2710 = vmatprep.subr.mxu0 0.0
    %2711 = vmatpush1.msra.mxu0 0.0
    %2712 = vmatprep.subr.mxu0 0.0
    %2713 = vmatpush1.msra.mxu0 0.0
    %2714 = vmatprep.subr.mxu0 0.0
    %2715 = vmatpush1.msra.mxu0 0.0
    %2716 = vmatprep.subr.mxu0 0.0
    %2717 = vmatpush1.msra.mxu0 0.0
    %2718 = vmatprep.subr.mxu0 0.0
    %2719 = vmatpush1.msra.mxu0 0.0
    %2720 = vmatprep.subr.mxu0 0.0
    %2721 = vmatpush1.msra.mxu0 0.0
    %2722 = vmatprep.subr.mxu0 0.0
    %2723 = vmatpush1.msra.mxu0 0.0
    %2724 = vmatprep.subr.mxu0 0.0
    %2725 = vmatpush1.msra.mxu0 0.0
    %2726 = vmatprep.subr.mxu0 0.0
    %2727 = vmatpush1.msra.mxu0 0.0
    %2728 = vmatprep.subr.mxu0 0.0
    %2729 = vmatpush1.msra.mxu0 0.0
    %2730 = vmatprep.subr.mxu0 0.0
    %2731 = vmatpush1.msra.mxu0 0.0
    %2732 = vmatprep.mubr.f32.mxu0 0.0
    %2733 = vmatmul.mubr.f32.gmra.mrb[0].mxu0 %v2663
    %v2734 = vpop.f32.mrb[0].mxu0
    %v2735 = vadd.f32 %v2629, %v2734
    %v2736 = vpop.f32.mrb[0].mxu0
    %2737 = vmatprep.mubr.f32.mxu0 0.0
    %2738 = vmatmul.mubr.f32.gmra.mrb[0].mxu0 %v2666
    %v2739 = vpop.f32.mrb[0].mxu0
    %v2740 = vadd.f32 %v2629, %v2739
    %v2741 = vpop.f32.mrb[0].mxu0
    %2742 = vdwg.mxu0
    %2743 = vst [vmem:[#allocation8] sm:$0xff] %v2735
    %2744 = vst [vmem:[#allocation8 + $0x8] sm:$0xff] %v2740
    // Predicated region
    $region34: #{tpu_custom_call.1} parent=1 // pred_check
      _
    $region35: #{tpu_custom_call.1} parent=1 // pred_check_branch
      %2746 = sbr.rel (0) target = $region37
    $region36: #{tpu_custom_call.1} parent=1 // pred_region
      %s2748 = ssub.s32 256, 256
      %2749 = vsyncadd [#allocation4], %s2748
      %s2750 = sshll.u32 [#allocation8], 4
      %s2751 = int_to_ptr.vmem [resolvable:$true] %s2750
      %2756 = dma.vmem_to_hbm [thread:$0]  %s2751, 256, %s5, [#allocation4], 128, 128, 8
    $region37: #{tpu_custom_call.1} parent=1 // pred_fallthru
      _
    // Predicated region
    $region38: #{tpu_custom_call.1} parent=1 // pred_check
      _
    $region39: #{tpu_custom_call.1} parent=1 // pred_check_branch
      %2758 = sbr.rel (0) target = $region41
    $region40: #{tpu_custom_call.1} parent=1 // pred_region
      %2759 = dma.done [#allocation4], 256
    $region41: #{tpu_custom_call.1} parent=1 // pred_fallthru
      _
    %2760 = vsyncpa [#allocation3], 1
    %2761 = vsyncpa [#allocation6], 1
    %2762 = vsyncpa [#allocation4], 1

</llo_original>
